<compile_context>
chip_gen: v5e
topology: v5e:2x2
jax: 0.10.0
libtpu: 0.0.40
codegen_flags: <defaults>
</compile_context>

<pallas_src>
import functools

import numpy as np
import jax
import jax.numpy as jnp
from jax import lax
from jax.experimental import pallas as pl
from jax.experimental.pallas import tpu as pltpu

EPS = 1e-5
LANES = 128


def _round_up(x, m):
    return (x + m - 1) // m * m


def _bn_fold(gamma, beta, mean, var, cpad):
    scale = gamma / jnp.sqrt(var + EPS)
    bias = beta - mean * scale
    scale = jnp.pad(scale, (0, cpad - scale.shape[0])).reshape(1, cpad)
    bias = jnp.pad(bias, (0, cpad - bias.shape[0])).reshape(1, cpad)
    return scale.astype(jnp.float32), bias.astype(jnp.float32)


# ------------------------- fused Pallas kernel -------------------------

def _make_block_kernel(*, stride, H, W, Ho, Wo, Bt, Cp, Cop, equal_inout):
    s = stride
    M = Bt * Ho * Wo

    def kernel(*refs):
        if equal_inout:
            (x_ref, mask_ref, s1_ref, b1_ref, w1_ref,
             s2_ref, b2_ref, w2_ref, o_ref, yp_ref) = refs
            wsc_ref = None
        else:
            (x_ref, mask_ref, s1_ref, b1_ref, w1_ref, wsc_ref,
             s2_ref, b2_ref, w2_ref, o_ref, yp_ref) = refs

        x = x_ref[...]                       # (Bt, s*s, Hph, Wph, Cp) bf16
        # BN1 + ReLU on the input path (f32 math).  The mask zeroes the spatial
        # halo so conv1 sees zero padding *after* the affine+relu.  The bf16
        # cast happens exactly once (hoisted out of the 9-tap loop).
        a = jnp.maximum(x.astype(jnp.float32) * s1_ref[...] + b1_ref[...], 0.0)
        a16 = (a * mask_ref[...]).astype(jnp.bfloat16)

        # conv1 (3x3, stride s): 9 shifted bf16 MXU matmuls, f32 accumulation.
        acc = None
        for kh in range(3):
            for kw in range(3):
                ph = (kh % s) * s + (kw % s)
                r0, c0 = kh // s, kw // s
                win = a16[:, ph, r0:r0 + Ho, c0:c0 + Wo, :]
                t = jnp.dot(win.reshape(M, Cp), w1_ref[kh * 3 + kw],
                            preferred_element_type=jnp.float32)
                acc = t if acc is None else acc + t

        # BN2 + ReLU epilogue (f32), then cast once to bf16 for conv2.
        y16 = jnp.maximum(acc * s2_ref[...] + b2_ref[...], 0.0).astype(jnp.bfloat16)
        # TODO(synk): F.dropout omitted -- eval mode / drop_rate == 0 (asserted
        # in the wrapper).

        # Stage conv2's zero-padded input in VMEM: zero only the 1-wide border
        # strips (cheap, and safe under megacore grid splitting), then do a
        # single interior store.  No HBM traffic for this intermediate.
        zr = jnp.zeros((Bt, 1, Wo + 2, Cop), jnp.bfloat16)
        zc = jnp.zeros((Bt, Ho, 1, Cop), jnp.bfloat16)
        yp_ref[:, 0:1, :, :] = zr
        yp_ref[:, Ho + 1:Ho + 2, :, :] = zr
        yp_ref[:, 1:Ho + 1, 0:1, :] = zc
        yp_ref[:, 1:Ho + 1, Wo + 1:Wo + 2, :] = zc
        yp_ref[:, 1:Ho + 1, 1:Wo + 1, :] = y16.reshape(Bt, Ho, Wo, Cop)

        # Residual branch (kept on-chip; seeds the conv2 accumulator).
        if equal_inout:
            # Identity shortcut = original (pre-BN) x interior; stride is 1.
            # Uses the bf16 copy of x (<=0.4% rounding) to avoid a second,
            # f32-wide HBM read of the input -- covered by the test tolerance.
            r = x[:, 0, 1:H + 1, 1:W + 1, :]
            acc2 = r.reshape(M, Cp).astype(jnp.float32)
        else:
            # 1x1 conv (stride s) shortcut on relu(bn1(x)); the strided
            # interior is a unit-stride window of one phase of a16.
            ph = (1 % s) * s + (1 % s)
            off = 1 // s
            ash = a16[:, ph, off:off + Ho, off:off + Wo, :]
            acc2 = jnp.dot(ash.reshape(M, Cp), wsc_ref[...],
                           preferred_element_type=jnp.float32)

        # conv2 (3x3, stride 1): 9 shifted MXU matmuls added onto the residual.
        for kh in range(3):
            for kw in range(3):
                win = yp_ref[:, kh:kh + Ho, kw:kw + Wo, :]
                acc2 = acc2 + jnp.dot(win.reshape(M, Cop), w2_ref[kh * 3 + kw],
                                      preferred_element_type=jnp.float32)

        o_ref[...] = acc2.reshape(Bt, Ho * Wo, Cop)

    return kernel


# ------------------------- BasicBlock forward -------------------------

def basic_block_forward(x_nchw, params, *, stride, drop_rate, equal_inout,
                        batch_tile=None):
    # TODO(synk): training-mode dropout (drop_rate > 0) not implemented.
    assert drop_rate == 0.0, "only eval-mode / drop_rate == 0 is supported"
    s = int(stride)
    N, Cin, H, W = x_nchw.shape
    Cout = params["w1"].shape[0]
    if equal_inout:
        assert s == 1 and Cin == Cout, "identity shortcut requires stride 1"
    # Phase-split layout needs (H+2), (W+2) divisible by the stride; true for
    # all WideResNet stages (32/16/8 with stride 1 or 2).
    assert (H + 2) % s == 0 and (W + 2) % s == 0, "H+2, W+2 must divide stride"

    Ho = (H - 1) // s + 1
    Wo = (W - 1) // s + 1
    Hph = (H + 2) // s
    Wph = (W + 2) // s
    Cp = _round_up(Cin, LANES)
    Cop = _round_up(Cout, LANES)

    # Batch tile: enough matmul rows (M = Bt*Ho*Wo) to feed the MXU and
    # amortize per-grid-step overhead, while keeping >= 2 grid steps so a v7x
    # megacore can split the "parallel" axis across both TensorCores.
    if batch_tile is None:
        bt = max(1, min(N, 1024 // max(1, Ho * Wo)))
        if N >= 2:
            bt = min(bt, max(1, N // 2))
    else:
        bt = int(batch_tile)
    while N % bt:
        bt -= 1
    NB = N // bt

    # NCHW -> NHWC once at the module boundary (block math stays channels-last).
    x = jnp.transpose(x_nchw, (0, 2, 3, 1)).astype(jnp.bfloat16)
    # Zero-pad: spatial halo (1,1) and channels up to a 128-lane multiple.
    x = jnp.pad(x, ((0, 0), (1, 1), (1, 1), (0, Cp - Cin)))
    # Phase split so every 3x3 tap (even with stride 2) is a unit-stride window.
    x = x.reshape(N, Hph, s, Wph, s, Cp).transpose(0, 2, 4, 1, 3, 5)
    x = x.reshape(N, s * s, Hph, Wph, Cp)

    # Spatial-validity mask in phase space (zeroes the halo after BN1+ReLU).
    mgrid = np.zeros((s * s, Hph, Wph, 1), np.float32)
    for p in range(s * s):
        pi, pj = p // s, p % s
        ih = np.arange(Hph) * s + pi
        jw = np.arange(Wph) * s + pj
        valid = ((ih >= 1) & (ih <= H))[:, None] & ((jw >= 1) & (jw <= W))[None, :]
        mgrid[p, :, :, 0] = valid
    mask = jnp.asarray(mgrid)

    s1, b1 = _bn_fold(params["g1"], params["b1"], params["m1"], params["v1"], Cp)
    s2, b2 = _bn_fold(params["g2"], params["b2"], params["m2"], params["v2"], Cop)

    def conv_w_to_taps(w, cin_p, cout_p):
        co, ci, kh, kw = w.shape
        wt = jnp.transpose(w, (2, 3, 1, 0)).reshape(kh * kw, ci, co)
        wt = jnp.pad(wt, ((0, 0), (0, cin_p - ci), (0, cout_p - co)))
        return wt.astype(jnp.bfloat16)

    w1 = conv_w_to_taps(params["w1"], Cp, Cop)        # (9, Cp, Cop)
    w2 = conv_w_to_taps(params["w2"], Cop, Cop)       # (9, Cop, Cop)

    # Grid-invariant operands: single-buffered (index map never changes).
    def invariant(shape):
        nd = len(shape)
        return pl.BlockSpec(tuple(shape), lambda n, _nd=nd: (0,) * _nd,
                            pipeline_mode=pl.Buffered(1))

    # Batch-tiled operands: default double-buffered pipelining.
    def batched(shape):
        nd = len(shape)
        return pl.BlockSpec((bt,) + tuple(shape),
                            lambda n, _nd=nd: (n,) + (0,) * _nd)

    in_specs = [batched((s * s, Hph, Wph, Cp)),        # phase-split input
                invariant((s * s, Hph, Wph, 1)),       # spatial halo mask
                invariant((1, Cp)), invariant((1, Cp)),   # BN1 scale/bias
                invariant((9, Cp, Cop))]               # conv1 weight taps
    args = [x, mask, s1, b1, w1]
    if not equal_inout:
        wsc = params["wsc"].reshape(Cout, Cin).T
        wsc = jnp.pad(wsc, ((0, Cp - Cin), (0, Cop - Cout))).astype(jnp.bfloat16)
        in_specs.append(invariant((Cp, Cop)))
        args.append(wsc)
    in_specs += [invariant((1, Cop)), invariant((1, Cop)),  # BN2 scale/bias
                 invariant((9, Cop, Cop))]                  # conv2 weight taps
    args += [s2, b2, w2]

    flops = 2 * N * Ho * Wo * (9 * Cp * Cop + 9 * Cop * Cop
                               + (0 if equal_inout else Cp * Cop))
    bytes_accessed = (N * s * s * Hph * Wph * Cp * 2          # x (bf16)
                      + s * s * Hph * Wph * 4                 # mask
                      + 9 * Cp * Cop * 2 + 9 * Cop * Cop * 2  # conv weights
                      + (0 if equal_inout else Cp * Cop * 2)  # shortcut weight
                      + 2 * (Cp + Cop) * 4                    # BN params
                      + N * Ho * Wo * Cop * 4)                # output
    cost = pl.CostEstimate(flops=flops, transcendentals=0,
                           bytes_accessed=bytes_accessed)

    kernel = _make_block_kernel(stride=s, H=H, W=W, Ho=Ho, Wo=Wo, Bt=bt,
                                Cp=Cp, Cop=Cop, equal_inout=equal_inout)

    out = pl.pallas_call(
        kernel,
        grid=(NB,),
        in_specs=in_specs,
        out_specs=batched((Ho * Wo, Cop)),
        out_shape=jax.ShapeDtypeStruct((N, Ho * Wo, Cop), jnp.float32),
        scratch_shapes=[pltpu.VMEM((bt, Ho + 2, Wo + 2, Cop), jnp.bfloat16)],
        compiler_params=pltpu.CompilerParams(
            dimension_semantics=("parallel",),
            # 64 MiB: above the 32 MiB scoped default, <= physical on all of
            # v5e/v6e (128 MiB) and v7x (64 MiB).
            vmem_limit_bytes=64 * 1024 * 1024),
        cost_estimate=cost,
    )(*args)

    out = out.reshape(N, Ho, Wo, Cop)[:, :, :, :Cout]
    return jnp.transpose(out, (0, 3, 1, 2))            # back to NCHW


# ------------------------- pure-JAX reference -------------------------

def ref_forward(x, params, *, stride, drop_rate, equal_inout):
    def bn(z, g, b, m, v):
        g = g[None, :, None, None]; b = b[None, :, None, None]
        m = m[None, :, None, None]; v = v[None, :, None, None]
        return (z - m) / jnp.sqrt(v + EPS) * g + b

    def conv(z, w, s, pad):
        return lax.conv_general_dilated(
            z, w, window_strides=(s, s), padding=[(pad, pad), (pad, pad)],
            dimension_numbers=("NCHW", "OIHW", "NCHW"))

    if not equal_inout:
        x = jax.nn.relu(bn(x, params["g1"], params["b1"], params["m1"], params["v1"]))
        out = x
    else:
        out = jax.nn.relu(bn(x, params["g1"], params["b1"], params["m1"], params["v1"]))
    out = conv(out, params["w1"], stride, 1)
    out = jax.nn.relu(bn(out, params["g2"], params["b2"], params["m2"], params["v2"]))
    out = conv(out, params["w2"], 1, 1)
    sc = x if equal_inout else conv(x, params["wsc"], stride, 0)
    return sc + out


# ------------------------- main -------------------------

def _make_params(key, cin, cout):
    ks = jax.random.split(key, 12)
    return dict(
        g1=1.0 + 0.1 * jax.random.normal(ks[0], (cin,), jnp.float32),
        b1=0.1 * jax.random.normal(ks[1], (cin,), jnp.float32),
        m1=0.1 * jax.random.normal(ks[2], (cin,), jnp.float32),
        v1=jnp.abs(jax.random.normal(ks[3], (cin,), jnp.float32)) + 0.5,
        w1=0.1 * jax.random.normal(ks[4], (cout, cin, 3, 3), jnp.float32),
        g2=1.0 + 0.1 * jax.random.normal(ks[5], (cout,), jnp.float32),
        b2=0.1 * jax.random.normal(ks[6], (cout,), jnp.float32),
        m2=0.1 * jax.random.normal(ks[7], (cout,), jnp.float32),
        v2=jnp.abs(jax.random.normal(ks[8], (cout,), jnp.float32)) + 0.5,
        w2=0.1 * jax.random.normal(ks[9], (cout, cout, 3, 3), jnp.float32),
        wsc=0.1 * jax.random.normal(ks[10], (cout, cin, 1, 1), jnp.float32),
    )


if __name__ == "__main__":
    key = jax.random.PRNGKey(0)

    configs = [
        # downsampling block with 1x1-conv shortcut
        dict(in_planes=4, out_planes=8, stride=2, N=2, H=16, W=16),
        # identity-shortcut block
        dict(in_planes=8, out_planes=8, stride=1, N=2, H=16, W=16),
    ]

    for i, cfg in enumerate(configs):
        kx, kp, key = jax.random.split(key, 3)
        equal_inout = cfg["in_planes"] == cfg["out_planes"]
        x = jax.random.normal(kx, (cfg["N"], cfg["in_planes"], cfg["H"], cfg["W"]),
                              jnp.float32)
        params = _make_params(kp, cfg["in_planes"], cfg["out_planes"])

        fwd = jax.jit(functools.partial(
            basic_block_forward, stride=cfg["stride"], drop_rate=0.0,
            equal_inout=equal_inout))
        out = jax.block_until_ready(fwd(x, params))

        ref = ref_forward(x, params, stride=cfg["stride"], drop_rate=0.0,
                          equal_inout=equal_inout)
        # bf16 activations/weights with f32 accumulation -> loosened tolerance.
        np.testing.assert_allclose(np.asarray(out), np.asarray(ref),
                                   rtol=3e-2, atol=3e-2)

    print("KERNEL_OK")
</pallas_src>

<mosaic_0001>
module attributes {stable_mosaic.version = 11 : i64} {
  func.func @kernel(%arg0: i32, %arg1: memref<1x4x9x9x128xbf16, #tpu.memory_space<vmem>>, %arg2: memref<4x9x9x1xf32, #tpu.memory_space<vmem>>, %arg3: memref<1x128xf32, #tpu.memory_space<vmem>>, %arg4: memref<1x128xf32, #tpu.memory_space<vmem>>, %arg5: memref<9x128x128xbf16, #tpu.memory_space<vmem>>, %arg6: memref<128x128xbf16, #tpu.memory_space<vmem>>, %arg7: memref<1x128xf32, #tpu.memory_space<vmem>>, %arg8: memref<1x128xf32, #tpu.memory_space<vmem>>, %arg9: memref<9x128x128xbf16, #tpu.memory_space<vmem>>, %arg10: memref<1x64x128xf32, #tpu.memory_space<vmem>>, %arg11: memref<1x10x10x128xbf16, #tpu.memory_space<vmem>>) attributes {dimension_semantics = [#tpu.dimension_semantics<parallel>], iteration_bounds = array<i64: 2>, scalar_prefetch = 0 : i64, scratch_operands = 1 : i64, tpu.core_type = #tpu.core_type<tc>, window_params = [{transform_indices = @transform_0, window_bounds = array<i64: 1, 4, 9, 9, 128>}, {pipeline_mode = #tpu.pipeline_mode<synchronous>, transform_indices = @transform_1, window_bounds = array<i64: 4, 9, 9, 1>}, {pipeline_mode = #tpu.pipeline_mode<synchronous>, transform_indices = @transform_2, window_bounds = array<i64: 1, 128>}, {pipeline_mode = #tpu.pipeline_mode<synchronous>, transform_indices = @transform_3, window_bounds = array<i64: 1, 128>}, {pipeline_mode = #tpu.pipeline_mode<synchronous>, transform_indices = @transform_4, window_bounds = array<i64: 9, 128, 128>}, {pipeline_mode = #tpu.pipeline_mode<synchronous>, transform_indices = @transform_5, window_bounds = array<i64: 128, 128>}, {pipeline_mode = #tpu.pipeline_mode<synchronous>, transform_indices = @transform_6, window_bounds = array<i64: 1, 128>}, {pipeline_mode = #tpu.pipeline_mode<synchronous>, transform_indices = @transform_7, window_bounds = array<i64: 1, 128>}, {pipeline_mode = #tpu.pipeline_mode<synchronous>, transform_indices = @transform_8, window_bounds = array<i64: 9, 128, 128>}, {transform_indices = @transform_9, window_bounds = array<i64: 1, 64, 128>}]} {
    %c0 = arith.constant 0 : index
    %c0_0 = arith.constant 0 : index
    %c0_1 = arith.constant 0 : index
    %c0_2 = arith.constant 0 : index
    %c0_3 = arith.constant 0 : index
    %0 = vector.load %arg1[%c0, %c0_0, %c0_1, %c0_2, %c0_3] : memref<1x4x9x9x128xbf16, #tpu.memory_space<vmem>>, vector<1x4x9x9x128xbf16>
    %1 = arith.extf %0 : vector<1x4x9x9x128xbf16> to vector<1x4x9x9x128xf32>
    %c0_4 = arith.constant 0 : index
    %c0_5 = arith.constant 0 : index
    %2 = vector.load %arg3[%c0_4, %c0_5] : memref<1x128xf32, #tpu.memory_space<vmem>>, vector<1x128xf32>
    %3 = vector.shape_cast %2 : vector<1x128xf32> to vector<1x1x1x1x128xf32>
    %4 = vector.broadcast %3 : vector<1x1x1x1x128xf32> to vector<1x4x9x9x128xf32>
    %5 = arith.mulf %1, %4 : vector<1x4x9x9x128xf32>
    %c0_6 = arith.constant 0 : index
    %c0_7 = arith.constant 0 : index
    %6 = vector.load %arg4[%c0_6, %c0_7] : memref<1x128xf32, #tpu.memory_space<vmem>>, vector<1x128xf32>
    %7 = vector.shape_cast %6 : vector<1x128xf32> to vector<1x1x1x1x128xf32>
    %8 = vector.broadcast %7 : vector<1x1x1x1x128xf32> to vector<1x4x9x9x128xf32>
    %9 = arith.addf %5, %8 : vector<1x4x9x9x128xf32>
    %cst = arith.constant 0.000000e+00 : f32
    %10 = vector.broadcast %cst : f32 to vector<1x4x9x9x128xf32>
    %11 = arith.maximumf %9, %10 : vector<1x4x9x9x128xf32>
    %c0_8 = arith.constant 0 : index
    %c0_9 = arith.constant 0 : index
    %c0_10 = arith.constant 0 : index
    %c0_11 = arith.constant 0 : index
    %12 = vector.load %arg2[%c0_8, %c0_9, %c0_10, %c0_11] : memref<4x9x9x1xf32, #tpu.memory_space<vmem>>, vector<4x9x9x1xf32>
    %13 = vector.shape_cast %12 : vector<4x9x9x1xf32> to vector<1x4x9x9x1xf32>
    %14 = vector.broadcast %13 : vector<1x4x9x9x1xf32> to vector<1x4x9x9x128xf32>
    %15 = arith.mulf %11, %14 : vector<1x4x9x9x128xf32>
    %16 = arith.truncf %15 : vector<1x4x9x9x128xf32> to vector<1x4x9x9x128xbf16>
    %17 = vector.extract_strided_slice %16 {offsets = [0, 0, 0, 0, 0], sizes = [1, 1, 8, 8, 128], strides = [1, 1, 1, 1, 1]} : vector<1x4x9x9x128xbf16> to vector<1x1x8x8x128xbf16>
    %18 = vector.shape_cast %17 : vector<1x1x8x8x128xbf16> to vector<1x8x8x128xbf16>
    %19 = vector.shape_cast %18 : vector<1x8x8x128xbf16> to vector<64x128xbf16>
    %c0_12 = arith.constant 0 : index
    %c0_13 = arith.constant 0 : index
    %c0_14 = arith.constant 0 : index
    %20 = vector.load %arg5[%c0_12, %c0_13, %c0_14] : memref<9x128x128xbf16, #tpu.memory_space<vmem>>, vector<1x128x128xbf16>
    %21 = vector.shape_cast %20 : vector<1x128x128xbf16> to vector<128x128xbf16>
    %cst_15 = arith.constant dense<0.000000e+00> : vector<64x128xf32>
    %22 = tpu.matmul %19, %21, %cst_15 {dimension_numbers = #tpu.dot_dimension_numbers<[1], [0], [0], [1], [0, 0, 1, 1], [], []>} : vector<64x128xbf16>, vector<128x128xbf16>, vector<64x128xf32> -> vector<64x128xf32>
    %23 = vector.extract_strided_slice %16 {offsets = [0, 1, 0, 0, 0], sizes = [1, 1, 8, 8, 128], strides = [1, 1, 1, 1, 1]} : vector<1x4x9x9x128xbf16> to vector<1x1x8x8x128xbf16>
    %24 = vector.shape_cast %23 : vector<1x1x8x8x128xbf16> to vector<1x8x8x128xbf16>
    %25 = vector.shape_cast %24 : vector<1x8x8x128xbf16> to vector<64x128xbf16>
    %c1 = arith.constant 1 : index
    %c0_16 = arith.constant 0 : index
    %c0_17 = arith.constant 0 : index
    %26 = vector.load %arg5[%c1, %c0_16, %c0_17] : memref<9x128x128xbf16, #tpu.memory_space<vmem>>, vector<1x128x128xbf16>
    %27 = vector.shape_cast %26 : vector<1x128x128xbf16> to vector<128x128xbf16>
    %cst_18 = arith.constant dense<0.000000e+00> : vector<64x128xf32>
    %28 = tpu.matmul %25, %27, %cst_18 {dimension_numbers = #tpu.dot_dimension_numbers<[1], [0], [0], [1], [0, 0, 1, 1], [], []>} : vector<64x128xbf16>, vector<128x128xbf16>, vector<64x128xf32> -> vector<64x128xf32>
    %29 = arith.addf %22, %28 : vector<64x128xf32>
    %30 = vector.extract_strided_slice %16 {offsets = [0, 0, 0, 1, 0], sizes = [1, 1, 8, 8, 128], strides = [1, 1, 1, 1, 1]} : vector<1x4x9x9x128xbf16> to vector<1x1x8x8x128xbf16>
    %31 = vector.shape_cast %30 : vector<1x1x8x8x128xbf16> to vector<1x8x8x128xbf16>
    %32 = vector.shape_cast %31 : vector<1x8x8x128xbf16> to vector<64x128xbf16>
    %c2 = arith.constant 2 : index
    %c0_19 = arith.constant 0 : index
    %c0_20 = arith.constant 0 : index
    %33 = vector.load %arg5[%c2, %c0_19, %c0_20] : memref<9x128x128xbf16, #tpu.memory_space<vmem>>, vector<1x128x128xbf16>
    %34 = vector.shape_cast %33 : vector<1x128x128xbf16> to vector<128x128xbf16>
    %cst_21 = arith.constant dense<0.000000e+00> : vector<64x128xf32>
    %35 = tpu.matmul %32, %34, %cst_21 {dimension_numbers = #tpu.dot_dimension_numbers<[1], [0], [0], [1], [0, 0, 1, 1], [], []>} : vector<64x128xbf16>, vector<128x128xbf16>, vector<64x128xf32> -> vector<64x128xf32>
    %36 = arith.addf %29, %35 : vector<64x128xf32>
    %37 = vector.extract_strided_slice %16 {offsets = [0, 2, 0, 0, 0], sizes = [1, 1, 8, 8, 128], strides = [1, 1, 1, 1, 1]} : vector<1x4x9x9x128xbf16> to vector<1x1x8x8x128xbf16>
    %38 = vector.shape_cast %37 : vector<1x1x8x8x128xbf16> to vector<1x8x8x128xbf16>
    %39 = vector.shape_cast %38 : vector<1x8x8x128xbf16> to vector<64x128xbf16>
    %c3 = arith.constant 3 : index
    %c0_22 = arith.constant 0 : index
    %c0_23 = arith.constant 0 : index
    %40 = vector.load %arg5[%c3, %c0_22, %c0_23] : memref<9x128x128xbf16, #tpu.memory_space<vmem>>, vector<1x128x128xbf16>
    %41 = vector.shape_cast %40 : vector<1x128x128xbf16> to vector<128x128xbf16>
    %cst_24 = arith.constant dense<0.000000e+00> : vector<64x128xf32>
    %42 = tpu.matmul %39, %41, %cst_24 {dimension_numbers = #tpu.dot_dimension_numbers<[1], [0], [0], [1], [0, 0, 1, 1], [], []>} : vector<64x128xbf16>, vector<128x128xbf16>, vector<64x128xf32> -> vector<64x128xf32>
    %43 = arith.addf %36, %42 : vector<64x128xf32>
    %44 = vector.extract_strided_slice %16 {offsets = [0, 3, 0, 0, 0], sizes = [1, 1, 8, 8, 128], strides = [1, 1, 1, 1, 1]} : vector<1x4x9x9x128xbf16> to vector<1x1x8x8x128xbf16>
    %45 = vector.shape_cast %44 : vector<1x1x8x8x128xbf16> to vector<1x8x8x128xbf16>
    %46 = vector.shape_cast %45 : vector<1x8x8x128xbf16> to vector<64x128xbf16>
    %c4 = arith.constant 4 : index
    %c0_25 = arith.constant 0 : index
    %c0_26 = arith.constant 0 : index
    %47 = vector.load %arg5[%c4, %c0_25, %c0_26] : memref<9x128x128xbf16, #tpu.memory_space<vmem>>, vector<1x128x128xbf16>
    %48 = vector.shape_cast %47 : vector<1x128x128xbf16> to vector<128x128xbf16>
    %cst_27 = arith.constant dense<0.000000e+00> : vector<64x128xf32>
    %49 = tpu.matmul %46, %48, %cst_27 {dimension_numbers = #tpu.dot_dimension_numbers<[1], [0], [0], [1], [0, 0, 1, 1], [], []>} : vector<64x128xbf16>, vector<128x128xbf16>, vector<64x128xf32> -> vector<64x128xf32>
    %50 = arith.addf %43, %49 : vector<64x128xf32>
    %51 = vector.extract_strided_slice %16 {offsets = [0, 2, 0, 1, 0], sizes = [1, 1, 8, 8, 128], strides = [1, 1, 1, 1, 1]} : vector<1x4x9x9x128xbf16> to vector<1x1x8x8x128xbf16>
    %52 = vector.shape_cast %51 : vector<1x1x8x8x128xbf16> to vector<1x8x8x128xbf16>
    %53 = vector.shape_cast %52 : vector<1x8x8x128xbf16> to vector<64x128xbf16>
    %c5 = arith.constant 5 : index
    %c0_28 = arith.constant 0 : index
    %c0_29 = arith.constant 0 : index
    %54 = vector.load %arg5[%c5, %c0_28, %c0_29] : memref<9x128x128xbf16, #tpu.memory_space<vmem>>, vector<1x128x128xbf16>
    %55 = vector.shape_cast %54 : vector<1x128x128xbf16> to vector<128x128xbf16>
    %cst_30 = arith.constant dense<0.000000e+00> : vector<64x128xf32>
    %56 = tpu.matmul %53, %55, %cst_30 {dimension_numbers = #tpu.dot_dimension_numbers<[1], [0], [0], [1], [0, 0, 1, 1], [], []>} : vector<64x128xbf16>, vector<128x128xbf16>, vector<64x128xf32> -> vector<64x128xf32>
    %57 = arith.addf %50, %56 : vector<64x128xf32>
    %58 = vector.extract_strided_slice %16 {offsets = [0, 0, 1, 0, 0], sizes = [1, 1, 8, 8, 128], strides = [1, 1, 1, 1, 1]} : vector<1x4x9x9x128xbf16> to vector<1x1x8x8x128xbf16>
    %59 = vector.shape_cast %58 : vector<1x1x8x8x128xbf16> to vector<1x8x8x128xbf16>
    %60 = vector.shape_cast %59 : vector<1x8x8x128xbf16> to vector<64x128xbf16>
    %c6 = arith.constant 6 : index
    %c0_31 = arith.constant 0 : index
    %c0_32 = arith.constant 0 : index
    %61 = vector.load %arg5[%c6, %c0_31, %c0_32] : memref<9x128x128xbf16, #tpu.memory_space<vmem>>, vector<1x128x128xbf16>
    %62 = vector.shape_cast %61 : vector<1x128x128xbf16> to vector<128x128xbf16>
    %cst_33 = arith.constant dense<0.000000e+00> : vector<64x128xf32>
    %63 = tpu.matmul %60, %62, %cst_33 {dimension_numbers = #tpu.dot_dimension_numbers<[1], [0], [0], [1], [0, 0, 1, 1], [], []>} : vector<64x128xbf16>, vector<128x128xbf16>, vector<64x128xf32> -> vector<64x128xf32>
    %64 = arith.addf %57, %63 : vector<64x128xf32>
    %65 = vector.extract_strided_slice %16 {offsets = [0, 1, 1, 0, 0], sizes = [1, 1, 8, 8, 128], strides = [1, 1, 1, 1, 1]} : vector<1x4x9x9x128xbf16> to vector<1x1x8x8x128xbf16>
    %66 = vector.shape_cast %65 : vector<1x1x8x8x128xbf16> to vector<1x8x8x128xbf16>
    %67 = vector.shape_cast %66 : vector<1x8x8x128xbf16> to vector<64x128xbf16>
    %c7 = arith.constant 7 : index
    %c0_34 = arith.constant 0 : index
    %c0_35 = arith.constant 0 : index
    %68 = vector.load %arg5[%c7, %c0_34, %c0_35] : memref<9x128x128xbf16, #tpu.memory_space<vmem>>, vector<1x128x128xbf16>
    %69 = vector.shape_cast %68 : vector<1x128x128xbf16> to vector<128x128xbf16>
    %cst_36 = arith.constant dense<0.000000e+00> : vector<64x128xf32>
    %70 = tpu.matmul %67, %69, %cst_36 {dimension_numbers = #tpu.dot_dimension_numbers<[1], [0], [0], [1], [0, 0, 1, 1], [], []>} : vector<64x128xbf16>, vector<128x128xbf16>, vector<64x128xf32> -> vector<64x128xf32>
    %71 = arith.addf %64, %70 : vector<64x128xf32>
    %72 = vector.extract_strided_slice %16 {offsets = [0, 0, 1, 1, 0], sizes = [1, 1, 8, 8, 128], strides = [1, 1, 1, 1, 1]} : vector<1x4x9x9x128xbf16> to vector<1x1x8x8x128xbf16>
    %73 = vector.shape_cast %72 : vector<1x1x8x8x128xbf16> to vector<1x8x8x128xbf16>
    %74 = vector.shape_cast %73 : vector<1x8x8x128xbf16> to vector<64x128xbf16>
    %c8 = arith.constant 8 : index
    %c0_37 = arith.constant 0 : index
    %c0_38 = arith.constant 0 : index
    %75 = vector.load %arg5[%c8, %c0_37, %c0_38] : memref<9x128x128xbf16, #tpu.memory_space<vmem>>, vector<1x128x128xbf16>
    %76 = vector.shape_cast %75 : vector<1x128x128xbf16> to vector<128x128xbf16>
    %cst_39 = arith.constant dense<0.000000e+00> : vector<64x128xf32>
    %77 = tpu.matmul %74, %76, %cst_39 {dimension_numbers = #tpu.dot_dimension_numbers<[1], [0], [0], [1], [0, 0, 1, 1], [], []>} : vector<64x128xbf16>, vector<128x128xbf16>, vector<64x128xf32> -> vector<64x128xf32>
    %78 = arith.addf %71, %77 : vector<64x128xf32>
    %c0_40 = arith.constant 0 : index
    %c0_41 = arith.constant 0 : index
    %79 = vector.load %arg7[%c0_40, %c0_41] : memref<1x128xf32, #tpu.memory_space<vmem>>, vector<1x128xf32>
    %80 = vector.broadcast %79 : vector<1x128xf32> to vector<64x128xf32>
    %81 = arith.mulf %78, %80 : vector<64x128xf32>
    %c0_42 = arith.constant 0 : index
    %c0_43 = arith.constant 0 : index
    %82 = vector.load %arg8[%c0_42, %c0_43] : memref<1x128xf32, #tpu.memory_space<vmem>>, vector<1x128xf32>
    %83 = vector.broadcast %82 : vector<1x128xf32> to vector<64x128xf32>
    %84 = arith.addf %81, %83 : vector<64x128xf32>
    %cst_44 = arith.constant 0.000000e+00 : f32
    %85 = vector.broadcast %cst_44 : f32 to vector<64x128xf32>
    %86 = arith.maximumf %84, %85 : vector<64x128xf32>
    %87 = arith.truncf %86 : vector<64x128xf32> to vector<64x128xbf16>
    %cst_45 = arith.constant 0.000000e+00 : bf16
    %88 = vector.broadcast %cst_45 : bf16 to vector<1x1x10x128xbf16>
    %cst_46 = arith.constant 0.000000e+00 : bf16
    %89 = vector.broadcast %cst_46 : bf16 to vector<1x8x1x128xbf16>
    %c0_47 = arith.constant 0 : index
    %c0_48 = arith.constant 0 : index
    %c0_49 = arith.constant 0 : index
    %c0_50 = arith.constant 0 : index
    %90 = vector.load %arg11[%c0_47, %c0_48, %c0_49, %c0_50] : memref<1x10x10x128xbf16, #tpu.memory_space<vmem>>, vector<1x1x10x128xbf16>
    tpu.vector_store %arg11[%c0_47, %c0_48, %c0_49, %c0_50], %88 {strides = array<i32>} : memref<1x10x10x128xbf16, #tpu.memory_space<vmem>>, vector<1x1x10x128xbf16>,
    %c0_51 = arith.constant 0 : index
    %c9 = arith.constant 9 : index
    %c0_52 = arith.constant 0 : index
    %c0_53 = arith.constant 0 : index
    %91 = vector.load %arg11[%c0_51, %c9, %c0_52, %c0_53] : memref<1x10x10x128xbf16, #tpu.memory_space<vmem>>, vector<1x1x10x128xbf16>
    tpu.vector_store %arg11[%c0_51, %c9, %c0_52, %c0_53], %88 {strides = array<i32>} : memref<1x10x10x128xbf16, #tpu.memory_space<vmem>>, vector<1x1x10x128xbf16>,
    %c0_54 = arith.constant 0 : index
    %c1_55 = arith.constant 1 : index
    %c0_56 = arith.constant 0 : index
    %c0_57 = arith.constant 0 : index
    %92 = vector.load %arg11[%c0_54, %c1_55, %c0_56, %c0_57] : memref<1x10x10x128xbf16, #tpu.memory_space<vmem>>, vector<1x8x1x128xbf16>
    tpu.vector_store %arg11[%c0_54, %c1_55, %c0_56, %c0_57], %89 {strides = array<i32>} : memref<1x10x10x128xbf16, #tpu.memory_space<vmem>>, vector<1x8x1x128xbf16>,
    %c0_58 = arith.constant 0 : index
    %c1_59 = arith.constant 1 : index
    %c9_60 = arith.constant 9 : index
    %c0_61 = arith.constant 0 : index
    %93 = vector.load %arg11[%c0_58, %c1_59, %c9_60, %c0_61] : memref<1x10x10x128xbf16, #tpu.memory_space<vmem>>, vector<1x8x1x128xbf16>
    tpu.vector_store %arg11[%c0_58, %c1_59, %c9_60, %c0_61], %89 {strides = array<i32>} : memref<1x10x10x128xbf16, #tpu.memory_space<vmem>>, vector<1x8x1x128xbf16>,
    %94 = vector.shape_cast %87 : vector<64x128xbf16> to vector<1x8x8x128xbf16>
    %c0_62 = arith.constant 0 : index
    %c1_63 = arith.constant 1 : index
    %c1_64 = arith.constant 1 : index
    %c0_65 = arith.constant 0 : index
    %95 = vector.load %arg11[%c0_62, %c1_63, %c1_64, %c0_65] : memref<1x10x10x128xbf16, #tpu.memory_space<vmem>>, vector<1x8x8x128xbf16>
    tpu.vector_store %arg11[%c0_62, %c1_63, %c1_64, %c0_65], %94 {strides = array<i32>} : memref<1x10x10x128xbf16, #tpu.memory_space<vmem>>, vector<1x8x8x128xbf16>,
    %96 = vector.extract_strided_slice %16 {offsets = [0, 3, 0, 0, 0], sizes = [1, 1, 8, 8, 128], strides = [1, 1, 1, 1, 1]} : vector<1x4x9x9x128xbf16> to vector<1x1x8x8x128xbf16>
    %97 = vector.shape_cast %96 : vector<1x1x8x8x128xbf16> to vector<1x8x8x128xbf16>
    %98 = vector.shape_cast %97 : vector<1x8x8x128xbf16> to vector<64x128xbf16>
    %c0_66 = arith.constant 0 : index
    %c0_67 = arith.constant 0 : index
    %99 = vector.load %arg6[%c0_66, %c0_67] : memref<128x128xbf16, #tpu.memory_space<vmem>>, vector<128x128xbf16>
    %cst_68 = arith.constant dense<0.000000e+00> : vector<64x128xf32>
    %100 = tpu.matmul %98, %99, %cst_68 {dimension_numbers = #tpu.dot_dimension_numbers<[1], [0], [0], [1], [0, 0, 1, 1], [], []>} : vector<64x128xbf16>, vector<128x128xbf16>, vector<64x128xf32> -> vector<64x128xf32>
    %c0_69 = arith.constant 0 : index
    %c0_70 = arith.constant 0 : index
    %c0_71 = arith.constant 0 : index
    %c0_72 = arith.constant 0 : index
    %101 = vector.load %arg11[%c0_69, %c0_70, %c0_71, %c0_72] : memref<1x10x10x128xbf16, #tpu.memory_space<vmem>>, vector<1x8x8x128xbf16>
    %102 = vector.shape_cast %101 : vector<1x8x8x128xbf16> to vector<64x128xbf16>
    %c0_73 = arith.constant 0 : index
    %c0_74 = arith.constant 0 : index
    %c0_75 = arith.constant 0 : index
    %103 = vector.load %arg9[%c0_73, %c0_74, %c0_75] : memref<9x128x128xbf16, #tpu.memory_space<vmem>>, vector<1x128x128xbf16>
    %104 = vector.shape_cast %103 : vector<1x128x128xbf16> to vector<128x128xbf16>
    %cst_76 = arith.constant dense<0.000000e+00> : vector<64x128xf32>
    %105 = tpu.matmul %102, %104, %cst_76 {dimension_numbers = #tpu.dot_dimension_numbers<[1], [0], [0], [1], [0, 0, 1, 1], [], []>} : vector<64x128xbf16>, vector<128x128xbf16>, vector<64x128xf32> -> vector<64x128xf32>
    %106 = arith.addf %100, %105 : vector<64x128xf32>
    %c0_77 = arith.constant 0 : index
    %c0_78 = arith.constant 0 : index
    %c1_79 = arith.constant 1 : index
    %c0_80 = arith.constant 0 : index
    %107 = vector.load %arg11[%c0_77, %c0_78, %c1_79, %c0_80] : memref<1x10x10x128xbf16, #tpu.memory_space<vmem>>, vector<1x8x8x128xbf16>
    %108 = vector.shape_cast %107 : vector<1x8x8x128xbf16> to vector<64x128xbf16>
    %c1_81 = arith.constant 1 : index
    %c0_82 = arith.constant 0 : index
    %c0_83 = arith.constant 0 : index
    %109 = vector.load %arg9[%c1_81, %c0_82, %c0_83] : memref<9x128x128xbf16, #tpu.memory_space<vmem>>, vector<1x128x128xbf16>
    %110 = vector.shape_cast %109 : vector<1x128x128xbf16> to vector<128x128xbf16>
    %cst_84 = arith.constant dense<0.000000e+00> : vector<64x128xf32>
    %111 = tpu.matmul %108, %110, %cst_84 {dimension_numbers = #tpu.dot_dimension_numbers<[1], [0], [0], [1], [0, 0, 1, 1], [], []>} : vector<64x128xbf16>, vector<128x128xbf16>, vector<64x128xf32> -> vector<64x128xf32>
    %112 = arith.addf %106, %111 : vector<64x128xf32>
    %c0_85 = arith.constant 0 : index
    %c0_86 = arith.constant 0 : index
    %c2_87 = arith.constant 2 : index
    %c0_88 = arith.constant 0 : index
    %113 = vector.load %arg11[%c0_85, %c0_86, %c2_87, %c0_88] : memref<1x10x10x128xbf16, #tpu.memory_space<vmem>>, vector<1x8x8x128xbf16>
    %114 = vector.shape_cast %113 : vector<1x8x8x128xbf16> to vector<64x128xbf16>
    %c2_89 = arith.constant 2 : index
    %c0_90 = arith.constant 0 : index
    %c0_91 = arith.constant 0 : index
    %115 = vector.load %arg9[%c2_89, %c0_90, %c0_91] : memref<9x128x128xbf16, #tpu.memory_space<vmem>>, vector<1x128x128xbf16>
    %116 = vector.shape_cast %115 : vector<1x128x128xbf16> to vector<128x128xbf16>
    %cst_92 = arith.constant dense<0.000000e+00> : vector<64x128xf32>
    %117 = tpu.matmul %114, %116, %cst_92 {dimension_numbers = #tpu.dot_dimension_numbers<[1], [0], [0], [1], [0, 0, 1, 1], [], []>} : vector<64x128xbf16>, vector<128x128xbf16>, vector<64x128xf32> -> vector<64x128xf32>
    %118 = arith.addf %112, %117 : vector<64x128xf32>
    %c0_93 = arith.constant 0 : index
    %c1_94 = arith.constant 1 : index
    %c0_95 = arith.constant 0 : index
    %c0_96 = arith.constant 0 : index
    %119 = vector.load %arg11[%c0_93, %c1_94, %c0_95, %c0_96] : memref<1x10x10x128xbf16, #tpu.memory_space<vmem>>, vector<1x8x8x128xbf16>
    %120 = vector.shape_cast %119 : vector<1x8x8x128xbf16> to vector<64x128xbf16>
    %c3_97 = arith.constant 3 : index
    %c0_98 = arith.constant 0 : index
    %c0_99 = arith.constant 0 : index
    %121 = vector.load %arg9[%c3_97, %c0_98, %c0_99] : memref<9x128x128xbf16, #tpu.memory_space<vmem>>, vector<1x128x128xbf16>
    %122 = vector.shape_cast %121 : vector<1x128x128xbf16> to vector<128x128xbf16>
    %cst_100 = arith.constant dense<0.000000e+00> : vector<64x128xf32>
    %123 = tpu.matmul %120, %122, %cst_100 {dimension_numbers = #tpu.dot_dimension_numbers<[1], [0], [0], [1], [0, 0, 1, 1], [], []>} : vector<64x128xbf16>, vector<128x128xbf16>, vector<64x128xf32> -> vector<64x128xf32>
    %124 = arith.addf %118, %123 : vector<64x128xf32>
    %c0_101 = arith.constant 0 : index
    %c1_102 = arith.constant 1 : index
    %c1_103 = arith.constant 1 : index
    %c0_104 = arith.constant 0 : index
    %125 = vector.load %arg11[%c0_101, %c1_102, %c1_103, %c0_104] : memref<1x10x10x128xbf16, #tpu.memory_space<vmem>>, vector<1x8x8x128xbf16>
    %126 = vector.shape_cast %125 : vector<1x8x8x128xbf16> to vector<64x128xbf16>
    %c4_105 = arith.constant 4 : index
    %c0_106 = arith.constant 0 : index
    %c0_107 = arith.constant 0 : index
    %127 = vector.load %arg9[%c4_105, %c0_106, %c0_107] : memref<9x128x128xbf16, #tpu.memory_space<vmem>>, vector<1x128x128xbf16>
    %128 = vector.shape_cast %127 : vector<1x128x128xbf16> to vector<128x128xbf16>
    %cst_108 = arith.constant dense<0.000000e+00> : vector<64x128xf32>
    %129 = tpu.matmul %126, %128, %cst_108 {dimension_numbers = #tpu.dot_dimension_numbers<[1], [0], [0], [1], [0, 0, 1, 1], [], []>} : vector<64x128xbf16>, vector<128x128xbf16>, vector<64x128xf32> -> vector<64x128xf32>
    %130 = arith.addf %124, %129 : vector<64x128xf32>
    %c0_109 = arith.constant 0 : index
    %c1_110 = arith.constant 1 : index
    %c2_111 = arith.constant 2 : index
    %c0_112 = arith.constant 0 : index
    %131 = vector.load %arg11[%c0_109, %c1_110, %c2_111, %c0_112] : memref<1x10x10x128xbf16, #tpu.memory_space<vmem>>, vector<1x8x8x128xbf16>
    %132 = vector.shape_cast %131 : vector<1x8x8x128xbf16> to vector<64x128xbf16>
    %c5_113 = arith.constant 5 : index
    %c0_114 = arith.constant 0 : index
    %c0_115 = arith.constant 0 : index
    %133 = vector.load %arg9[%c5_113, %c0_114, %c0_115] : memref<9x128x128xbf16, #tpu.memory_space<vmem>>, vector<1x128x128xbf16>
    %134 = vector.shape_cast %133 : vector<1x128x128xbf16> to vector<128x128xbf16>
    %cst_116 = arith.constant dense<0.000000e+00> : vector<64x128xf32>
    %135 = tpu.matmul %132, %134, %cst_116 {dimension_numbers = #tpu.dot_dimension_numbers<[1], [0], [0], [1], [0, 0, 1, 1], [], []>} : vector<64x128xbf16>, vector<128x128xbf16>, vector<64x128xf32> -> vector<64x128xf32>
    %136 = arith.addf %130, %135 : vector<64x128xf32>
    %c0_117 = arith.constant 0 : index
    %c2_118 = arith.constant 2 : index
    %c0_119 = arith.constant 0 : index
    %c0_120 = arith.constant 0 : index
    %137 = vector.load %arg11[%c0_117, %c2_118, %c0_119, %c0_120] : memref<1x10x10x128xbf16, #tpu.memory_space<vmem>>, vector<1x8x8x128xbf16>
    %138 = vector.shape_cast %137 : vector<1x8x8x128xbf16> to vector<64x128xbf16>
    %c6_121 = arith.constant 6 : index
    %c0_122 = arith.constant 0 : index
    %c0_123 = arith.constant 0 : index
    %139 = vector.load %arg9[%c6_121, %c0_122, %c0_123] : memref<9x128x128xbf16, #tpu.memory_space<vmem>>, vector<1x128x128xbf16>
    %140 = vector.shape_cast %139 : vector<1x128x128xbf16> to vector<128x128xbf16>
    %cst_124 = arith.constant dense<0.000000e+00> : vector<64x128xf32>
    %141 = tpu.matmul %138, %140, %cst_124 {dimension_numbers = #tpu.dot_dimension_numbers<[1], [0], [0], [1], [0, 0, 1, 1], [], []>} : vector<64x128xbf16>, vector<128x128xbf16>, vector<64x128xf32> -> vector<64x128xf32>
    %142 = arith.addf %136, %141 : vector<64x128xf32>
    %c0_125 = arith.constant 0 : index
    %c2_126 = arith.constant 2 : index
    %c1_127 = arith.constant 1 : index
    %c0_128 = arith.constant 0 : index
    %143 = vector.load %arg11[%c0_125, %c2_126, %c1_127, %c0_128] : memref<1x10x10x128xbf16, #tpu.memory_space<vmem>>, vector<1x8x8x128xbf16>
    %144 = vector.shape_cast %143 : vector<1x8x8x128xbf16> to vector<64x128xbf16>
    %c7_129 = arith.constant 7 : index
    %c0_130 = arith.constant 0 : index
    %c0_131 = arith.constant 0 : index
    %145 = vector.load %arg9[%c7_129, %c0_130, %c0_131] : memref<9x128x128xbf16, #tpu.memory_space<vmem>>, vector<1x128x128xbf16>
    %146 = vector.shape_cast %145 : vector<1x128x128xbf16> to vector<128x128xbf16>
    %cst_132 = arith.constant dense<0.000000e+00> : vector<64x128xf32>
    %147 = tpu.matmul %144, %146, %cst_132 {dimension_numbers = #tpu.dot_dimension_numbers<[1], [0], [0], [1], [0, 0, 1, 1], [], []>} : vector<64x128xbf16>, vector<128x128xbf16>, vector<64x128xf32> -> vector<64x128xf32>
    %148 = arith.addf %142, %147 : vector<64x128xf32>
    %c0_133 = arith.constant 0 : index
    %c2_134 = arith.constant 2 : index
    %c2_135 = arith.constant 2 : index
    %c0_136 = arith.constant 0 : index
    %149 = vector.load %arg11[%c0_133, %c2_134, %c2_135, %c0_136] : memref<1x10x10x128xbf16, #tpu.memory_space<vmem>>, vector<1x8x8x128xbf16>
    %150 = vector.shape_cast %149 : vector<1x8x8x128xbf16> to vector<64x128xbf16>
    %c8_137 = arith.constant 8 : index
    %c0_138 = arith.constant 0 : index
    %c0_139 = arith.constant 0 : index
    %151 = vector.load %arg9[%c8_137, %c0_138, %c0_139] : memref<9x128x128xbf16, #tpu.memory_space<vmem>>, vector<1x128x128xbf16>
    %152 = vector.shape_cast %151 : vector<1x128x128xbf16> to vector<128x128xbf16>
    %cst_140 = arith.constant dense<0.000000e+00> : vector<64x128xf32>
    %153 = tpu.matmul %150, %152, %cst_140 {dimension_numbers = #tpu.dot_dimension_numbers<[1], [0], [0], [1], [0, 0, 1, 1], [], []>} : vector<64x128xbf16>, vector<128x128xbf16>, vector<64x128xf32> -> vector<64x128xf32>
    %154 = arith.addf %148, %153 : vector<64x128xf32>
    %155 = vector.shape_cast %154 : vector<64x128xf32> to vector<1x64x128xf32>
    %c0_141 = arith.constant 0 : index
    %c0_142 = arith.constant 0 : index
    %c0_143 = arith.constant 0 : index
    %156 = vector.load %arg10[%c0_141, %c0_142, %c0_143] : memref<1x64x128xf32, #tpu.memory_space<vmem>>, vector<1x64x128xf32>
    tpu.vector_store %arg10[%c0_141, %c0_142, %c0_143], %155 {strides = array<i32>} : memref<1x64x128xf32, #tpu.memory_space<vmem>>, vector<1x64x128xf32>,
    return
  }
  func.func @transform_0(%arg0: i32) -> (i32, i32, i32, i32, i32) {
    %c0_i32 = arith.constant 0 : i32
    %c0_i32_0 = arith.constant 0 : i32
    %c0_i32_1 = arith.constant 0 : i32
    %c0_i32_2 = arith.constant 0 : i32
    %c0_i32_3 = arith.constant 0 : i32
    return %arg0, %c0_i32, %c0_i32_0, %c0_i32_1, %c0_i32_2 : i32, i32, i32, i32, i32
  }
  func.func @transform_1(%arg0: i32) -> (i32, i32, i32, i32) {
    %c0_i32 = arith.constant 0 : i32
    %c0_i32_0 = arith.constant 0 : i32
    %c0_i32_1 = arith.constant 0 : i32
    %c0_i32_2 = arith.constant 0 : i32
    %c0_i32_3 = arith.constant 0 : i32
    return %c0_i32, %c0_i32_0, %c0_i32_1, %c0_i32_2 : i32, i32, i32, i32
  }
  func.func @transform_2(%arg0: i32) -> (i32, i32) {
    %c0_i32 = arith.constant 0 : i32
    %c0_i32_0 = arith.constant 0 : i32
    %c0_i32_1 = arith.constant 0 : i32
    return %c0_i32, %c0_i32_0 : i32, i32
  }
  func.func @transform_3(%arg0: i32) -> (i32, i32) {
    %c0_i32 = arith.constant 0 : i32
    %c0_i32_0 = arith.constant 0 : i32
    %c0_i32_1 = arith.constant 0 : i32
    return %c0_i32, %c0_i32_0 : i32, i32
  }
  func.func @transform_4(%arg0: i32) -> (i32, i32, i32) {
    %c0_i32 = arith.constant 0 : i32
    %c0_i32_0 = arith.constant 0 : i32
    %c0_i32_1 = arith.constant 0 : i32
    %c0_i32_2 = arith.constant 0 : i32
    return %c0_i32, %c0_i32_0, %c0_i32_1 : i32, i32, i32
  }
  func.func @transform_5(%arg0: i32) -> (i32, i32) {
    %c0_i32 = arith.constant 0 : i32
    %c0_i32_0 = arith.constant 0 : i32
    %c0_i32_1 = arith.constant 0 : i32
    return %c0_i32, %c0_i32_0 : i32, i32
  }
  func.func @transform_6(%arg0: i32) -> (i32, i32) {
    %c0_i32 = arith.constant 0 : i32
    %c0_i32_0 = arith.constant 0 : i32
    %c0_i32_1 = arith.constant 0 : i32
    return %c0_i32, %c0_i32_0 : i32, i32
  }
  func.func @transform_7(%arg0: i32) -> (i32, i32) {
    %c0_i32 = arith.constant 0 : i32
    %c0_i32_0 = arith.constant 0 : i32
    %c0_i32_1 = arith.constant 0 : i32
    return %c0_i32, %c0_i32_0 : i32, i32
  }
  func.func @transform_8(%arg0: i32) -> (i32, i32, i32) {
    %c0_i32 = arith.constant 0 : i32
    %c0_i32_0 = arith.constant 0 : i32
    %c0_i32_1 = arith.constant 0 : i32
    %c0_i32_2 = arith.constant 0 : i32
    return %c0_i32, %c0_i32_0, %c0_i32_1 : i32, i32, i32
  }
  func.func @transform_9(%arg0: i32) -> (i32, i32, i32) {
    %c0_i32 = arith.constant 0 : i32
    %c0_i32_0 = arith.constant 0 : i32
    %c0_i32_1 = arith.constant 0 : i32
    return %arg0, %c0_i32, %c0_i32_0 : i32, i32, i32
  }
}

</mosaic_0001>

<llo_original>
// kernel: basic_block_forward.1
$region0: #{basic_block_forward.1}
  #allocation0 [shape = 'u32[]', space=smem, size = 0x4, offset = 0x4, fixed_abs, tag = 'smem constant byte address 0x4 - core index']
  #allocation1 [shape = 'u32[72,128]{1,0:T(1,128)}', space=vmem, size = 0x9000, scoped, tag = 'internal scratch']
  #allocation2 [shape = 'bf16[1,10,10,128]{3,2,1,0:T(8,128)(2,1)}', space=vmem, size = 0xa000, scoped, tag = 'scratch operand']
  %s0 = inlined_call_operand.vmem [shape: bf16[2,4,9,9,128], index: 0, kind: input, shape index: {}]
  %s1 = inlined_call_operand.vmem [shape: f32[4,9,9,1], index: 1, kind: input, shape index: {}]
  %s2 = inlined_call_operand.vmem [shape: f32[1,128], index: 2, kind: input, shape index: {}]
  %s3 = inlined_call_operand.vmem [shape: f32[1,128], index: 3, kind: input, shape index: {}]
  %s4 = inlined_call_operand.vmem [shape: bf16[9,128,128], index: 4, kind: input, shape index: {}]
  %s5 = inlined_call_operand.vmem [shape: bf16[128,128], index: 5, kind: input, shape index: {}]
  %s6 = inlined_call_operand.vmem [shape: f32[1,128], index: 6, kind: input, shape index: {}]
  %s7 = inlined_call_operand.vmem [shape: f32[1,128], index: 7, kind: input, shape index: {}]
  %s8 = inlined_call_operand.vmem [shape: bf16[9,128,128], index: 8, kind: input, shape index: {}]
  %s9 = inlined_call_operand.vmem [shape: f32[2,64,128], index: 9, kind: output, shape index: {}]
  %s10 = sld [smem:[#allocation0]]
  $region69: #{basic_block_forward.1} parent=0
    _
  %s12 = ssub.s32 1, %s10
  %s13 = scalar_select 0, %s12, %s10
  loop: start=0, step=1, limit=4
  $region2: #{basic_block_forward.1} parent=0 // loop_pre_header
    _
  $region3: #{basic_block_forward.1} parent=0 // loop_header
    %s15 = sphi 0, %s19
    %p16 = scmp.ge.s32.totalorder %s15, 4
    %s25 = sphi 0, %s27
    %s28 = sphi 0, %s25
    %s29 = sphi 0, %s28
    %s45 = sphi 0, %s29
    %s49 = sphi 0, %s49
    %s51 = sphi 0, %s49
    %s52 = sphi 0, %s51
    %s66 = sphi 0, %s52
    %s70 = sphi 0, %s70
    %s72 = sphi 0, %s70
    %s73 = sphi 0, %s72
    %s87 = sphi 0, %s73
    %s91 = sphi 0, %s91
    %s93 = sphi 0, %s91
    %s94 = sphi 0, %s93
    %s108 = sphi 0, %s94
    %s112 = sphi 0, %s112
    %s114 = sphi 0, %s112
    %s115 = sphi 0, %s114
    %s129 = sphi 0, %s115
    %s133 = sphi 0, %s133
    %s135 = sphi 0, %s133
    %s136 = sphi 0, %s135
    %s150 = sphi 0, %s136
    %s154 = sphi 0, %s154
    %s156 = sphi 0, %s154
    %s157 = sphi 0, %s156
    %s171 = sphi 0, %s157
    %s175 = sphi 0, %s175
    %s177 = sphi 0, %s175
    %s178 = sphi 0, %s177
    %s192 = sphi 0, %s178
    %s196 = sphi 0, %s196
    %s198 = sphi 0, %s196
    %s199 = sphi 0, %s198
    %s213 = sphi 0, %s199
    %s219 = sphi 0, %s221
    %s222 = sphi 0, %s219
    %s223 = sphi 0, %s222
    %s239 = sphi 0, %s223
  $region4: #{basic_block_forward.1} parent=0 // loop_header_branch
    %18 = sbr.rel (%p16) target = $region8
  $region5: #{basic_block_forward.1} parent=0 // loop_body
    %s20 = ssub.s32 %s15, 1
    %s21 = ssub.s32 %s15, 2
    %s22 = sadd.s32 %s15, 1
    %s23 = ssub.s32 %s15, %s22
    %p24 = scmp.eq.s32.totalorder %s23, 0
    %s26 = sadd.s32 %s25, 1
    %s27 = scalar_select %p24, %s25, %s26
    %p30 = pneg %p24
    %p31 = scmp.eq.s32.totalorder %s15, 1
    %p32 = por %p30, %p31
    %p33 = scmp.ne.s32.totalorder %s25, %s28
    %p34 = scmp.eq.s32.totalorder %s15, 0
    %p35 = por %p33, %p34
    %p36 = scmp.ne.s32.totalorder %s25, %s28
    %p37 = scmp.eq.s32.totalorder %s20, 1
    %p38 = por %p36, %p37
    %p39 = scmp.ne.s32.totalorder %s28, %s29
    %p40 = scmp.eq.s32.totalorder %s20, 0
    %p41 = por %p39, %p40
    %p42 = scmp.ne.s32.totalorder %s28, %s29
    %p43 = scmp.eq.s32.totalorder %s21, 1
    %p44 = por %p42, %p43
    %p46 = scmp.ne.s32.totalorder %s29, %s45
    %p47 = scmp.eq.s32.totalorder %s21, 0
    %p48 = por %p46, %p47
    %s50 = sadd.s32 %s49, 1
    %p53 = scmp.eq.s32.totalorder %s15, 1
    %p54 = scmp.ne.s32.totalorder %s49, %s51
    %p55 = scmp.eq.s32.totalorder %s15, 0
    %p56 = por %p54, %p55
    %p57 = scmp.ne.s32.totalorder %s49, %s51
    %p58 = scmp.eq.s32.totalorder %s20, 1
    %p59 = por %p57, %p58
    %p60 = scmp.ne.s32.totalorder %s51, %s52
    %p61 = scmp.eq.s32.totalorder %s20, 0
    %p62 = por %p60, %p61
    %p63 = scmp.ne.s32.totalorder %s51, %s52
    %p64 = scmp.eq.s32.totalorder %s21, 1
    %p65 = por %p63, %p64
    %p67 = scmp.ne.s32.totalorder %s52, %s66
    %p68 = scmp.eq.s32.totalorder %s21, 0
    %p69 = por %p67, %p68
    %s71 = sadd.s32 %s70, 1
    %p74 = scmp.eq.s32.totalorder %s15, 1
    %p75 = scmp.ne.s32.totalorder %s70, %s72
    %p76 = scmp.eq.s32.totalorder %s15, 0
    %p77 = por %p75, %p76
    %p78 = scmp.ne.s32.totalorder %s70, %s72
    %p79 = scmp.eq.s32.totalorder %s20, 1
    %p80 = por %p78, %p79
    %p81 = scmp.ne.s32.totalorder %s72, %s73
    %p82 = scmp.eq.s32.totalorder %s20, 0
    %p83 = por %p81, %p82
    %p84 = scmp.ne.s32.totalorder %s72, %s73
    %p85 = scmp.eq.s32.totalorder %s21, 1
    %p86 = por %p84, %p85
    %p88 = scmp.ne.s32.totalorder %s73, %s87
    %p89 = scmp.eq.s32.totalorder %s21, 0
    %p90 = por %p88, %p89
    %s92 = sadd.s32 %s91, 1
    %p95 = scmp.eq.s32.totalorder %s15, 1
    %p96 = scmp.ne.s32.totalorder %s91, %s93
    %p97 = scmp.eq.s32.totalorder %s15, 0
    %p98 = por %p96, %p97
    %p99 = scmp.ne.s32.totalorder %s91, %s93
    %p100 = scmp.eq.s32.totalorder %s20, 1
    %p101 = por %p99, %p100
    %p102 = scmp.ne.s32.totalorder %s93, %s94
    %p103 = scmp.eq.s32.totalorder %s20, 0
    %p104 = por %p102, %p103
    %p105 = scmp.ne.s32.totalorder %s93, %s94
    %p106 = scmp.eq.s32.totalorder %s21, 1
    %p107 = por %p105, %p106
    %p109 = scmp.ne.s32.totalorder %s94, %s108
    %p110 = scmp.eq.s32.totalorder %s21, 0
    %p111 = por %p109, %p110
    %s113 = sadd.s32 %s112, 1
    %p116 = scmp.eq.s32.totalorder %s15, 1
    %p117 = scmp.ne.s32.totalorder %s112, %s114
    %p118 = scmp.eq.s32.totalorder %s15, 0
    %p119 = por %p117, %p118
    %p120 = scmp.ne.s32.totalorder %s112, %s114
    %p121 = scmp.eq.s32.totalorder %s20, 1
    %p122 = por %p120, %p121
    %p123 = scmp.ne.s32.totalorder %s114, %s115
    %p124 = scmp.eq.s32.totalorder %s20, 0
    %p125 = por %p123, %p124
    %p126 = scmp.ne.s32.totalorder %s114, %s115
    %p127 = scmp.eq.s32.totalorder %s21, 1
    %p128 = por %p126, %p127
    %p130 = scmp.ne.s32.totalorder %s115, %s129
    %p131 = scmp.eq.s32.totalorder %s21, 0
    %p132 = por %p130, %p131
    %s134 = sadd.s32 %s133, 1
    %p137 = scmp.eq.s32.totalorder %s15, 1
    %p138 = scmp.ne.s32.totalorder %s133, %s135
    %p139 = scmp.eq.s32.totalorder %s15, 0
    %p140 = por %p138, %p139
    %p141 = scmp.ne.s32.totalorder %s133, %s135
    %p142 = scmp.eq.s32.totalorder %s20, 1
    %p143 = por %p141, %p142
    %p144 = scmp.ne.s32.totalorder %s135, %s136
    %p145 = scmp.eq.s32.totalorder %s20, 0
    %p146 = por %p144, %p145
    %p147 = scmp.ne.s32.totalorder %s135, %s136
    %p148 = scmp.eq.s32.totalorder %s21, 1
    %p149 = por %p147, %p148
    %p151 = scmp.ne.s32.totalorder %s136, %s150
    %p152 = scmp.eq.s32.totalorder %s21, 0
    %p153 = por %p151, %p152
    %s155 = sadd.s32 %s154, 1
    %p158 = scmp.eq.s32.totalorder %s15, 1
    %p159 = scmp.ne.s32.totalorder %s154, %s156
    %p160 = scmp.eq.s32.totalorder %s15, 0
    %p161 = por %p159, %p160
    %p162 = scmp.ne.s32.totalorder %s154, %s156
    %p163 = scmp.eq.s32.totalorder %s20, 1
    %p164 = por %p162, %p163
    %p165 = scmp.ne.s32.totalorder %s156, %s157
    %p166 = scmp.eq.s32.totalorder %s20, 0
    %p167 = por %p165, %p166
    %p168 = scmp.ne.s32.totalorder %s156, %s157
    %p169 = scmp.eq.s32.totalorder %s21, 1
    %p170 = por %p168, %p169
    %p172 = scmp.ne.s32.totalorder %s157, %s171
    %p173 = scmp.eq.s32.totalorder %s21, 0
    %p174 = por %p172, %p173
    %s176 = sadd.s32 %s175, 1
    %p179 = scmp.eq.s32.totalorder %s15, 1
    %p180 = scmp.ne.s32.totalorder %s175, %s177
    %p181 = scmp.eq.s32.totalorder %s15, 0
    %p182 = por %p180, %p181
    %p183 = scmp.ne.s32.totalorder %s175, %s177
    %p184 = scmp.eq.s32.totalorder %s20, 1
    %p185 = por %p183, %p184
    %p186 = scmp.ne.s32.totalorder %s177, %s178
    %p187 = scmp.eq.s32.totalorder %s20, 0
    %p188 = por %p186, %p187
    %p189 = scmp.ne.s32.totalorder %s177, %s178
    %p190 = scmp.eq.s32.totalorder %s21, 1
    %p191 = por %p189, %p190
    %p193 = scmp.ne.s32.totalorder %s178, %s192
    %p194 = scmp.eq.s32.totalorder %s21, 0
    %p195 = por %p193, %p194
    %s197 = sadd.s32 %s196, 1
    %p200 = scmp.eq.s32.totalorder %s15, 1
    %p201 = scmp.ne.s32.totalorder %s196, %s198
    %p202 = scmp.eq.s32.totalorder %s15, 0
    %p203 = por %p201, %p202
    %p204 = scmp.ne.s32.totalorder %s196, %s198
    %p205 = scmp.eq.s32.totalorder %s20, 1
    %p206 = por %p204, %p205
    %p207 = scmp.ne.s32.totalorder %s198, %s199
    %p208 = scmp.eq.s32.totalorder %s20, 0
    %p209 = por %p207, %p208
    %p210 = scmp.ne.s32.totalorder %s198, %s199
    %p211 = scmp.eq.s32.totalorder %s21, 1
    %p212 = por %p210, %p211
    %p214 = scmp.ne.s32.totalorder %s199, %s213
    %p215 = scmp.eq.s32.totalorder %s21, 0
    %p216 = por %p214, %p215
    %s217 = ssub.s32 %s15, %s22
    %p218 = scmp.eq.s32.totalorder %s217, 0
    %s220 = sadd.s32 %s219, 1
    %s221 = scalar_select %p218, %s219, %s220
    %p224 = pneg %p218
    %p225 = scmp.eq.s32.totalorder %s15, 1
    %p226 = por %p224, %p225
    %p227 = scmp.ne.s32.totalorder %s219, %s222
    %p228 = scmp.eq.s32.totalorder %s15, 0
    %p229 = por %p227, %p228
    %p230 = scmp.ne.s32.totalorder %s219, %s222
    %p231 = scmp.eq.s32.totalorder %s20, 1
    %p232 = por %p230, %p231
    %p233 = scmp.ne.s32.totalorder %s222, %s223
    %p234 = scmp.eq.s32.totalorder %s20, 0
    %p235 = por %p233, %p234
    %p236 = scmp.ne.s32.totalorder %s222, %s223
    %p237 = scmp.eq.s32.totalorder %s21, 1
    %p238 = por %p236, %p237
    %p240 = scmp.ne.s32.totalorder %s223, %s239
    %p241 = scmp.eq.s32.totalorder %s21, 0
    %p242 = por %p240, %p241
    %p243 = scmp.le.s32.totalorder 1, %s15
    %p244 = scmp.lt.s32.totalorder %s15, 3
    %p245 = pnand %p243, %p244
    %p246 = pneg %p245
    // Predicated region
    $region9: #{basic_block_forward.1} parent=5 // pred_check
      _
    $region10: #{basic_block_forward.1} parent=5 // pred_check_branch
      %248 = sbr.rel (%p245) target = $region12
    $region11: #{basic_block_forward.1} parent=5 // pred_region
      %s249 = ssub.s32 %s15, 1
      // Predicated region
      $region13: #{basic_block_forward.1} parent=11 // pred_check
        %p250 = pneg %p62
      $region14: #{basic_block_forward.1} parent=11 // pred_check_branch
        %252 = sbr.rel (%p250) target = $region16
      $region15: #{basic_block_forward.1} parent=11 // pred_region
        _
      $region16: #{basic_block_forward.1} parent=11 // pred_fallthru
        _
      // Predicated region
      $region17: #{basic_block_forward.1} parent=11 // pred_check
        %p253 = pneg %p83
      $region18: #{basic_block_forward.1} parent=11 // pred_check_branch
        %255 = sbr.rel (%p253) target = $region20
      $region19: #{basic_block_forward.1} parent=11 // pred_region
        _
      $region20: #{basic_block_forward.1} parent=11 // pred_fallthru
        _
      // Predicated region
      $region21: #{basic_block_forward.1} parent=11 // pred_check
        %p256 = pneg %p104
      $region22: #{basic_block_forward.1} parent=11 // pred_check_branch
        %258 = sbr.rel (%p256) target = $region24
      $region23: #{basic_block_forward.1} parent=11 // pred_region
        _
      $region24: #{basic_block_forward.1} parent=11 // pred_fallthru
        _
      // Predicated region
      $region25: #{basic_block_forward.1} parent=11 // pred_check
        %p259 = pneg %p125
      $region26: #{basic_block_forward.1} parent=11 // pred_check_branch
        %261 = sbr.rel (%p259) target = $region28
      $region27: #{basic_block_forward.1} parent=11 // pred_region
        _
      $region28: #{basic_block_forward.1} parent=11 // pred_fallthru
        _
      // Predicated region
      $region29: #{basic_block_forward.1} parent=11 // pred_check
        %p262 = pneg %p146
      $region30: #{basic_block_forward.1} parent=11 // pred_check_branch
        %264 = sbr.rel (%p262) target = $region32
      $region31: #{basic_block_forward.1} parent=11 // pred_region
        _
      $region32: #{basic_block_forward.1} parent=11 // pred_fallthru
        _
      // Predicated region
      $region33: #{basic_block_forward.1} parent=11 // pred_check
        %p265 = pneg %p167
      $region34: #{basic_block_forward.1} parent=11 // pred_check_branch
        %267 = sbr.rel (%p265) target = $region36
      $region35: #{basic_block_forward.1} parent=11 // pred_region
        _
      $region36: #{basic_block_forward.1} parent=11 // pred_fallthru
        _
      // Predicated region
      $region37: #{basic_block_forward.1} parent=11 // pred_check
        %p268 = pneg %p188
      $region38: #{basic_block_forward.1} parent=11 // pred_check_branch
        %270 = sbr.rel (%p268) target = $region40
      $region39: #{basic_block_forward.1} parent=11 // pred_region
        _
      $region40: #{basic_block_forward.1} parent=11 // pred_fallthru
        _
      // Predicated region
      $region41: #{basic_block_forward.1} parent=11 // pred_check
        %p271 = pneg %p209
      $region42: #{basic_block_forward.1} parent=11 // pred_check_branch
        %273 = sbr.rel (%p271) target = $region44
      $region43: #{basic_block_forward.1} parent=11 // pred_region
        _
      $region44: #{basic_block_forward.1} parent=11 // pred_fallthru
        _
    $region12: #{basic_block_forward.1} parent=5 // pred_fallthru
      _
    %p274 = scmp.lt.s32.totalorder %s15, 2
    // Predicated region
    $region45: #{basic_block_forward.1} parent=5 // pred_check
      %p275 = pneg %p274
    $region46: #{basic_block_forward.1} parent=5 // pred_check_branch
      %277 = sbr.rel (%p275) target = $region48
    $region47: #{basic_block_forward.1} parent=5 // pred_region
      // Predicated region
      $region49: #{basic_block_forward.1} parent=47 // pred_check
        %p278 = pneg %p35
      $region50: #{basic_block_forward.1} parent=47 // pred_check_branch
        %280 = sbr.rel (%p278) target = $region52
      $region51: #{basic_block_forward.1} parent=47 // pred_region
        %p281 = scmp.lt.s32.totalorder %s15, 1
        %s282 = scalar_select %p281, %s15, 1
        %s283 = smul.addr %s282, 72
        %s284 = smul.addr %s283, 4
        %s285 = scalar_lea.vmem %s0, %s284
      $region52: #{basic_block_forward.1} parent=47 // pred_fallthru
        _
    $region48: #{basic_block_forward.1} parent=5 // pred_fallthru
      _
    %p286 = scmp.le.s32.totalorder 1, %s15
    %p287 = scmp.lt.s32.totalorder %s15, 3
    %p288 = pnand %p286, %p287
    %p289 = pneg %p288
    // Predicated region
    $region53: #{basic_block_forward.1} parent=5 // pred_check
      _
    $region54: #{basic_block_forward.1} parent=5 // pred_check_branch
      %291 = sbr.rel (%p288) target = $region56
    $region55: #{basic_block_forward.1} parent=5 // pred_region
      %s292 = ssub.s32 %s15, 1
      %p293 = scmp.lt.s32.totalorder %s20, 1
      %s294 = scalar_select %p293, %s20, 1
      %s295 = smul.addr %s294, 72
      %s296 = smul.addr %s295, 4
      %s297 = scalar_lea.vmem %s0, %s296
      %p298 = pneg %p41
      %p299 = pneg %p38
      %p300 = pneg %p62
      %p301 = pneg %p59
      %p302 = pneg %p83
      %p303 = pneg %p80
      %p304 = pneg %p104
      %p305 = pneg %p101
      %p306 = pneg %p125
      %p307 = pneg %p122
      %p308 = pneg %p146
      %p309 = pneg %p143
      %p310 = pneg %p167
      %p311 = pneg %p164
      %p312 = pneg %p188
      %p313 = pneg %p185
      %p314 = pneg %p209
      %p315 = pneg %p206
      %p316 = pneg %p235
      %p317 = pneg %p232
      %p318 = scmp.lt.s32.totalorder %s20, 1
      %s319 = scalar_select %p318, %s20, 1
      %s320 = smul.addr %s319, 8
      %s321 = smul.addr %s320, 8
      %s322 = scalar_lea.vmem %s9, %s321
      %p323 = scmp.lt.s32.totalorder %s20, 1
      %s324 = scalar_select %p323, %s20, 1
      %s325 = smul.addr %s324, 72
      %s326 = smul.addr %s325, 4
      %s327 = scalar_lea.vmem %s0, %s326
      %p328 = scmp.lt.s32.totalorder %s20, 1
      %s329 = scalar_select %p328, %s20, 1
      %s330 = smul.addr %s329, 8
      %s331 = smul.addr %s330, 8
      %s332 = scalar_lea.vmem %s9, %s331
      %v334 = vld [vmem:[%s327] sm:$0xf]
      %v335 = vld [vmem:[%s327 + $0x4] sm:$0x1]
      %v336 = vld [vmem:[%s327 + $0x8] sm:$0xf]
      %v337 = vld [vmem:[%s327 + $0xc] sm:$0x1]
      %v338 = vld [vmem:[%s327 + $0x10] sm:$0xf]
      %v339 = vld [vmem:[%s327 + $0x14] sm:$0x1]
      %v340 = vld [vmem:[%s327 + $0x18] sm:$0xf]
      %v341 = vld [vmem:[%s327 + $0x1c] sm:$0x1]
      %v342 = vld [vmem:[%s327 + $0x20] sm:$0xf]
      %v343 = vld [vmem:[%s327 + $0x24] sm:$0x1]
      %v344 = vld [vmem:[%s327 + $0x28] sm:$0xf]
      %v345 = vld [vmem:[%s327 + $0x2c] sm:$0x1]
      %v346 = vld [vmem:[%s327 + $0x30] sm:$0xf]
      %v347 = vld [vmem:[%s327 + $0x34] sm:$0x1]
      %v348 = vld [vmem:[%s327 + $0x38] sm:$0xf]
      %v349 = vld [vmem:[%s327 + $0x3c] sm:$0x1]
      %v350 = vld [vmem:[%s327 + $0x40] sm:$0xf]
      %v351 = vld [vmem:[%s327 + $0x44] sm:$0x1]
      %v352 = vld [vmem:[%s327 + $0x48] sm:$0xf]
      %v353 = vld [vmem:[%s327 + $0x50] sm:$0xf]
      %v354 = vld [vmem:[%s327 + $0x58] sm:$0xf]
      %v355 = vld [vmem:[%s327 + $0x60] sm:$0xf]
      %v356 = vld [vmem:[%s327 + $0x68] sm:$0xf]
      %v357 = vld [vmem:[%s327 + $0x70] sm:$0xf]
      %v358 = vld [vmem:[%s327 + $0x78] sm:$0xf]
      %v359 = vld [vmem:[%s327 + $0x80] sm:$0xf]
      %v360 = vld [vmem:[%s327 + $0x88] sm:$0xf]
      %v361 = vld [vmem:[%s327 + $0x90] sm:$0xf]
      %v362 = vld [vmem:[%s327 + $0x94] sm:$0x1]
      %v363 = vld [vmem:[%s327 + $0x98] sm:$0xf]
      %v364 = vld [vmem:[%s327 + $0x9c] sm:$0x1]
      %v365 = vld [vmem:[%s327 + $0xa0] sm:$0xf]
      %v366 = vld [vmem:[%s327 + $0xa4] sm:$0x1]
      %v367 = vld [vmem:[%s327 + $0xa8] sm:$0xf]
      %v368 = vld [vmem:[%s327 + $0xac] sm:$0x1]
      %v369 = vld [vmem:[%s327 + $0xb0] sm:$0xf]
      %v370 = vld [vmem:[%s327 + $0xb4] sm:$0x1]
      %v371 = vld [vmem:[%s327 + $0xb8] sm:$0xf]
      %v372 = vld [vmem:[%s327 + $0xbc] sm:$0x1]
      %v373 = vld [vmem:[%s327 + $0xc0] sm:$0xf]
      %v374 = vld [vmem:[%s327 + $0xc4] sm:$0x1]
      %v375 = vld [vmem:[%s327 + $0xc8] sm:$0xf]
      %v376 = vld [vmem:[%s327 + $0xcc] sm:$0x1]
      %v377 = vld [vmem:[%s327 + $0xd8] sm:$0xf]
      %v378 = vld [vmem:[%s327 + $0xe0] sm:$0xf]
      %v379 = vld [vmem:[%s327 + $0xe8] sm:$0xf]
      %v380 = vld [vmem:[%s327 + $0xf0] sm:$0xf]
      %v381 = vld [vmem:[%s327 + $0xf8] sm:$0xf]
      %v382 = vld [vmem:[%s327 + $0x100] sm:$0xf]
      %v383 = vld [vmem:[%s327 + $0x108] sm:$0xf]
      %v384 = vld [vmem:[%s327 + $0x110] sm:$0xf]
      %v385 = vunpack.c.l.bf16 %v334
      %v386 = vunpack.c.l.bf16 %v335
      %v387 = vunpack.c.l.bf16 %v336
      %v388 = vunpack.c.l.bf16 %v337
      %v389 = vunpack.c.l.bf16 %v338
      %v390 = vunpack.c.l.bf16 %v339
      %v391 = vunpack.c.l.bf16 %v340
      %v392 = vunpack.c.l.bf16 %v341
      %v393 = vunpack.c.l.bf16 %v342
      %v394 = vunpack.c.l.bf16 %v343
      %v395 = vunpack.c.l.bf16 %v344
      %v396 = vunpack.c.l.bf16 %v345
      %v397 = vunpack.c.l.bf16 %v346
      %v398 = vunpack.c.l.bf16 %v347
      %v399 = vunpack.c.l.bf16 %v348
      %v400 = vunpack.c.l.bf16 %v349
      %v401 = vunpack.c.l.bf16 %v350
      %v402 = vunpack.c.l.bf16 %v351
      %v403 = vunpack.c.l.bf16 %v352
      %v404 = vunpack.c.l.bf16 %v353
      %v405 = vunpack.c.l.bf16 %v354
      %v406 = vunpack.c.l.bf16 %v355
      %v407 = vunpack.c.l.bf16 %v356
      %v408 = vunpack.c.l.bf16 %v357
      %v409 = vunpack.c.l.bf16 %v358
      %v410 = vunpack.c.l.bf16 %v359
      %v411 = vunpack.c.l.bf16 %v360
      %v412 = vunpack.c.l.bf16 %v361
      %v413 = vunpack.c.l.bf16 %v362
      %v414 = vunpack.c.l.bf16 %v363
      %v415 = vunpack.c.l.bf16 %v364
      %v416 = vunpack.c.l.bf16 %v365
      %v417 = vunpack.c.l.bf16 %v366
      %v418 = vunpack.c.l.bf16 %v367
      %v419 = vunpack.c.l.bf16 %v368
      %v420 = vunpack.c.l.bf16 %v369
      %v421 = vunpack.c.l.bf16 %v370
      %v422 = vunpack.c.l.bf16 %v371
      %v423 = vunpack.c.l.bf16 %v372
      %v424 = vunpack.c.l.bf16 %v373
      %v425 = vunpack.c.l.bf16 %v374
      %v426 = vunpack.c.l.bf16 %v375
      %v427 = vunpack.c.l.bf16 %v376
      %v428 = vunpack.c.l.bf16 %v377
      %v429 = vunpack.c.l.bf16 %v378
      %v430 = vunpack.c.l.bf16 %v379
      %v431 = vunpack.c.l.bf16 %v380
      %v432 = vunpack.c.l.bf16 %v381
      %v433 = vunpack.c.l.bf16 %v382
      %v434 = vunpack.c.l.bf16 %v383
      %v435 = vunpack.c.l.bf16 %v384
      %v436 = vld [vmem:[%s2] sm:$0x1]
      %v438 = vperm.slane %v436, 0
      %v440 = vmul.f32 %v385, %v438
      %v441 = vmul.f32 %v386, %v438
      %v442 = vmul.f32 %v387, %v438
      %v443 = vmul.f32 %v388, %v438
      %v444 = vmul.f32 %v389, %v438
      %v445 = vmul.f32 %v390, %v438
      %v446 = vmul.f32 %v391, %v438
      %v447 = vmul.f32 %v392, %v438
      %v448 = vmul.f32 %v393, %v438
      %v449 = vmul.f32 %v394, %v438
      %v450 = vmul.f32 %v395, %v438
      %v451 = vmul.f32 %v396, %v438
      %v452 = vmul.f32 %v397, %v438
      %v453 = vmul.f32 %v398, %v438
      %v454 = vmul.f32 %v399, %v438
      %v455 = vmul.f32 %v400, %v438
      %v456 = vmul.f32 %v401, %v438
      %v457 = vmul.f32 %v402, %v438
      %v458 = vmul.f32 %v403, %v438
      %v459 = vmul.f32 %v404, %v438
      %v460 = vmul.f32 %v405, %v438
      %v461 = vmul.f32 %v406, %v438
      %v462 = vmul.f32 %v407, %v438
      %v463 = vmul.f32 %v408, %v438
      %v464 = vmul.f32 %v409, %v438
      %v465 = vmul.f32 %v410, %v438
      %v466 = vmul.f32 %v411, %v438
      %v467 = vmul.f32 %v412, %v438
      %v468 = vmul.f32 %v413, %v438
      %v469 = vmul.f32 %v414, %v438
      %v470 = vmul.f32 %v415, %v438
      %v471 = vmul.f32 %v416, %v438
      %v472 = vmul.f32 %v417, %v438
      %v473 = vmul.f32 %v418, %v438
      %v474 = vmul.f32 %v419, %v438
      %v475 = vmul.f32 %v420, %v438
      %v476 = vmul.f32 %v421, %v438
      %v477 = vmul.f32 %v422, %v438
      %v478 = vmul.f32 %v423, %v438
      %v479 = vmul.f32 %v424, %v438
      %v480 = vmul.f32 %v425, %v438
      %v481 = vmul.f32 %v426, %v438
      %v482 = vmul.f32 %v427, %v438
      %v483 = vmul.f32 %v428, %v438
      %v484 = vmul.f32 %v429, %v438
      %v485 = vmul.f32 %v430, %v438
      %v486 = vmul.f32 %v431, %v438
      %v487 = vmul.f32 %v432, %v438
      %v488 = vmul.f32 %v433, %v438
      %v489 = vmul.f32 %v434, %v438
      %v490 = vmul.f32 %v435, %v438
      %v491 = vld [vmem:[%s3] sm:$0x1]
      %v493 = vperm.slane %v491, 0
      %v495 = vadd.f32 %v440, %v493
      %v496 = vadd.f32 %v441, %v493
      %v497 = vadd.f32 %v442, %v493
      %v498 = vadd.f32 %v443, %v493
      %v499 = vadd.f32 %v444, %v493
      %v500 = vadd.f32 %v445, %v493
      %v501 = vadd.f32 %v446, %v493
      %v502 = vadd.f32 %v447, %v493
      %v503 = vadd.f32 %v448, %v493
      %v504 = vadd.f32 %v449, %v493
      %v505 = vadd.f32 %v450, %v493
      %v506 = vadd.f32 %v451, %v493
      %v507 = vadd.f32 %v452, %v493
      %v508 = vadd.f32 %v453, %v493
      %v509 = vadd.f32 %v454, %v493
      %v510 = vadd.f32 %v455, %v493
      %v511 = vadd.f32 %v456, %v493
      %v512 = vadd.f32 %v457, %v493
      %v513 = vadd.f32 %v458, %v493
      %v514 = vadd.f32 %v459, %v493
      %v515 = vadd.f32 %v460, %v493
      %v516 = vadd.f32 %v461, %v493
      %v517 = vadd.f32 %v462, %v493
      %v518 = vadd.f32 %v463, %v493
      %v519 = vadd.f32 %v464, %v493
      %v520 = vadd.f32 %v465, %v493
      %v521 = vadd.f32 %v466, %v493
      %v522 = vadd.f32 %v467, %v493
      %v523 = vadd.f32 %v468, %v493
      %v524 = vadd.f32 %v469, %v493
      %v525 = vadd.f32 %v470, %v493
      %v526 = vadd.f32 %v471, %v493
      %v527 = vadd.f32 %v472, %v493
      %v528 = vadd.f32 %v473, %v493
      %v529 = vadd.f32 %v474, %v493
      %v530 = vadd.f32 %v475, %v493
      %v531 = vadd.f32 %v476, %v493
      %v532 = vadd.f32 %v477, %v493
      %v533 = vadd.f32 %v478, %v493
      %v534 = vadd.f32 %v479, %v493
      %v535 = vadd.f32 %v480, %v493
      %v536 = vadd.f32 %v481, %v493
      %v537 = vadd.f32 %v482, %v493
      %v538 = vadd.f32 %v483, %v493
      %v539 = vadd.f32 %v484, %v493
      %v540 = vadd.f32 %v485, %v493
      %v541 = vadd.f32 %v486, %v493
      %v542 = vadd.f32 %v487, %v493
      %v543 = vadd.f32 %v488, %v493
      %v544 = vadd.f32 %v489, %v493
      %v545 = vadd.f32 %v490, %v493
      %v546 = vmax.f32 %v495, 0.0
      %v547 = vmax.f32 %v496, 0.0
      %v548 = vmax.f32 %v497, 0.0
      %v549 = vmax.f32 %v498, 0.0
      %v550 = vmax.f32 %v499, 0.0
      %v551 = vmax.f32 %v500, 0.0
      %v552 = vmax.f32 %v501, 0.0
      %v553 = vmax.f32 %v502, 0.0
      %v554 = vmax.f32 %v503, 0.0
      %v555 = vmax.f32 %v504, 0.0
      %v556 = vmax.f32 %v505, 0.0
      %v557 = vmax.f32 %v506, 0.0
      %v558 = vmax.f32 %v507, 0.0
      %v559 = vmax.f32 %v508, 0.0
      %v560 = vmax.f32 %v509, 0.0
      %v561 = vmax.f32 %v510, 0.0
      %v562 = vmax.f32 %v511, 0.0
      %v563 = vmax.f32 %v512, 0.0
      %v564 = vmax.f32 %v513, 0.0
      %v565 = vmax.f32 %v514, 0.0
      %v566 = vmax.f32 %v515, 0.0
      %v567 = vmax.f32 %v516, 0.0
      %v568 = vmax.f32 %v517, 0.0
      %v569 = vmax.f32 %v518, 0.0
      %v570 = vmax.f32 %v519, 0.0
      %v571 = vmax.f32 %v520, 0.0
      %v572 = vmax.f32 %v521, 0.0
      %v573 = vmax.f32 %v522, 0.0
      %v574 = vmax.f32 %v523, 0.0
      %v575 = vmax.f32 %v524, 0.0
      %v576 = vmax.f32 %v525, 0.0
      %v577 = vmax.f32 %v526, 0.0
      %v578 = vmax.f32 %v527, 0.0
      %v579 = vmax.f32 %v528, 0.0
      %v580 = vmax.f32 %v529, 0.0
      %v581 = vmax.f32 %v530, 0.0
      %v582 = vmax.f32 %v531, 0.0
      %v583 = vmax.f32 %v532, 0.0
      %v584 = vmax.f32 %v533, 0.0
      %v585 = vmax.f32 %v534, 0.0
      %v586 = vmax.f32 %v535, 0.0
      %v587 = vmax.f32 %v536, 0.0
      %v588 = vmax.f32 %v537, 0.0
      %v589 = vmax.f32 %v538, 0.0
      %v590 = vmax.f32 %v539, 0.0
      %v591 = vmax.f32 %v540, 0.0
      %v592 = vmax.f32 %v541, 0.0
      %v593 = vmax.f32 %v542, 0.0
      %v594 = vmax.f32 %v543, 0.0
      %v595 = vmax.f32 %v544, 0.0
      %v596 = vmax.f32 %v545, 0.0
      %v597 = vld [vmem:[%s1] sm:$0xff]
      %v598 = vld [vmem:[%s1 + $0x8] sm:$0x1]
      %v599 = vld [vmem:[%s1 + $0x10] sm:$0xff]
      %v600 = vld [vmem:[%s1 + $0x18] sm:$0x1]
      %v601 = vld [vmem:[%s1 + $0x20] sm:$0xff]
      %v602 = vld [vmem:[%s1 + $0x28] sm:$0x1]
      %v603 = vld [vmem:[%s1 + $0x30] sm:$0xff]
      %v604 = vld [vmem:[%s1 + $0x38] sm:$0x1]
      %v605 = vld [vmem:[%s1 + $0x40] sm:$0xff]
      %v606 = vld [vmem:[%s1 + $0x48] sm:$0x1]
      %v607 = vld [vmem:[%s1 + $0x50] sm:$0xff]
      %v608 = vld [vmem:[%s1 + $0x58] sm:$0x1]
      %v609 = vld [vmem:[%s1 + $0x60] sm:$0xff]
      %v610 = vld [vmem:[%s1 + $0x68] sm:$0x1]
      %v611 = vld [vmem:[%s1 + $0x70] sm:$0xff]
      %v612 = vld [vmem:[%s1 + $0x78] sm:$0x1]
      %v613 = vld [vmem:[%s1 + $0x80] sm:$0xff]
      %v614 = vld [vmem:[%s1 + $0x88] sm:$0x1]
      %v615 = vld [vmem:[%s1 + $0x90] sm:$0xff]
      %v616 = vld [vmem:[%s1 + $0xa0] sm:$0xff]
      %v617 = vld [vmem:[%s1 + $0xb0] sm:$0xff]
      %v618 = vld [vmem:[%s1 + $0xc0] sm:$0xff]
      %v619 = vld [vmem:[%s1 + $0xd0] sm:$0xff]
      %v620 = vld [vmem:[%s1 + $0xe0] sm:$0xff]
      %v621 = vld [vmem:[%s1 + $0xf0] sm:$0xff]
      %v622 = vld [vmem:[%s1 + $0x100] sm:$0xff]
      %v623 = vld [vmem:[%s1 + $0x110] sm:$0xff]
      %v624 = vld [vmem:[%s1 + $0x120] sm:$0xff]
      %v625 = vld [vmem:[%s1 + $0x128] sm:$0x1]
      %v626 = vld [vmem:[%s1 + $0x130] sm:$0xff]
      %v627 = vld [vmem:[%s1 + $0x138] sm:$0x1]
      %v628 = vld [vmem:[%s1 + $0x140] sm:$0xff]
      %v629 = vld [vmem:[%s1 + $0x148] sm:$0x1]
      %v630 = vld [vmem:[%s1 + $0x150] sm:$0xff]
      %v631 = vld [vmem:[%s1 + $0x158] sm:$0x1]
      %v632 = vld [vmem:[%s1 + $0x160] sm:$0xff]
      %v633 = vld [vmem:[%s1 + $0x168] sm:$0x1]
      %v634 = vld [vmem:[%s1 + $0x170] sm:$0xff]
      %v635 = vld [vmem:[%s1 + $0x178] sm:$0x1]
      %v636 = vld [vmem:[%s1 + $0x180] sm:$0xff]
      %v637 = vld [vmem:[%s1 + $0x188] sm:$0x1]
      %v638 = vld [vmem:[%s1 + $0x190] sm:$0xff]
      %v639 = vld [vmem:[%s1 + $0x198] sm:$0x1]
      %v640 = vld [vmem:[%s1 + $0x1b0] sm:$0xff]
      %v641 = vld [vmem:[%s1 + $0x1c0] sm:$0xff]
      %v642 = vld [vmem:[%s1 + $0x1d0] sm:$0xff]
      %v643 = vld [vmem:[%s1 + $0x1e0] sm:$0xff]
      %v644 = vld [vmem:[%s1 + $0x1f0] sm:$0xff]
      %v645 = vld [vmem:[%s1 + $0x200] sm:$0xff]
      %v646 = vld [vmem:[%s1 + $0x210] sm:$0xff]
      %v647 = vld [vmem:[%s1 + $0x220] sm:$0xff]
      %649 = vset.pattern.permute.xlu0 0
      %650 = vperm.xlu0 %649, %v597
      %v651 = vpop.permute.xlu0 %650
      %654 = vset.pattern.permute.xlu0 0
      %655 = vperm.xlu0 %654, %v598
      %v656 = vpop.permute.xlu0 %655
      %659 = vset.pattern.permute.xlu0 0
      %660 = vperm.xlu0 %659, %v599
      %v661 = vpop.permute.xlu0 %660
      %664 = vset.pattern.permute.xlu0 0
      %665 = vperm.xlu0 %664, %v600
      %v666 = vpop.permute.xlu0 %665
      %669 = vset.pattern.permute.xlu0 0
      %670 = vperm.xlu0 %669, %v601
      %v671 = vpop.permute.xlu0 %670
      %674 = vset.pattern.permute.xlu0 0
      %675 = vperm.xlu0 %674, %v602
      %v676 = vpop.permute.xlu0 %675
      %679 = vset.pattern.permute.xlu0 0
      %680 = vperm.xlu0 %679, %v603
      %v681 = vpop.permute.xlu0 %680
      %684 = vset.pattern.permute.xlu0 0
      %685 = vperm.xlu0 %684, %v604
      %v686 = vpop.permute.xlu0 %685
      %689 = vset.pattern.permute.xlu0 0
      %690 = vperm.xlu0 %689, %v605
      %v691 = vpop.permute.xlu0 %690
      %694 = vset.pattern.permute.xlu0 0
      %695 = vperm.xlu0 %694, %v606
      %v696 = vpop.permute.xlu0 %695
      %699 = vset.pattern.permute.xlu0 0
      %700 = vperm.xlu0 %699, %v607
      %v701 = vpop.permute.xlu0 %700
      %704 = vset.pattern.permute.xlu0 0
      %705 = vperm.xlu0 %704, %v608
      %v706 = vpop.permute.xlu0 %705
      %709 = vset.pattern.permute.xlu0 0
      %710 = vperm.xlu0 %709, %v609
      %v711 = vpop.permute.xlu0 %710
      %714 = vset.pattern.permute.xlu0 0
      %715 = vperm.xlu0 %714, %v610
      %v716 = vpop.permute.xlu0 %715
      %719 = vset.pattern.permute.xlu0 0
      %720 = vperm.xlu0 %719, %v611
      %v721 = vpop.permute.xlu0 %720
      %724 = vset.pattern.permute.xlu0 0
      %725 = vperm.xlu0 %724, %v612
      %v726 = vpop.permute.xlu0 %725
      %729 = vset.pattern.permute.xlu0 0
      %730 = vperm.xlu0 %729, %v613
      %v731 = vpop.permute.xlu0 %730
      %734 = vset.pattern.permute.xlu0 0
      %735 = vperm.xlu0 %734, %v614
      %v736 = vpop.permute.xlu0 %735
      %739 = vset.pattern.permute.xlu0 0
      %740 = vperm.xlu0 %739, %v615
      %v741 = vpop.permute.xlu0 %740
      %744 = vset.pattern.permute.xlu0 0
      %745 = vperm.xlu0 %744, %v616
      %v746 = vpop.permute.xlu0 %745
      %749 = vset.pattern.permute.xlu0 0
      %750 = vperm.xlu0 %749, %v617
      %v751 = vpop.permute.xlu0 %750
      %754 = vset.pattern.permute.xlu0 0
      %755 = vperm.xlu0 %754, %v618
      %v756 = vpop.permute.xlu0 %755
      %759 = vset.pattern.permute.xlu0 0
      %760 = vperm.xlu0 %759, %v619
      %v761 = vpop.permute.xlu0 %760
      %764 = vset.pattern.permute.xlu0 0
      %765 = vperm.xlu0 %764, %v620
      %v766 = vpop.permute.xlu0 %765
      %769 = vset.pattern.permute.xlu0 0
      %770 = vperm.xlu0 %769, %v621
      %v771 = vpop.permute.xlu0 %770
      %774 = vset.pattern.permute.xlu0 0
      %775 = vperm.xlu0 %774, %v622
      %v776 = vpop.permute.xlu0 %775
      %779 = vset.pattern.permute.xlu0 0
      %780 = vperm.xlu0 %779, %v623
      %v781 = vpop.permute.xlu0 %780
      %784 = vset.pattern.permute.xlu0 0
      %785 = vperm.xlu0 %784, %v624
      %v786 = vpop.permute.xlu0 %785
      %789 = vset.pattern.permute.xlu0 0
      %790 = vperm.xlu0 %789, %v625
      %v791 = vpop.permute.xlu0 %790
      %794 = vset.pattern.permute.xlu0 0
      %795 = vperm.xlu0 %794, %v626
      %v796 = vpop.permute.xlu0 %795
      %799 = vset.pattern.permute.xlu0 0
      %800 = vperm.xlu0 %799, %v627
      %v801 = vpop.permute.xlu0 %800
      %804 = vset.pattern.permute.xlu0 0
      %805 = vperm.xlu0 %804, %v628
      %v806 = vpop.permute.xlu0 %805
      %809 = vset.pattern.permute.xlu0 0
      %810 = vperm.xlu0 %809, %v629
      %v811 = vpop.permute.xlu0 %810
      %814 = vset.pattern.permute.xlu0 0
      %815 = vperm.xlu0 %814, %v630
      %v816 = vpop.permute.xlu0 %815
      %819 = vset.pattern.permute.xlu0 0
      %820 = vperm.xlu0 %819, %v631
      %v821 = vpop.permute.xlu0 %820
      %824 = vset.pattern.permute.xlu0 0
      %825 = vperm.xlu0 %824, %v632
      %v826 = vpop.permute.xlu0 %825
      %829 = vset.pattern.permute.xlu0 0
      %830 = vperm.xlu0 %829, %v633
      %v831 = vpop.permute.xlu0 %830
      %834 = vset.pattern.permute.xlu0 0
      %835 = vperm.xlu0 %834, %v634
      %v836 = vpop.permute.xlu0 %835
      %839 = vset.pattern.permute.xlu0 0
      %840 = vperm.xlu0 %839, %v635
      %v841 = vpop.permute.xlu0 %840
      %844 = vset.pattern.permute.xlu0 0
      %845 = vperm.xlu0 %844, %v636
      %v846 = vpop.permute.xlu0 %845
      %849 = vset.pattern.permute.xlu0 0
      %850 = vperm.xlu0 %849, %v637
      %v851 = vpop.permute.xlu0 %850
      %854 = vset.pattern.permute.xlu0 0
      %855 = vperm.xlu0 %854, %v638
      %v856 = vpop.permute.xlu0 %855
      %859 = vset.pattern.permute.xlu0 0
      %860 = vperm.xlu0 %859, %v639
      %v861 = vpop.permute.xlu0 %860
      %864 = vset.pattern.permute.xlu0 0
      %865 = vperm.xlu0 %864, %v640
      %v866 = vpop.permute.xlu0 %865
      %869 = vset.pattern.permute.xlu0 0
      %870 = vperm.xlu0 %869, %v641
      %v871 = vpop.permute.xlu0 %870
      %874 = vset.pattern.permute.xlu0 0
      %875 = vperm.xlu0 %874, %v642
      %v876 = vpop.permute.xlu0 %875
      %879 = vset.pattern.permute.xlu0 0
      %880 = vperm.xlu0 %879, %v643
      %v881 = vpop.permute.xlu0 %880
      %884 = vset.pattern.permute.xlu0 0
      %885 = vperm.xlu0 %884, %v644
      %v886 = vpop.permute.xlu0 %885
      %889 = vset.pattern.permute.xlu0 0
      %890 = vperm.xlu0 %889, %v645
      %v891 = vpop.permute.xlu0 %890
      %894 = vset.pattern.permute.xlu0 0
      %895 = vperm.xlu0 %894, %v646
      %v896 = vpop.permute.xlu0 %895
      %899 = vset.pattern.permute.xlu0 0
      %900 = vperm.xlu0 %899, %v647
      %v901 = vpop.permute.xlu0 %900
      %v903 = vmul.f32 %v546, %v651
      %v904 = vmul.f32 %v547, %v656
      %v905 = vmul.f32 %v548, %v661
      %v906 = vmul.f32 %v549, %v666
      %v907 = vmul.f32 %v550, %v671
      %v908 = vmul.f32 %v551, %v676
      %v909 = vmul.f32 %v552, %v681
      %v910 = vmul.f32 %v553, %v686
      %v911 = vmul.f32 %v554, %v691
      %v912 = vmul.f32 %v555, %v696
      %v913 = vmul.f32 %v556, %v701
      %v914 = vmul.f32 %v557, %v706
      %v915 = vmul.f32 %v558, %v711
      %v916 = vmul.f32 %v559, %v716
      %v917 = vmul.f32 %v560, %v721
      %v918 = vmul.f32 %v561, %v726
      %v919 = vmul.f32 %v562, %v731
      %v920 = vmul.f32 %v563, %v736
      %v921 = vmul.f32 %v564, %v741
      %v922 = vmul.f32 %v565, %v746
      %v923 = vmul.f32 %v566, %v751
      %v924 = vmul.f32 %v567, %v756
      %v925 = vmul.f32 %v568, %v761
      %v926 = vmul.f32 %v569, %v766
      %v927 = vmul.f32 %v570, %v771
      %v928 = vmul.f32 %v571, %v776
      %v929 = vmul.f32 %v572, %v781
      %v930 = vmul.f32 %v573, %v786
      %v931 = vmul.f32 %v574, %v791
      %v932 = vmul.f32 %v575, %v796
      %v933 = vmul.f32 %v576, %v801
      %v934 = vmul.f32 %v577, %v806
      %v935 = vmul.f32 %v578, %v811
      %v936 = vmul.f32 %v579, %v816
      %v937 = vmul.f32 %v580, %v821
      %v938 = vmul.f32 %v581, %v826
      %v939 = vmul.f32 %v582, %v831
      %v940 = vmul.f32 %v583, %v836
      %v941 = vmul.f32 %v584, %v841
      %v942 = vmul.f32 %v585, %v846
      %v943 = vmul.f32 %v586, %v851
      %v944 = vmul.f32 %v587, %v856
      %v945 = vmul.f32 %v588, %v861
      %v946 = vmul.f32 %v589, %v866
      %v947 = vmul.f32 %v590, %v871
      %v948 = vmul.f32 %v591, %v876
      %v949 = vmul.f32 %v592, %v881
      %v950 = vmul.f32 %v593, %v886
      %v951 = vmul.f32 %v594, %v891
      %v952 = vmul.f32 %v595, %v896
      %v953 = vmul.f32 %v596, %v901
      %v954 = vpack.c.bf16 %v903, %v903
      %v955 = vpack.c.bf16 %v904, %v904
      %v956 = vpack.c.bf16 %v905, %v905
      %v957 = vpack.c.bf16 %v906, %v906
      %v958 = vpack.c.bf16 %v907, %v907
      %v959 = vpack.c.bf16 %v908, %v908
      %v960 = vpack.c.bf16 %v909, %v909
      %v961 = vpack.c.bf16 %v910, %v910
      %v962 = vpack.c.bf16 %v911, %v911
      %v963 = vpack.c.bf16 %v912, %v912
      %v964 = vpack.c.bf16 %v913, %v913
      %v965 = vpack.c.bf16 %v914, %v914
      %v966 = vpack.c.bf16 %v915, %v915
      %v967 = vpack.c.bf16 %v916, %v916
      %v968 = vpack.c.bf16 %v917, %v917
      %v969 = vpack.c.bf16 %v918, %v918
      %v970 = vpack.c.bf16 %v919, %v919
      %v971 = vpack.c.bf16 %v920, %v920
      %v972 = vpack.c.bf16 %v921, %v921
      %v973 = vpack.c.bf16 %v922, %v922
      %v974 = vpack.c.bf16 %v923, %v923
      %v975 = vpack.c.bf16 %v924, %v924
      %v976 = vpack.c.bf16 %v925, %v925
      %v977 = vpack.c.bf16 %v926, %v926
      %v978 = vpack.c.bf16 %v927, %v927
      %v979 = vpack.c.bf16 %v928, %v928
      %v980 = vpack.c.bf16 %v929, %v929
      %v981 = vpack.c.bf16 %v930, %v930
      %v982 = vpack.c.bf16 %v931, %v931
      %v983 = vpack.c.bf16 %v932, %v932
      %v984 = vpack.c.bf16 %v933, %v933
      %v985 = vpack.c.bf16 %v934, %v934
      %v986 = vpack.c.bf16 %v935, %v935
      %v987 = vpack.c.bf16 %v936, %v936
      %v988 = vpack.c.bf16 %v937, %v937
      %v989 = vpack.c.bf16 %v938, %v938
      %v990 = vpack.c.bf16 %v939, %v939
      %v991 = vpack.c.bf16 %v940, %v940
      %v992 = vpack.c.bf16 %v941, %v941
      %v993 = vpack.c.bf16 %v942, %v942
      %v994 = vpack.c.bf16 %v943, %v943
      %v995 = vpack.c.bf16 %v944, %v944
      %v996 = vpack.c.bf16 %v945, %v945
      %v997 = vpack.c.bf16 %v946, %v946
      %v998 = vpack.c.bf16 %v947, %v947
      %v999 = vpack.c.bf16 %v948, %v948
      %v1000 = vpack.c.bf16 %v949, %v949
      %v1001 = vpack.c.bf16 %v950, %v950
      %v1002 = vpack.c.bf16 %v951, %v951
      %v1003 = vpack.c.bf16 %v952, %v952
      %v1004 = vpack.c.bf16 %v953, %v953
      %v1005 = vld [vmem:[%s4] sm:$0xf]
      %v1006 = vld [vmem:[%s4 + $0x4] sm:$0xf]
      %v1007 = vld [vmem:[%s4 + $0x8] sm:$0xf]
      %v1008 = vld [vmem:[%s4 + $0xc] sm:$0xf]
      %v1009 = vld [vmem:[%s4 + $0x10] sm:$0xf]
      %v1010 = vld [vmem:[%s4 + $0x14] sm:$0xf]
      %v1011 = vld [vmem:[%s4 + $0x18] sm:$0xf]
      %v1012 = vld [vmem:[%s4 + $0x1c] sm:$0xf]
      %v1013 = vld [vmem:[%s4 + $0x20] sm:$0xf]
      %v1014 = vld [vmem:[%s4 + $0x24] sm:$0xf]
      %v1015 = vld [vmem:[%s4 + $0x28] sm:$0xf]
      %v1016 = vld [vmem:[%s4 + $0x2c] sm:$0xf]
      %v1017 = vld [vmem:[%s4 + $0x30] sm:$0xf]
      %v1018 = vld [vmem:[%s4 + $0x34] sm:$0xf]
      %v1019 = vld [vmem:[%s4 + $0x38] sm:$0xf]
      %v1020 = vld [vmem:[%s4 + $0x3c] sm:$0xf]
      %s1021 = scalar_lea.vmem %s4, 64
      %v1022 = vld [vmem:[%s1021] sm:$0xf]
      %v1023 = vld [vmem:[%s1021 + $0x4] sm:$0xf]
      %v1024 = vld [vmem:[%s1021 + $0x8] sm:$0xf]
      %v1025 = vld [vmem:[%s1021 + $0xc] sm:$0xf]
      %v1026 = vld [vmem:[%s1021 + $0x10] sm:$0xf]
      %v1027 = vld [vmem:[%s1021 + $0x14] sm:$0xf]
      %v1028 = vld [vmem:[%s1021 + $0x18] sm:$0xf]
      %v1029 = vld [vmem:[%s1021 + $0x1c] sm:$0xf]
      %v1030 = vld [vmem:[%s1021 + $0x20] sm:$0xf]
      %v1031 = vld [vmem:[%s1021 + $0x24] sm:$0xf]
      %v1032 = vld [vmem:[%s1021 + $0x28] sm:$0xf]
      %v1033 = vld [vmem:[%s1021 + $0x2c] sm:$0xf]
      %v1034 = vld [vmem:[%s1021 + $0x30] sm:$0xf]
      %v1035 = vld [vmem:[%s1021 + $0x34] sm:$0xf]
      %v1036 = vld [vmem:[%s1021 + $0x38] sm:$0xf]
      %v1037 = vld [vmem:[%s1021 + $0x3c] sm:$0xf]
      %v1046 = vunpack.c.l.b16 %v972
      %v1047 = vunpack.c.l.b16 %v973
      %v1048 = vunpack.c.l.b16 %v974
      %v1049 = vunpack.c.l.b16 %v975
      %v1050 = vunpack.c.l.b16 %v976
      %v1051 = vunpack.c.l.b16 %v977
      %v1052 = vunpack.c.l.b16 %v978
      %v1053 = vunpack.c.l.b16 %v979
      %v1054 = vpack.c.b16 %v1047, %v1046
      %v1055 = vpack.c.b16 %v1049, %v1048
      %v1056 = vpack.c.b16 %v1051, %v1050
      %v1057 = vpack.c.b16 %v1053, %v1052
      %v1078 = vunpack.c.l.b16 %v1022
      %v1079 = vunpack.c.l.b16 %v1023
      %v1080 = vunpack.c.l.b16 %v1024
      %v1081 = vunpack.c.l.b16 %v1025
      %v1082 = vunpack.c.l.b16 %v1026
      %v1083 = vunpack.c.l.b16 %v1027
      %v1084 = vunpack.c.l.b16 %v1028
      %v1085 = vunpack.c.l.b16 %v1029
      %v1086 = vunpack.c.l.b16 %v1030
      %v1087 = vunpack.c.l.b16 %v1031
      %v1088 = vunpack.c.l.b16 %v1032
      %v1089 = vunpack.c.l.b16 %v1033
      %v1090 = vunpack.c.l.b16 %v1034
      %v1091 = vunpack.c.l.b16 %v1035
      %v1092 = vunpack.c.l.b16 %v1036
      %v1093 = vunpack.c.l.b16 %v1037
      %v1094 = vpack.c.b16 %v1079, %v1078
      %v1095 = vpack.c.b16 %v1081, %v1080
      %v1096 = vpack.c.b16 %v1083, %v1082
      %v1097 = vpack.c.b16 %v1085, %v1084
      %v1098 = vpack.c.b16 %v1087, %v1086
      %v1099 = vpack.c.b16 %v1089, %v1088
      %v1100 = vpack.c.b16 %v1091, %v1090
      %v1101 = vpack.c.b16 %v1093, %v1092
      %1110 = vmatpush.bf16.msra.mxu0 %v1101
      %1111 = vmatpush.bf16.msra.mxu0 %v1100
      %1112 = vmatpush.bf16.msra.mxu0 %v1099
      %1113 = vmatpush.bf16.msra.mxu0 %v1098
      %1114 = vmatpush.bf16.msra.mxu0 %v1097
      %1115 = vmatpush.bf16.msra.mxu0 %v1096
      %1116 = vmatpush.bf16.msra.mxu0 %v1095
      %1117 = vmatpush.bf16.msra.mxu0 %v1094
      %1118 = vmatmul.bf16.gmra.mxu0 %v1054
      %v1119 = vpop.f32.mrf.mxu0
      %v1120 = vadd.f32 0.0, %v1119
      %v1121 = vpop.f32.mrf.mxu0
      %v1122 = vadd.f32 0.0, %v1121
      %1123 = vmatmul.bf16.gmra.mxu0 %v1055
      %v1124 = vpop.f32.mrf.mxu0
      %v1125 = vadd.f32 0.0, %v1124
      %v1126 = vpop.f32.mrf.mxu0
      %v1127 = vadd.f32 0.0, %v1126
      %1128 = vmatmul.bf16.gmra.mxu0 %v1056
      %v1129 = vpop.f32.mrf.mxu0
      %v1130 = vadd.f32 0.0, %v1129
      %v1131 = vpop.f32.mrf.mxu0
      %v1132 = vadd.f32 0.0, %v1131
      %1133 = vmatmul.bf16.gmra.mxu0 %v1057
      %v1134 = vpop.f32.mrf.mxu0
      %v1135 = vadd.f32 0.0, %v1134
      %v1136 = vpop.f32.mrf.mxu0
      %v1137 = vadd.f32 0.0, %v1136
      %1138 = vdwg.mxu0
      %v1147 = vunpack.c.l.b16 %v954
      %v1148 = vunpack.c.l.b16 %v956
      %v1149 = vunpack.c.l.b16 %v958
      %v1150 = vunpack.c.l.b16 %v960
      %v1151 = vunpack.c.l.b16 %v962
      %v1152 = vunpack.c.l.b16 %v964
      %v1153 = vunpack.c.l.b16 %v966
      %v1154 = vunpack.c.l.b16 %v968
      %v1155 = vpack.c.b16 %v1148, %v1147
      %v1156 = vpack.c.b16 %v1150, %v1149
      %v1157 = vpack.c.b16 %v1152, %v1151
      %v1158 = vpack.c.b16 %v1154, %v1153
      %v1179 = vunpack.c.l.b16 %v1005
      %v1180 = vunpack.c.l.b16 %v1006
      %v1181 = vunpack.c.l.b16 %v1007
      %v1182 = vunpack.c.l.b16 %v1008
      %v1183 = vunpack.c.l.b16 %v1009
      %v1184 = vunpack.c.l.b16 %v1010
      %v1185 = vunpack.c.l.b16 %v1011
      %v1186 = vunpack.c.l.b16 %v1012
      %v1187 = vunpack.c.l.b16 %v1013
      %v1188 = vunpack.c.l.b16 %v1014
      %v1189 = vunpack.c.l.b16 %v1015
      %v1190 = vunpack.c.l.b16 %v1016
      %v1191 = vunpack.c.l.b16 %v1017
      %v1192 = vunpack.c.l.b16 %v1018
      %v1193 = vunpack.c.l.b16 %v1019
      %v1194 = vunpack.c.l.b16 %v1020
      %v1195 = vpack.c.b16 %v1180, %v1179
      %v1196 = vpack.c.b16 %v1182, %v1181
      %v1197 = vpack.c.b16 %v1184, %v1183
      %v1198 = vpack.c.b16 %v1186, %v1185
      %v1199 = vpack.c.b16 %v1188, %v1187
      %v1200 = vpack.c.b16 %v1190, %v1189
      %v1201 = vpack.c.b16 %v1192, %v1191
      %v1202 = vpack.c.b16 %v1194, %v1193
      %1211 = vmatpush.bf16.msra.mxu0 %v1202
      %1212 = vmatpush.bf16.msra.mxu0 %v1201
      %1213 = vmatpush.bf16.msra.mxu0 %v1200
      %1214 = vmatpush.bf16.msra.mxu0 %v1199
      %1215 = vmatpush.bf16.msra.mxu0 %v1198
      %1216 = vmatpush.bf16.msra.mxu0 %v1197
      %1217 = vmatpush.bf16.msra.mxu0 %v1196
      %1218 = vmatpush.bf16.msra.mxu0 %v1195
      %1219 = vmatmul.bf16.gmra.mxu0 %v1155
      %v1220 = vpop.f32.mrf.mxu0
      %v1221 = vadd.f32 %v1120, %v1220
      %v1222 = vpop.f32.mrf.mxu0
      %v1223 = vadd.f32 %v1122, %v1222
      %1224 = vmatmul.bf16.gmra.mxu0 %v1156
      %v1225 = vpop.f32.mrf.mxu0
      %v1226 = vadd.f32 %v1125, %v1225
      %v1227 = vpop.f32.mrf.mxu0
      %v1228 = vadd.f32 %v1127, %v1227
      %1229 = vmatmul.bf16.gmra.mxu0 %v1157
      %v1230 = vpop.f32.mrf.mxu0
      %v1231 = vadd.f32 %v1130, %v1230
      %v1232 = vpop.f32.mrf.mxu0
      %v1233 = vadd.f32 %v1132, %v1232
      %1234 = vmatmul.bf16.gmra.mxu0 %v1158
      %v1235 = vpop.f32.mrf.mxu0
      %v1236 = vadd.f32 %v1135, %v1235
      %v1237 = vpop.f32.mrf.mxu0
      %v1238 = vadd.f32 %v1137, %v1237
      %1239 = vdwg.mxu0
      %vm1240 = vsmask.f32 3328
      %vm1241 = vsmask.f32 7440
      %vm1242 = vmor %vm1240, %vm1241
      %v1244 = vshrl.u32 %v954, 16
      %v1246 = vrot.slane %v1244, 4
      %v1247 = vshll.u32 %v954, 16
      %v1249 = vrot.slane %v1247, 5
      %v1250 = vor.u32 %v1246, %v1249
      %v1251 = vrot.slane %v1250, 4
      %v1253 = vshll.u32 %v955, 16
      %v1255 = vrot.slane %v1253, 5
      %v1256 = vsel %vm1242, %v1251, %v1255
      %v1258 = vshrl.u32 %v956, 16
      %v1260 = vrot.slane %v1258, 4
      %v1261 = vshll.u32 %v956, 16
      %v1263 = vrot.slane %v1261, 5
      %v1264 = vor.u32 %v1260, %v1263
      %v1265 = vrot.slane %v1264, 4
      %v1267 = vshll.u32 %v957, 16
      %v1269 = vrot.slane %v1267, 5
      %v1270 = vsel %vm1242, %v1265, %v1269
      %v1272 = vshrl.u32 %v958, 16
      %v1274 = vrot.slane %v1272, 4
      %v1275 = vshll.u32 %v958, 16
      %v1277 = vrot.slane %v1275, 5
      %v1278 = vor.u32 %v1274, %v1277
      %v1279 = vrot.slane %v1278, 4
      %v1281 = vshll.u32 %v959, 16
      %v1283 = vrot.slane %v1281, 5
      %v1284 = vsel %vm1242, %v1279, %v1283
      %v1286 = vshrl.u32 %v960, 16
      %v1288 = vrot.slane %v1286, 4
      %v1289 = vshll.u32 %v960, 16
      %v1291 = vrot.slane %v1289, 5
      %v1292 = vor.u32 %v1288, %v1291
      %v1293 = vrot.slane %v1292, 4
      %v1295 = vshll.u32 %v961, 16
      %v1297 = vrot.slane %v1295, 5
      %v1298 = vsel %vm1242, %v1293, %v1297
      %v1300 = vshrl.u32 %v962, 16
      %v1302 = vrot.slane %v1300, 4
      %v1303 = vshll.u32 %v962, 16
      %v1305 = vrot.slane %v1303, 5
      %v1306 = vor.u32 %v1302, %v1305
      %v1307 = vrot.slane %v1306, 4
      %v1309 = vshll.u32 %v963, 16
      %v1311 = vrot.slane %v1309, 5
      %v1312 = vsel %vm1242, %v1307, %v1311
      %v1314 = vshrl.u32 %v964, 16
      %v1316 = vrot.slane %v1314, 4
      %v1317 = vshll.u32 %v964, 16
      %v1319 = vrot.slane %v1317, 5
      %v1320 = vor.u32 %v1316, %v1319
      %v1321 = vrot.slane %v1320, 4
      %v1323 = vshll.u32 %v965, 16
      %v1325 = vrot.slane %v1323, 5
      %v1326 = vsel %vm1242, %v1321, %v1325
      %v1328 = vshrl.u32 %v966, 16
      %v1330 = vrot.slane %v1328, 4
      %v1331 = vshll.u32 %v966, 16
      %v1333 = vrot.slane %v1331, 5
      %v1334 = vor.u32 %v1330, %v1333
      %v1335 = vrot.slane %v1334, 4
      %v1337 = vshll.u32 %v967, 16
      %v1339 = vrot.slane %v1337, 5
      %v1340 = vsel %vm1242, %v1335, %v1339
      %v1342 = vshrl.u32 %v968, 16
      %v1344 = vrot.slane %v1342, 4
      %v1345 = vshll.u32 %v968, 16
      %v1347 = vrot.slane %v1345, 5
      %v1348 = vor.u32 %v1344, %v1347
      %v1349 = vrot.slane %v1348, 4
      %v1351 = vshll.u32 %v969, 16
      %v1353 = vrot.slane %v1351, 5
      %v1354 = vsel %vm1242, %v1349, %v1353
      %s1355 = scalar_lea.vmem %s4, 128
      %v1356 = vld [vmem:[%s1355] sm:$0xf]
      %v1357 = vld [vmem:[%s1355 + $0x4] sm:$0xf]
      %v1358 = vld [vmem:[%s1355 + $0x8] sm:$0xf]
      %v1359 = vld [vmem:[%s1355 + $0xc] sm:$0xf]
      %v1360 = vld [vmem:[%s1355 + $0x10] sm:$0xf]
      %v1361 = vld [vmem:[%s1355 + $0x14] sm:$0xf]
      %v1362 = vld [vmem:[%s1355 + $0x18] sm:$0xf]
      %v1363 = vld [vmem:[%s1355 + $0x1c] sm:$0xf]
      %v1364 = vld [vmem:[%s1355 + $0x20] sm:$0xf]
      %v1365 = vld [vmem:[%s1355 + $0x24] sm:$0xf]
      %v1366 = vld [vmem:[%s1355 + $0x28] sm:$0xf]
      %v1367 = vld [vmem:[%s1355 + $0x2c] sm:$0xf]
      %v1368 = vld [vmem:[%s1355 + $0x30] sm:$0xf]
      %v1369 = vld [vmem:[%s1355 + $0x34] sm:$0xf]
      %v1370 = vld [vmem:[%s1355 + $0x38] sm:$0xf]
      %v1371 = vld [vmem:[%s1355 + $0x3c] sm:$0xf]
      %v1372 = vunpack.c.l.b16 %v1256
      %v1373 = vunpack.c.l.b16 %v1270
      %v1374 = vunpack.c.l.b16 %v1284
      %v1375 = vunpack.c.l.b16 %v1298
      %v1376 = vunpack.c.l.b16 %v1312
      %v1377 = vunpack.c.l.b16 %v1326
      %v1378 = vunpack.c.l.b16 %v1340
      %v1379 = vunpack.c.l.b16 %v1354
      %v1380 = vpack.c.b16 %v1373, %v1372
      %v1381 = vpack.c.b16 %v1375, %v1374
      %v1382 = vpack.c.b16 %v1377, %v1376
      %v1383 = vpack.c.b16 %v1379, %v1378
      %v1404 = vunpack.c.l.b16 %v1356
      %v1405 = vunpack.c.l.b16 %v1357
      %v1406 = vunpack.c.l.b16 %v1358
      %v1407 = vunpack.c.l.b16 %v1359
      %v1408 = vunpack.c.l.b16 %v1360
      %v1409 = vunpack.c.l.b16 %v1361
      %v1410 = vunpack.c.l.b16 %v1362
      %v1411 = vunpack.c.l.b16 %v1363
      %v1412 = vunpack.c.l.b16 %v1364
      %v1413 = vunpack.c.l.b16 %v1365
      %v1414 = vunpack.c.l.b16 %v1366
      %v1415 = vunpack.c.l.b16 %v1367
      %v1416 = vunpack.c.l.b16 %v1368
      %v1417 = vunpack.c.l.b16 %v1369
      %v1418 = vunpack.c.l.b16 %v1370
      %v1419 = vunpack.c.l.b16 %v1371
      %v1420 = vpack.c.b16 %v1405, %v1404
      %v1421 = vpack.c.b16 %v1407, %v1406
      %v1422 = vpack.c.b16 %v1409, %v1408
      %v1423 = vpack.c.b16 %v1411, %v1410
      %v1424 = vpack.c.b16 %v1413, %v1412
      %v1425 = vpack.c.b16 %v1415, %v1414
      %v1426 = vpack.c.b16 %v1417, %v1416
      %v1427 = vpack.c.b16 %v1419, %v1418
      %1436 = vmatpush.bf16.msra.mxu0 %v1427
      %1437 = vmatpush.bf16.msra.mxu0 %v1426
      %1438 = vmatpush.bf16.msra.mxu0 %v1425
      %1439 = vmatpush.bf16.msra.mxu0 %v1424
      %1440 = vmatpush.bf16.msra.mxu0 %v1423
      %1441 = vmatpush.bf16.msra.mxu0 %v1422
      %1442 = vmatpush.bf16.msra.mxu0 %v1421
      %1443 = vmatpush.bf16.msra.mxu0 %v1420
      %1444 = vmatmul.bf16.gmra.mxu0 %v1380
      %v1445 = vpop.f32.mrf.mxu0
      %v1446 = vadd.f32 0.0, %v1445
      %v1447 = vpop.f32.mrf.mxu0
      %v1448 = vadd.f32 0.0, %v1447
      %1449 = vmatmul.bf16.gmra.mxu0 %v1381
      %v1450 = vpop.f32.mrf.mxu0
      %v1451 = vadd.f32 0.0, %v1450
      %v1452 = vpop.f32.mrf.mxu0
      %v1453 = vadd.f32 0.0, %v1452
      %1454 = vmatmul.bf16.gmra.mxu0 %v1382
      %v1455 = vpop.f32.mrf.mxu0
      %v1456 = vadd.f32 0.0, %v1455
      %v1457 = vpop.f32.mrf.mxu0
      %v1458 = vadd.f32 0.0, %v1457
      %1459 = vmatmul.bf16.gmra.mxu0 %v1383
      %v1460 = vpop.f32.mrf.mxu0
      %v1461 = vadd.f32 0.0, %v1460
      %v1462 = vpop.f32.mrf.mxu0
      %v1463 = vadd.f32 0.0, %v1462
      %1464 = vdwg.mxu0
      %v1465 = vadd.f32 %v1221, %v1446
      %v1466 = vadd.f32 %v1223, %v1448
      %v1467 = vadd.f32 %v1226, %v1451
      %v1468 = vadd.f32 %v1228, %v1453
      %v1469 = vadd.f32 %v1231, %v1456
      %v1470 = vadd.f32 %v1233, %v1458
      %v1471 = vadd.f32 %v1236, %v1461
      %v1472 = vadd.f32 %v1238, %v1463
      %s1473 = scalar_lea.vmem %s4, 192
      %v1474 = vld [vmem:[%s1473] sm:$0xf]
      %v1475 = vld [vmem:[%s1473 + $0x4] sm:$0xf]
      %v1476 = vld [vmem:[%s1473 + $0x8] sm:$0xf]
      %v1477 = vld [vmem:[%s1473 + $0xc] sm:$0xf]
      %v1478 = vld [vmem:[%s1473 + $0x10] sm:$0xf]
      %v1479 = vld [vmem:[%s1473 + $0x14] sm:$0xf]
      %v1480 = vld [vmem:[%s1473 + $0x18] sm:$0xf]
      %v1481 = vld [vmem:[%s1473 + $0x1c] sm:$0xf]
      %v1482 = vld [vmem:[%s1473 + $0x20] sm:$0xf]
      %v1483 = vld [vmem:[%s1473 + $0x24] sm:$0xf]
      %v1484 = vld [vmem:[%s1473 + $0x28] sm:$0xf]
      %v1485 = vld [vmem:[%s1473 + $0x2c] sm:$0xf]
      %v1486 = vld [vmem:[%s1473 + $0x30] sm:$0xf]
      %v1487 = vld [vmem:[%s1473 + $0x34] sm:$0xf]
      %v1488 = vld [vmem:[%s1473 + $0x38] sm:$0xf]
      %v1489 = vld [vmem:[%s1473 + $0x3c] sm:$0xf]
      %v1498 = vunpack.c.l.b16 %v981
      %v1499 = vunpack.c.l.b16 %v983
      %v1500 = vunpack.c.l.b16 %v985
      %v1501 = vunpack.c.l.b16 %v987
      %v1502 = vunpack.c.l.b16 %v989
      %v1503 = vunpack.c.l.b16 %v991
      %v1504 = vunpack.c.l.b16 %v993
      %v1505 = vunpack.c.l.b16 %v995
      %v1506 = vpack.c.b16 %v1499, %v1498
      %v1507 = vpack.c.b16 %v1501, %v1500
      %v1508 = vpack.c.b16 %v1503, %v1502
      %v1509 = vpack.c.b16 %v1505, %v1504
      %v1530 = vunpack.c.l.b16 %v1474
      %v1531 = vunpack.c.l.b16 %v1475
      %v1532 = vunpack.c.l.b16 %v1476
      %v1533 = vunpack.c.l.b16 %v1477
      %v1534 = vunpack.c.l.b16 %v1478
      %v1535 = vunpack.c.l.b16 %v1479
      %v1536 = vunpack.c.l.b16 %v1480
      %v1537 = vunpack.c.l.b16 %v1481
      %v1538 = vunpack.c.l.b16 %v1482
      %v1539 = vunpack.c.l.b16 %v1483
      %v1540 = vunpack.c.l.b16 %v1484
      %v1541 = vunpack.c.l.b16 %v1485
      %v1542 = vunpack.c.l.b16 %v1486
      %v1543 = vunpack.c.l.b16 %v1487
      %v1544 = vunpack.c.l.b16 %v1488
      %v1545 = vunpack.c.l.b16 %v1489
      %v1546 = vpack.c.b16 %v1531, %v1530
      %v1547 = vpack.c.b16 %v1533, %v1532
      %v1548 = vpack.c.b16 %v1535, %v1534
      %v1549 = vpack.c.b16 %v1537, %v1536
      %v1550 = vpack.c.b16 %v1539, %v1538
      %v1551 = vpack.c.b16 %v1541, %v1540
      %v1552 = vpack.c.b16 %v1543, %v1542
      %v1553 = vpack.c.b16 %v1545, %v1544
      %1562 = vmatpush.bf16.msra.mxu0 %v1553
      %1563 = vmatpush.bf16.msra.mxu0 %v1552
      %1564 = vmatpush.bf16.msra.mxu0 %v1551
      %1565 = vmatpush.bf16.msra.mxu0 %v1550
      %1566 = vmatpush.bf16.msra.mxu0 %v1549
      %1567 = vmatpush.bf16.msra.mxu0 %v1548
      %1568 = vmatpush.bf16.msra.mxu0 %v1547
      %1569 = vmatpush.bf16.msra.mxu0 %v1546
      %1570 = vmatmul.bf16.gmra.mxu0 %v1506
      %v1571 = vpop.f32.mrf.mxu0
      %v1572 = vadd.f32 0.0, %v1571
      %v1573 = vpop.f32.mrf.mxu0
      %v1574 = vadd.f32 0.0, %v1573
      %1575 = vmatmul.bf16.gmra.mxu0 %v1507
      %v1576 = vpop.f32.mrf.mxu0
      %v1577 = vadd.f32 0.0, %v1576
      %v1578 = vpop.f32.mrf.mxu0
      %v1579 = vadd.f32 0.0, %v1578
      %1580 = vmatmul.bf16.gmra.mxu0 %v1508
      %v1581 = vpop.f32.mrf.mxu0
      %v1582 = vadd.f32 0.0, %v1581
      %v1583 = vpop.f32.mrf.mxu0
      %v1584 = vadd.f32 0.0, %v1583
      %1585 = vmatmul.bf16.gmra.mxu0 %v1509
      %v1586 = vpop.f32.mrf.mxu0
      %v1587 = vadd.f32 0.0, %v1586
      %v1588 = vpop.f32.mrf.mxu0
      %v1589 = vadd.f32 0.0, %v1588
      %1590 = vdwg.mxu0
      %v1591 = vadd.f32 %v1465, %v1572
      %v1592 = vadd.f32 %v1466, %v1574
      %v1593 = vadd.f32 %v1467, %v1577
      %v1594 = vadd.f32 %v1468, %v1579
      %v1595 = vadd.f32 %v1469, %v1582
      %v1596 = vadd.f32 %v1470, %v1584
      %v1597 = vadd.f32 %v1471, %v1587
      %v1598 = vadd.f32 %v1472, %v1589
      %s1599 = scalar_lea.vmem %s4, 256
      %v1600 = vld [vmem:[%s1599] sm:$0xf]
      %v1601 = vld [vmem:[%s1599 + $0x4] sm:$0xf]
      %v1602 = vld [vmem:[%s1599 + $0x8] sm:$0xf]
      %v1603 = vld [vmem:[%s1599 + $0xc] sm:$0xf]
      %v1604 = vld [vmem:[%s1599 + $0x10] sm:$0xf]
      %v1605 = vld [vmem:[%s1599 + $0x14] sm:$0xf]
      %v1606 = vld [vmem:[%s1599 + $0x18] sm:$0xf]
      %v1607 = vld [vmem:[%s1599 + $0x1c] sm:$0xf]
      %v1608 = vld [vmem:[%s1599 + $0x20] sm:$0xf]
      %v1609 = vld [vmem:[%s1599 + $0x24] sm:$0xf]
      %v1610 = vld [vmem:[%s1599 + $0x28] sm:$0xf]
      %v1611 = vld [vmem:[%s1599 + $0x2c] sm:$0xf]
      %v1612 = vld [vmem:[%s1599 + $0x30] sm:$0xf]
      %v1613 = vld [vmem:[%s1599 + $0x34] sm:$0xf]
      %v1614 = vld [vmem:[%s1599 + $0x38] sm:$0xf]
      %v1615 = vld [vmem:[%s1599 + $0x3c] sm:$0xf]
      %v1624 = vunpack.c.l.b16 %v997
      %v1625 = vunpack.c.l.b16 %v998
      %v1626 = vunpack.c.l.b16 %v999
      %v1627 = vunpack.c.l.b16 %v1000
      %v1628 = vunpack.c.l.b16 %v1001
      %v1629 = vunpack.c.l.b16 %v1002
      %v1630 = vunpack.c.l.b16 %v1003
      %v1631 = vunpack.c.l.b16 %v1004
      %v1632 = vpack.c.b16 %v1625, %v1624
      %v1633 = vpack.c.b16 %v1627, %v1626
      %v1634 = vpack.c.b16 %v1629, %v1628
      %v1635 = vpack.c.b16 %v1631, %v1630
      %v1656 = vunpack.c.l.b16 %v1600
      %v1657 = vunpack.c.l.b16 %v1601
      %v1658 = vunpack.c.l.b16 %v1602
      %v1659 = vunpack.c.l.b16 %v1603
      %v1660 = vunpack.c.l.b16 %v1604
      %v1661 = vunpack.c.l.b16 %v1605
      %v1662 = vunpack.c.l.b16 %v1606
      %v1663 = vunpack.c.l.b16 %v1607
      %v1664 = vunpack.c.l.b16 %v1608
      %v1665 = vunpack.c.l.b16 %v1609
      %v1666 = vunpack.c.l.b16 %v1610
      %v1667 = vunpack.c.l.b16 %v1611
      %v1668 = vunpack.c.l.b16 %v1612
      %v1669 = vunpack.c.l.b16 %v1613
      %v1670 = vunpack.c.l.b16 %v1614
      %v1671 = vunpack.c.l.b16 %v1615
      %v1672 = vpack.c.b16 %v1657, %v1656
      %v1673 = vpack.c.b16 %v1659, %v1658
      %v1674 = vpack.c.b16 %v1661, %v1660
      %v1675 = vpack.c.b16 %v1663, %v1662
      %v1676 = vpack.c.b16 %v1665, %v1664
      %v1677 = vpack.c.b16 %v1667, %v1666
      %v1678 = vpack.c.b16 %v1669, %v1668
      %v1679 = vpack.c.b16 %v1671, %v1670
      %1688 = vmatpush.bf16.msra.mxu0 %v1679
      %1689 = vmatpush.bf16.msra.mxu0 %v1678
      %1690 = vmatpush.bf16.msra.mxu0 %v1677
      %1691 = vmatpush.bf16.msra.mxu0 %v1676
      %1692 = vmatpush.bf16.msra.mxu0 %v1675
      %1693 = vmatpush.bf16.msra.mxu0 %v1674
      %1694 = vmatpush.bf16.msra.mxu0 %v1673
      %1695 = vmatpush.bf16.msra.mxu0 %v1672
      %1696 = vmatmul.bf16.gmra.mxu0 %v1632
      %v1697 = vpop.f32.mrf.mxu0
      %v1698 = vadd.f32 0.0, %v1697
      %v1699 = vpop.f32.mrf.mxu0
      %v1700 = vadd.f32 0.0, %v1699
      %1701 = vmatmul.bf16.gmra.mxu0 %v1633
      %v1702 = vpop.f32.mrf.mxu0
      %v1703 = vadd.f32 0.0, %v1702
      %v1704 = vpop.f32.mrf.mxu0
      %v1705 = vadd.f32 0.0, %v1704
      %1706 = vmatmul.bf16.gmra.mxu0 %v1634
      %v1707 = vpop.f32.mrf.mxu0
      %v1708 = vadd.f32 0.0, %v1707
      %v1709 = vpop.f32.mrf.mxu0
      %v1710 = vadd.f32 0.0, %v1709
      %1711 = vmatmul.bf16.gmra.mxu0 %v1635
      %v1712 = vpop.f32.mrf.mxu0
      %v1713 = vadd.f32 0.0, %v1712
      %v1714 = vpop.f32.mrf.mxu0
      %v1715 = vadd.f32 0.0, %v1714
      %1716 = vdwg.mxu0
      %v1717 = vadd.f32 %v1591, %v1698
      %v1718 = vadd.f32 %v1592, %v1700
      %v1719 = vadd.f32 %v1593, %v1703
      %v1720 = vadd.f32 %v1594, %v1705
      %v1721 = vadd.f32 %v1595, %v1708
      %v1722 = vadd.f32 %v1596, %v1710
      %v1723 = vadd.f32 %v1597, %v1713
      %v1724 = vadd.f32 %v1598, %v1715
      %v1726 = vshrl.u32 %v981, 16
      %v1728 = vrot.slane %v1726, 4
      %v1729 = vshll.u32 %v981, 16
      %v1731 = vrot.slane %v1729, 5
      %v1732 = vor.u32 %v1728, %v1731
      %v1733 = vrot.slane %v1732, 4
      %v1735 = vshll.u32 %v982, 16
      %v1737 = vrot.slane %v1735, 5
      %v1738 = vsel %vm1242, %v1733, %v1737
      %v1740 = vshrl.u32 %v983, 16
      %v1742 = vrot.slane %v1740, 4
      %v1743 = vshll.u32 %v983, 16
      %v1745 = vrot.slane %v1743, 5
      %v1746 = vor.u32 %v1742, %v1745
      %v1747 = vrot.slane %v1746, 4
      %v1749 = vshll.u32 %v984, 16
      %v1751 = vrot.slane %v1749, 5
      %v1752 = vsel %vm1242, %v1747, %v1751
      %v1754 = vshrl.u32 %v985, 16
      %v1756 = vrot.slane %v1754, 4
      %v1757 = vshll.u32 %v985, 16
      %v1759 = vrot.slane %v1757, 5
      %v1760 = vor.u32 %v1756, %v1759
      %v1761 = vrot.slane %v1760, 4
      %v1763 = vshll.u32 %v986, 16
      %v1765 = vrot.slane %v1763, 5
      %v1766 = vsel %vm1242, %v1761, %v1765
      %v1768 = vshrl.u32 %v987, 16
      %v1770 = vrot.slane %v1768, 4
      %v1771 = vshll.u32 %v987, 16
      %v1773 = vrot.slane %v1771, 5
      %v1774 = vor.u32 %v1770, %v1773
      %v1775 = vrot.slane %v1774, 4
      %v1777 = vshll.u32 %v988, 16
      %v1779 = vrot.slane %v1777, 5
      %v1780 = vsel %vm1242, %v1775, %v1779
      %v1782 = vshrl.u32 %v989, 16
      %v1784 = vrot.slane %v1782, 4
      %v1785 = vshll.u32 %v989, 16
      %v1787 = vrot.slane %v1785, 5
      %v1788 = vor.u32 %v1784, %v1787
      %v1789 = vrot.slane %v1788, 4
      %v1791 = vshll.u32 %v990, 16
      %v1793 = vrot.slane %v1791, 5
      %v1794 = vsel %vm1242, %v1789, %v1793
      %v1796 = vshrl.u32 %v991, 16
      %v1798 = vrot.slane %v1796, 4
      %v1799 = vshll.u32 %v991, 16
      %v1801 = vrot.slane %v1799, 5
      %v1802 = vor.u32 %v1798, %v1801
      %v1803 = vrot.slane %v1802, 4
      %v1805 = vshll.u32 %v992, 16
      %v1807 = vrot.slane %v1805, 5
      %v1808 = vsel %vm1242, %v1803, %v1807
      %v1810 = vshrl.u32 %v993, 16
      %v1812 = vrot.slane %v1810, 4
      %v1813 = vshll.u32 %v993, 16
      %v1815 = vrot.slane %v1813, 5
      %v1816 = vor.u32 %v1812, %v1815
      %v1817 = vrot.slane %v1816, 4
      %v1819 = vshll.u32 %v994, 16
      %v1821 = vrot.slane %v1819, 5
      %v1822 = vsel %vm1242, %v1817, %v1821
      %v1824 = vshrl.u32 %v995, 16
      %v1826 = vrot.slane %v1824, 4
      %v1827 = vshll.u32 %v995, 16
      %v1829 = vrot.slane %v1827, 5
      %v1830 = vor.u32 %v1826, %v1829
      %v1831 = vrot.slane %v1830, 4
      %v1833 = vshll.u32 %v996, 16
      %v1835 = vrot.slane %v1833, 5
      %v1836 = vsel %vm1242, %v1831, %v1835
      %s1837 = scalar_lea.vmem %s4, 320
      %v1838 = vld [vmem:[%s1837] sm:$0xf]
      %v1839 = vld [vmem:[%s1837 + $0x4] sm:$0xf]
      %v1840 = vld [vmem:[%s1837 + $0x8] sm:$0xf]
      %v1841 = vld [vmem:[%s1837 + $0xc] sm:$0xf]
      %v1842 = vld [vmem:[%s1837 + $0x10] sm:$0xf]
      %v1843 = vld [vmem:[%s1837 + $0x14] sm:$0xf]
      %v1844 = vld [vmem:[%s1837 + $0x18] sm:$0xf]
      %v1845 = vld [vmem:[%s1837 + $0x1c] sm:$0xf]
      %v1846 = vld [vmem:[%s1837 + $0x20] sm:$0xf]
      %v1847 = vld [vmem:[%s1837 + $0x24] sm:$0xf]
      %v1848 = vld [vmem:[%s1837 + $0x28] sm:$0xf]
      %v1849 = vld [vmem:[%s1837 + $0x2c] sm:$0xf]
      %v1850 = vld [vmem:[%s1837 + $0x30] sm:$0xf]
      %v1851 = vld [vmem:[%s1837 + $0x34] sm:$0xf]
      %v1852 = vld [vmem:[%s1837 + $0x38] sm:$0xf]
      %v1853 = vld [vmem:[%s1837 + $0x3c] sm:$0xf]
      %v1854 = vunpack.c.l.b16 %v1738
      %v1855 = vunpack.c.l.b16 %v1752
      %v1856 = vunpack.c.l.b16 %v1766
      %v1857 = vunpack.c.l.b16 %v1780
      %v1858 = vunpack.c.l.b16 %v1794
      %v1859 = vunpack.c.l.b16 %v1808
      %v1860 = vunpack.c.l.b16 %v1822
      %v1861 = vunpack.c.l.b16 %v1836
      %v1862 = vpack.c.b16 %v1855, %v1854
      %v1863 = vpack.c.b16 %v1857, %v1856
      %v1864 = vpack.c.b16 %v1859, %v1858
      %v1865 = vpack.c.b16 %v1861, %v1860
      %v1886 = vunpack.c.l.b16 %v1838
      %v1887 = vunpack.c.l.b16 %v1839
      %v1888 = vunpack.c.l.b16 %v1840
      %v1889 = vunpack.c.l.b16 %v1841
      %v1890 = vunpack.c.l.b16 %v1842
      %v1891 = vunpack.c.l.b16 %v1843
      %v1892 = vunpack.c.l.b16 %v1844
      %v1893 = vunpack.c.l.b16 %v1845
      %v1894 = vunpack.c.l.b16 %v1846
      %v1895 = vunpack.c.l.b16 %v1847
      %v1896 = vunpack.c.l.b16 %v1848
      %v1897 = vunpack.c.l.b16 %v1849
      %v1898 = vunpack.c.l.b16 %v1850
      %v1899 = vunpack.c.l.b16 %v1851
      %v1900 = vunpack.c.l.b16 %v1852
      %v1901 = vunpack.c.l.b16 %v1853
      %v1902 = vpack.c.b16 %v1887, %v1886
      %v1903 = vpack.c.b16 %v1889, %v1888
      %v1904 = vpack.c.b16 %v1891, %v1890
      %v1905 = vpack.c.b16 %v1893, %v1892
      %v1906 = vpack.c.b16 %v1895, %v1894
      %v1907 = vpack.c.b16 %v1897, %v1896
      %v1908 = vpack.c.b16 %v1899, %v1898
      %v1909 = vpack.c.b16 %v1901, %v1900
      %1918 = vmatpush.bf16.msra.mxu0 %v1909
      %1919 = vmatpush.bf16.msra.mxu0 %v1908
      %1920 = vmatpush.bf16.msra.mxu0 %v1907
      %1921 = vmatpush.bf16.msra.mxu0 %v1906
      %1922 = vmatpush.bf16.msra.mxu0 %v1905
      %1923 = vmatpush.bf16.msra.mxu0 %v1904
      %1924 = vmatpush.bf16.msra.mxu0 %v1903
      %1925 = vmatpush.bf16.msra.mxu0 %v1902
      %1926 = vmatmul.bf16.gmra.mxu0 %v1862
      %v1927 = vpop.f32.mrf.mxu0
      %v1928 = vadd.f32 0.0, %v1927
      %v1929 = vpop.f32.mrf.mxu0
      %v1930 = vadd.f32 0.0, %v1929
      %1931 = vmatmul.bf16.gmra.mxu0 %v1863
      %v1932 = vpop.f32.mrf.mxu0
      %v1933 = vadd.f32 0.0, %v1932
      %v1934 = vpop.f32.mrf.mxu0
      %v1935 = vadd.f32 0.0, %v1934
      %1936 = vmatmul.bf16.gmra.mxu0 %v1864
      %v1937 = vpop.f32.mrf.mxu0
      %v1938 = vadd.f32 0.0, %v1937
      %v1939 = vpop.f32.mrf.mxu0
      %v1940 = vadd.f32 0.0, %v1939
      %1941 = vmatmul.bf16.gmra.mxu0 %v1865
      %v1942 = vpop.f32.mrf.mxu0
      %v1943 = vadd.f32 0.0, %v1942
      %v1944 = vpop.f32.mrf.mxu0
      %v1945 = vadd.f32 0.0, %v1944
      %1946 = vdwg.mxu0
      %v1947 = vadd.f32 %v1717, %v1928
      %v1948 = vadd.f32 %v1718, %v1930
      %v1949 = vadd.f32 %v1719, %v1933
      %v1950 = vadd.f32 %v1720, %v1935
      %v1951 = vadd.f32 %v1721, %v1938
      %v1952 = vadd.f32 %v1722, %v1940
      %v1953 = vadd.f32 %v1723, %v1943
      %v1954 = vadd.f32 %v1724, %v1945
      %s1955 = scalar_lea.vmem %s4, 384
      %v1956 = vld [vmem:[%s1955] sm:$0xf]
      %v1957 = vld [vmem:[%s1955 + $0x4] sm:$0xf]
      %v1958 = vld [vmem:[%s1955 + $0x8] sm:$0xf]
      %v1959 = vld [vmem:[%s1955 + $0xc] sm:$0xf]
      %v1960 = vld [vmem:[%s1955 + $0x10] sm:$0xf]
      %v1961 = vld [vmem:[%s1955 + $0x14] sm:$0xf]
      %v1962 = vld [vmem:[%s1955 + $0x18] sm:$0xf]
      %v1963 = vld [vmem:[%s1955 + $0x1c] sm:$0xf]
      %v1964 = vld [vmem:[%s1955 + $0x20] sm:$0xf]
      %v1965 = vld [vmem:[%s1955 + $0x24] sm:$0xf]
      %v1966 = vld [vmem:[%s1955 + $0x28] sm:$0xf]
      %v1967 = vld [vmem:[%s1955 + $0x2c] sm:$0xf]
      %v1968 = vld [vmem:[%s1955 + $0x30] sm:$0xf]
      %v1969 = vld [vmem:[%s1955 + $0x34] sm:$0xf]
      %v1970 = vld [vmem:[%s1955 + $0x38] sm:$0xf]
      %v1971 = vld [vmem:[%s1955 + $0x3c] sm:$0xf]
      %v1973 = vunpack.c.l.b16 %v970
      %v1974 = vpack.c.b16 %v1149, %v1148
      %v1975 = vpack.c.b16 %v1151, %v1150
      %v1976 = vpack.c.b16 %v1153, %v1152
      %v1977 = vpack.c.b16 %v1973, %v1154
      %v1998 = vunpack.c.l.b16 %v1956
      %v1999 = vunpack.c.l.b16 %v1957
      %v2000 = vunpack.c.l.b16 %v1958
      %v2001 = vunpack.c.l.b16 %v1959
      %v2002 = vunpack.c.l.b16 %v1960
      %v2003 = vunpack.c.l.b16 %v1961
      %v2004 = vunpack.c.l.b16 %v1962
      %v2005 = vunpack.c.l.b16 %v1963
      %v2006 = vunpack.c.l.b16 %v1964
      %v2007 = vunpack.c.l.b16 %v1965
      %v2008 = vunpack.c.l.b16 %v1966
      %v2009 = vunpack.c.l.b16 %v1967
      %v2010 = vunpack.c.l.b16 %v1968
      %v2011 = vunpack.c.l.b16 %v1969
      %v2012 = vunpack.c.l.b16 %v1970
      %v2013 = vunpack.c.l.b16 %v1971
      %v2014 = vpack.c.b16 %v1999, %v1998
      %v2015 = vpack.c.b16 %v2001, %v2000
      %v2016 = vpack.c.b16 %v2003, %v2002
      %v2017 = vpack.c.b16 %v2005, %v2004
      %v2018 = vpack.c.b16 %v2007, %v2006
      %v2019 = vpack.c.b16 %v2009, %v2008
      %v2020 = vpack.c.b16 %v2011, %v2010
      %v2021 = vpack.c.b16 %v2013, %v2012
      %2030 = vmatpush.bf16.msra.mxu0 %v2021
      %2031 = vmatpush.bf16.msra.mxu0 %v2020
      %2032 = vmatpush.bf16.msra.mxu0 %v2019
      %2033 = vmatpush.bf16.msra.mxu0 %v2018
      %2034 = vmatpush.bf16.msra.mxu0 %v2017
      %2035 = vmatpush.bf16.msra.mxu0 %v2016
      %2036 = vmatpush.bf16.msra.mxu0 %v2015
      %2037 = vmatpush.bf16.msra.mxu0 %v2014
      %2038 = vmatmul.bf16.gmra.mxu0 %v1974
      %v2039 = vpop.f32.mrf.mxu0
      %v2040 = vadd.f32 0.0, %v2039
      %v2041 = vpop.f32.mrf.mxu0
      %v2042 = vadd.f32 0.0, %v2041
      %2043 = vmatmul.bf16.gmra.mxu0 %v1975
      %v2044 = vpop.f32.mrf.mxu0
      %v2045 = vadd.f32 0.0, %v2044
      %v2046 = vpop.f32.mrf.mxu0
      %v2047 = vadd.f32 0.0, %v2046
      %2048 = vmatmul.bf16.gmra.mxu0 %v1976
      %v2049 = vpop.f32.mrf.mxu0
      %v2050 = vadd.f32 0.0, %v2049
      %v2051 = vpop.f32.mrf.mxu0
      %v2052 = vadd.f32 0.0, %v2051
      %2053 = vmatmul.bf16.gmra.mxu0 %v1977
      %v2054 = vpop.f32.mrf.mxu0
      %v2055 = vadd.f32 0.0, %v2054
      %v2056 = vpop.f32.mrf.mxu0
      %v2057 = vadd.f32 0.0, %v2056
      %2058 = vdwg.mxu0
      %v2059 = vadd.f32 %v1947, %v2040
      %v2060 = vadd.f32 %v1948, %v2042
      %v2061 = vadd.f32 %v1949, %v2045
      %v2062 = vadd.f32 %v1950, %v2047
      %v2063 = vadd.f32 %v1951, %v2050
      %v2064 = vadd.f32 %v1952, %v2052
      %v2065 = vadd.f32 %v1953, %v2055
      %v2066 = vadd.f32 %v1954, %v2057
      %s2067 = scalar_lea.vmem %s4, 448
      %v2068 = vld [vmem:[%s2067] sm:$0xf]
      %v2069 = vld [vmem:[%s2067 + $0x4] sm:$0xf]
      %v2070 = vld [vmem:[%s2067 + $0x8] sm:$0xf]
      %v2071 = vld [vmem:[%s2067 + $0xc] sm:$0xf]
      %v2072 = vld [vmem:[%s2067 + $0x10] sm:$0xf]
      %v2073 = vld [vmem:[%s2067 + $0x14] sm:$0xf]
      %v2074 = vld [vmem:[%s2067 + $0x18] sm:$0xf]
      %v2075 = vld [vmem:[%s2067 + $0x1c] sm:$0xf]
      %v2076 = vld [vmem:[%s2067 + $0x20] sm:$0xf]
      %v2077 = vld [vmem:[%s2067 + $0x24] sm:$0xf]
      %v2078 = vld [vmem:[%s2067 + $0x28] sm:$0xf]
      %v2079 = vld [vmem:[%s2067 + $0x2c] sm:$0xf]
      %v2080 = vld [vmem:[%s2067 + $0x30] sm:$0xf]
      %v2081 = vld [vmem:[%s2067 + $0x34] sm:$0xf]
      %v2082 = vld [vmem:[%s2067 + $0x38] sm:$0xf]
      %v2083 = vld [vmem:[%s2067 + $0x3c] sm:$0xf]
      %v2085 = vunpack.c.l.b16 %v980
      %v2086 = vpack.c.b16 %v1048, %v1047
      %v2087 = vpack.c.b16 %v1050, %v1049
      %v2088 = vpack.c.b16 %v1052, %v1051
      %v2089 = vpack.c.b16 %v2085, %v1053
      %v2110 = vunpack.c.l.b16 %v2068
      %v2111 = vunpack.c.l.b16 %v2069
      %v2112 = vunpack.c.l.b16 %v2070
      %v2113 = vunpack.c.l.b16 %v2071
      %v2114 = vunpack.c.l.b16 %v2072
      %v2115 = vunpack.c.l.b16 %v2073
      %v2116 = vunpack.c.l.b16 %v2074
      %v2117 = vunpack.c.l.b16 %v2075
      %v2118 = vunpack.c.l.b16 %v2076
      %v2119 = vunpack.c.l.b16 %v2077
      %v2120 = vunpack.c.l.b16 %v2078
      %v2121 = vunpack.c.l.b16 %v2079
      %v2122 = vunpack.c.l.b16 %v2080
      %v2123 = vunpack.c.l.b16 %v2081
      %v2124 = vunpack.c.l.b16 %v2082
      %v2125 = vunpack.c.l.b16 %v2083
      %v2126 = vpack.c.b16 %v2111, %v2110
      %v2127 = vpack.c.b16 %v2113, %v2112
      %v2128 = vpack.c.b16 %v2115, %v2114
      %v2129 = vpack.c.b16 %v2117, %v2116
      %v2130 = vpack.c.b16 %v2119, %v2118
      %v2131 = vpack.c.b16 %v2121, %v2120
      %v2132 = vpack.c.b16 %v2123, %v2122
      %v2133 = vpack.c.b16 %v2125, %v2124
      %2142 = vmatpush.bf16.msra.mxu0 %v2133
      %2143 = vmatpush.bf16.msra.mxu0 %v2132
      %2144 = vmatpush.bf16.msra.mxu0 %v2131
      %2145 = vmatpush.bf16.msra.mxu0 %v2130
      %2146 = vmatpush.bf16.msra.mxu0 %v2129
      %2147 = vmatpush.bf16.msra.mxu0 %v2128
      %2148 = vmatpush.bf16.msra.mxu0 %v2127
      %2149 = vmatpush.bf16.msra.mxu0 %v2126
      %2150 = vmatmul.bf16.gmra.mxu0 %v2086
      %v2151 = vpop.f32.mrf.mxu0
      %v2152 = vadd.f32 0.0, %v2151
      %v2153 = vpop.f32.mrf.mxu0
      %v2154 = vadd.f32 0.0, %v2153
      %2155 = vmatmul.bf16.gmra.mxu0 %v2087
      %v2156 = vpop.f32.mrf.mxu0
      %v2157 = vadd.f32 0.0, %v2156
      %v2158 = vpop.f32.mrf.mxu0
      %v2159 = vadd.f32 0.0, %v2158
      %2160 = vmatmul.bf16.gmra.mxu0 %v2088
      %v2161 = vpop.f32.mrf.mxu0
      %v2162 = vadd.f32 0.0, %v2161
      %v2163 = vpop.f32.mrf.mxu0
      %v2164 = vadd.f32 0.0, %v2163
      %2165 = vmatmul.bf16.gmra.mxu0 %v2089
      %v2166 = vpop.f32.mrf.mxu0
      %v2167 = vadd.f32 0.0, %v2166
      %v2168 = vpop.f32.mrf.mxu0
      %v2169 = vadd.f32 0.0, %v2168
      %2170 = vdwg.mxu0
      %v2171 = vadd.f32 %v2059, %v2152
      %v2172 = vadd.f32 %v2060, %v2154
      %v2173 = vadd.f32 %v2061, %v2157
      %v2174 = vadd.f32 %v2062, %v2159
      %v2175 = vadd.f32 %v2063, %v2162
      %v2176 = vadd.f32 %v2064, %v2164
      %v2177 = vadd.f32 %v2065, %v2167
      %v2178 = vadd.f32 %v2066, %v2169
      %v2180 = vshrl.u32 %v970, 16
      %v2182 = vrot.slane %v2180, 4
      %v2183 = vshll.u32 %v970, 16
      %v2185 = vrot.slane %v2183, 5
      %v2186 = vor.u32 %v2182, %v2185
      %v2187 = vrot.slane %v2186, 4
      %v2189 = vshll.u32 %v971, 16
      %v2191 = vrot.slane %v2189, 5
      %v2192 = vsel %vm1242, %v2187, %v2191
      %s2193 = scalar_lea.vmem %s4, 512
      %v2194 = vld [vmem:[%s2193] sm:$0xf]
      %v2195 = vld [vmem:[%s2193 + $0x4] sm:$0xf]
      %v2196 = vld [vmem:[%s2193 + $0x8] sm:$0xf]
      %v2197 = vld [vmem:[%s2193 + $0xc] sm:$0xf]
      %v2198 = vld [vmem:[%s2193 + $0x10] sm:$0xf]
      %v2199 = vld [vmem:[%s2193 + $0x14] sm:$0xf]
      %v2200 = vld [vmem:[%s2193 + $0x18] sm:$0xf]
      %v2201 = vld [vmem:[%s2193 + $0x1c] sm:$0xf]
      %v2202 = vld [vmem:[%s2193 + $0x20] sm:$0xf]
      %v2203 = vld [vmem:[%s2193 + $0x24] sm:$0xf]
      %v2204 = vld [vmem:[%s2193 + $0x28] sm:$0xf]
      %v2205 = vld [vmem:[%s2193 + $0x2c] sm:$0xf]
      %v2206 = vld [vmem:[%s2193 + $0x30] sm:$0xf]
      %v2207 = vld [vmem:[%s2193 + $0x34] sm:$0xf]
      %v2208 = vld [vmem:[%s2193 + $0x38] sm:$0xf]
      %v2209 = vld [vmem:[%s2193 + $0x3c] sm:$0xf]
      %v2210 = vunpack.c.l.b16 %v2192
      %v2211 = vpack.c.b16 %v1374, %v1373
      %v2212 = vpack.c.b16 %v1376, %v1375
      %v2213 = vpack.c.b16 %v1378, %v1377
      %v2214 = vpack.c.b16 %v2210, %v1379
      %v2235 = vunpack.c.l.b16 %v2194
      %v2236 = vunpack.c.l.b16 %v2195
      %v2237 = vunpack.c.l.b16 %v2196
      %v2238 = vunpack.c.l.b16 %v2197
      %v2239 = vunpack.c.l.b16 %v2198
      %v2240 = vunpack.c.l.b16 %v2199
      %v2241 = vunpack.c.l.b16 %v2200
      %v2242 = vunpack.c.l.b16 %v2201
      %v2243 = vunpack.c.l.b16 %v2202
      %v2244 = vunpack.c.l.b16 %v2203
      %v2245 = vunpack.c.l.b16 %v2204
      %v2246 = vunpack.c.l.b16 %v2205
      %v2247 = vunpack.c.l.b16 %v2206
      %v2248 = vunpack.c.l.b16 %v2207
      %v2249 = vunpack.c.l.b16 %v2208
      %v2250 = vunpack.c.l.b16 %v2209
      %v2251 = vpack.c.b16 %v2236, %v2235
      %v2252 = vpack.c.b16 %v2238, %v2237
      %v2253 = vpack.c.b16 %v2240, %v2239
      %v2254 = vpack.c.b16 %v2242, %v2241
      %v2255 = vpack.c.b16 %v2244, %v2243
      %v2256 = vpack.c.b16 %v2246, %v2245
      %v2257 = vpack.c.b16 %v2248, %v2247
      %v2258 = vpack.c.b16 %v2250, %v2249
      %2267 = vmatpush.bf16.msra.mxu0 %v2258
      %2268 = vmatpush.bf16.msra.mxu0 %v2257
      %2269 = vmatpush.bf16.msra.mxu0 %v2256
      %2270 = vmatpush.bf16.msra.mxu0 %v2255
      %2271 = vmatpush.bf16.msra.mxu0 %v2254
      %2272 = vmatpush.bf16.msra.mxu0 %v2253
      %2273 = vmatpush.bf16.msra.mxu0 %v2252
      %2274 = vmatpush.bf16.msra.mxu0 %v2251
      %2275 = vmatmul.bf16.gmra.mxu0 %v2211
      %v2276 = vpop.f32.mrf.mxu0
      %v2277 = vadd.f32 0.0, %v2276
      %v2278 = vpop.f32.mrf.mxu0
      %v2279 = vadd.f32 0.0, %v2278
      %2280 = vmatmul.bf16.gmra.mxu0 %v2212
      %v2281 = vpop.f32.mrf.mxu0
      %v2282 = vadd.f32 0.0, %v2281
      %v2283 = vpop.f32.mrf.mxu0
      %v2284 = vadd.f32 0.0, %v2283
      %2285 = vmatmul.bf16.gmra.mxu0 %v2213
      %v2286 = vpop.f32.mrf.mxu0
      %v2287 = vadd.f32 0.0, %v2286
      %v2288 = vpop.f32.mrf.mxu0
      %v2289 = vadd.f32 0.0, %v2288
      %2290 = vmatmul.bf16.gmra.mxu0 %v2214
      %v2291 = vpop.f32.mrf.mxu0
      %v2292 = vadd.f32 0.0, %v2291
      %v2293 = vpop.f32.mrf.mxu0
      %v2294 = vadd.f32 0.0, %v2293
      %2295 = vdwg.mxu0
      %v2296 = vadd.f32 %v2171, %v2277
      %v2297 = vadd.f32 %v2172, %v2279
      %v2298 = vadd.f32 %v2173, %v2282
      %v2299 = vadd.f32 %v2174, %v2284
      %v2300 = vadd.f32 %v2175, %v2287
      %v2301 = vadd.f32 %v2176, %v2289
      %v2302 = vadd.f32 %v2177, %v2292
      %v2303 = vadd.f32 %v2178, %v2294
      %v2304 = vld [vmem:[%s6] sm:$0x1]
      %v2306 = vperm.slane %v2304, 0
      %v2308 = vmul.f32 %v2296, %v2306
      %v2309 = vmul.f32 %v2297, %v2306
      %v2310 = vmul.f32 %v2298, %v2306
      %v2311 = vmul.f32 %v2299, %v2306
      %v2312 = vmul.f32 %v2300, %v2306
      %v2313 = vmul.f32 %v2301, %v2306
      %v2314 = vmul.f32 %v2302, %v2306
      %v2315 = vmul.f32 %v2303, %v2306
      %v2316 = vld [vmem:[%s7] sm:$0x1]
      %v2318 = vperm.slane %v2316, 0
      %v2320 = vadd.f32 %v2308, %v2318
      %v2321 = vadd.f32 %v2309, %v2318
      %v2322 = vadd.f32 %v2310, %v2318
      %v2323 = vadd.f32 %v2311, %v2318
      %v2324 = vadd.f32 %v2312, %v2318
      %v2325 = vadd.f32 %v2313, %v2318
      %v2326 = vadd.f32 %v2314, %v2318
      %v2327 = vadd.f32 %v2315, %v2318
      %v2328 = vmax.f32 %v2320, 0.0
      %v2329 = vmax.f32 %v2321, 0.0
      %v2330 = vmax.f32 %v2322, 0.0
      %v2331 = vmax.f32 %v2323, 0.0
      %v2332 = vmax.f32 %v2324, 0.0
      %v2333 = vmax.f32 %v2325, 0.0
      %v2334 = vmax.f32 %v2326, 0.0
      %v2335 = vmax.f32 %v2327, 0.0
      %v2336 = vpack.c.bf16 %v2328, %v2328
      %v2337 = vpack.c.bf16 %v2329, %v2329
      %v2338 = vpack.c.bf16 %v2330, %v2330
      %v2339 = vpack.c.bf16 %v2331, %v2331
      %v2340 = vpack.c.bf16 %v2332, %v2332
      %v2341 = vpack.c.bf16 %v2333, %v2333
      %v2342 = vpack.c.bf16 %v2334, %v2334
      %v2343 = vpack.c.bf16 %v2335, %v2335
      %2344 = vst [vmem:[#allocation2] sm:$0xf] 0
      %2345 = vst [vmem:[#allocation2 + $0x4] sm:$0x1] 0
      %s2346 = scalar_lea.vmem [#allocation2], 72
      %2347 = vst [vmem:[%s2346] sm:$0xf] 0
      %2348 = vst [vmem:[%s2346 + $0x4] sm:$0x1] 0
      %s2349 = scalar_lea.vmem [#allocation2], 8
      %vm2350 = vcmask 1040384
      %vm2351 = vsmask.f32 256
      %vm2352 = vmand %vm2350, %vm2351
      %v2353 = vld [vmem:[%s2349] sm:$0x1]
      %v2354 = vsel %vm2352, 0, %v2353
      %2355 = vst [vmem:[%s2349] sm:$0x1] %v2354
      %v2356 = vld [vmem:[%s2349 + $0x8] sm:$0x1]
      %v2357 = vsel %vm2352, 0, %v2356
      %2358 = vst [vmem:[%s2349 + $0x8] sm:$0x1] %v2357
      %v2359 = vld [vmem:[%s2349 + $0x10] sm:$0x1]
      %v2360 = vsel %vm2352, 0, %v2359
      %2361 = vst [vmem:[%s2349 + $0x10] sm:$0x1] %v2360
      %v2362 = vld [vmem:[%s2349 + $0x18] sm:$0x1]
      %v2363 = vsel %vm2352, 0, %v2362
      %2364 = vst [vmem:[%s2349 + $0x18] sm:$0x1] %v2363
      %v2365 = vld [vmem:[%s2349 + $0x20] sm:$0x1]
      %v2366 = vsel %vm2352, 0, %v2365
      %2367 = vst [vmem:[%s2349 + $0x20] sm:$0x1] %v2366
      %v2368 = vld [vmem:[%s2349 + $0x28] sm:$0x1]
      %v2369 = vsel %vm2352, 0, %v2368
      %2370 = vst [vmem:[%s2349 + $0x28] sm:$0x1] %v2369
      %v2371 = vld [vmem:[%s2349 + $0x30] sm:$0x1]
      %v2372 = vsel %vm2352, 0, %v2371
      %2373 = vst [vmem:[%s2349 + $0x30] sm:$0x1] %v2372
      %v2374 = vld [vmem:[%s2349 + $0x38] sm:$0x1]
      %v2375 = vsel %vm2352, 0, %v2374
      %2376 = vst [vmem:[%s2349 + $0x38] sm:$0x1] %v2375
      %vm2377 = vsmask.f32 7938
      %vm2378 = vmand %vm2350, %vm2377
      %v2379 = vld [vmem:[%s2349 + $0x4] sm:$0x1]
      %v2380 = vsel %vm2378, 0, %v2379
      %2381 = vst [vmem:[%s2349 + $0x4] sm:$0x1] %v2380
      %v2382 = vld [vmem:[%s2349 + $0xc] sm:$0x1]
      %v2383 = vsel %vm2378, 0, %v2382
      %2384 = vst [vmem:[%s2349 + $0xc] sm:$0x1] %v2383
      %v2385 = vld [vmem:[%s2349 + $0x14] sm:$0x1]
      %v2386 = vsel %vm2378, 0, %v2385
      %2387 = vst [vmem:[%s2349 + $0x14] sm:$0x1] %v2386
      %v2388 = vld [vmem:[%s2349 + $0x1c] sm:$0x1]
      %v2389 = vsel %vm2378, 0, %v2388
      %2390 = vst [vmem:[%s2349 + $0x1c] sm:$0x1] %v2389
      %v2391 = vld [vmem:[%s2349 + $0x24] sm:$0x1]
      %v2392 = vsel %vm2378, 0, %v2391
      %2393 = vst [vmem:[%s2349 + $0x24] sm:$0x1] %v2392
      %v2394 = vld [vmem:[%s2349 + $0x2c] sm:$0x1]
      %v2395 = vsel %vm2378, 0, %v2394
      %2396 = vst [vmem:[%s2349 + $0x2c] sm:$0x1] %v2395
      %v2397 = vld [vmem:[%s2349 + $0x34] sm:$0x1]
      %v2398 = vsel %vm2378, 0, %v2397
      %2399 = vst [vmem:[%s2349 + $0x34] sm:$0x1] %v2398
      %v2400 = vld [vmem:[%s2349 + $0x3c] sm:$0x1]
      %v2401 = vsel %vm2378, 0, %v2400
      %2402 = vst [vmem:[%s2349 + $0x3c] sm:$0x1] %v2401
      %v2404 = vshrl.u32 %v2336, 16
      %v2406 = vrot.slane %v2404, 7
      %v2407 = vshll.u32 %v2336, 16
      %v2409 = vor.u32 %v2406, %v2407
      %v2410 = vrot.slane %v2406, 4
      %v2412 = vshrl.u32 %v2337, 16
      %v2414 = vrot.slane %v2412, 7
      %v2415 = vshll.u32 %v2337, 16
      %v2417 = vor.u32 %v2414, %v2415
      %v2418 = vrot.slane %v2414, 4
      %v2420 = vshrl.u32 %v2338, 16
      %v2422 = vrot.slane %v2420, 7
      %v2423 = vshll.u32 %v2338, 16
      %v2425 = vor.u32 %v2422, %v2423
      %v2426 = vrot.slane %v2422, 4
      %v2428 = vshrl.u32 %v2339, 16
      %v2430 = vrot.slane %v2428, 7
      %v2431 = vshll.u32 %v2339, 16
      %v2433 = vor.u32 %v2430, %v2431
      %v2434 = vrot.slane %v2430, 4
      %v2436 = vshrl.u32 %v2340, 16
      %v2438 = vrot.slane %v2436, 7
      %v2439 = vshll.u32 %v2340, 16
      %v2441 = vor.u32 %v2438, %v2439
      %v2442 = vrot.slane %v2438, 4
      %v2444 = vshrl.u32 %v2341, 16
      %v2446 = vrot.slane %v2444, 7
      %v2447 = vshll.u32 %v2341, 16
      %v2449 = vor.u32 %v2446, %v2447
      %v2450 = vrot.slane %v2446, 4
      %v2452 = vshrl.u32 %v2342, 16
      %v2454 = vrot.slane %v2452, 7
      %v2455 = vshll.u32 %v2342, 16
      %v2457 = vor.u32 %v2454, %v2455
      %v2458 = vrot.slane %v2454, 4
      %v2460 = vshrl.u32 %v2343, 16
      %v2462 = vrot.slane %v2460, 7
      %v2463 = vshll.u32 %v2343, 16
      %v2465 = vor.u32 %v2462, %v2463
      %v2466 = vrot.slane %v2462, 4
      %vm2483 = vcmask 1043456
      %vm2484 = vmand %vm2483, %vm2377
      %v2485 = vld [vmem:[%s2349] sm:$0xf]
      %v2486 = vsel %vm2484, %v2409, %v2485
      %2487 = vst [vmem:[%s2349] sm:$0xf] %v2486
      %v2488 = vld [vmem:[%s2349 + $0x4] sm:$0x1]
      %v2489 = vsel %vm2352, %v2410, %v2488
      %2490 = vst [vmem:[%s2349 + $0x4] sm:$0x1] %v2489
      %v2491 = vld [vmem:[%s2349 + $0x8] sm:$0xf]
      %v2492 = vsel %vm2484, %v2417, %v2491
      %2493 = vst [vmem:[%s2349 + $0x8] sm:$0xf] %v2492
      %v2494 = vld [vmem:[%s2349 + $0xc] sm:$0x1]
      %v2495 = vsel %vm2352, %v2418, %v2494
      %2496 = vst [vmem:[%s2349 + $0xc] sm:$0x1] %v2495
      %v2497 = vld [vmem:[%s2349 + $0x10] sm:$0xf]
      %v2498 = vsel %vm2484, %v2425, %v2497
      %2499 = vst [vmem:[%s2349 + $0x10] sm:$0xf] %v2498
      %v2500 = vld [vmem:[%s2349 + $0x14] sm:$0x1]
      %v2501 = vsel %vm2352, %v2426, %v2500
      %2502 = vst [vmem:[%s2349 + $0x14] sm:$0x1] %v2501
      %v2503 = vld [vmem:[%s2349 + $0x18] sm:$0xf]
      %v2504 = vsel %vm2484, %v2433, %v2503
      %2505 = vst [vmem:[%s2349 + $0x18] sm:$0xf] %v2504
      %v2506 = vld [vmem:[%s2349 + $0x1c] sm:$0x1]
      %v2507 = vsel %vm2352, %v2434, %v2506
      %2508 = vst [vmem:[%s2349 + $0x1c] sm:$0x1] %v2507
      %v2509 = vld [vmem:[%s2349 + $0x20] sm:$0xf]
      %v2510 = vsel %vm2484, %v2441, %v2509
      %2511 = vst [vmem:[%s2349 + $0x20] sm:$0xf] %v2510
      %v2512 = vld [vmem:[%s2349 + $0x24] sm:$0x1]
      %v2513 = vsel %vm2352, %v2442, %v2512
      %2514 = vst [vmem:[%s2349 + $0x24] sm:$0x1] %v2513
      %v2515 = vld [vmem:[%s2349 + $0x28] sm:$0xf]
      %v2516 = vsel %vm2484, %v2449, %v2515
      %2517 = vst [vmem:[%s2349 + $0x28] sm:$0xf] %v2516
      %v2518 = vld [vmem:[%s2349 + $0x2c] sm:$0x1]
      %v2519 = vsel %vm2352, %v2450, %v2518
      %2520 = vst [vmem:[%s2349 + $0x2c] sm:$0x1] %v2519
      %v2521 = vld [vmem:[%s2349 + $0x30] sm:$0xf]
      %v2522 = vsel %vm2484, %v2457, %v2521
      %2523 = vst [vmem:[%s2349 + $0x30] sm:$0xf] %v2522
      %v2524 = vld [vmem:[%s2349 + $0x34] sm:$0x1]
      %v2525 = vsel %vm2352, %v2458, %v2524
      %2526 = vst [vmem:[%s2349 + $0x34] sm:$0x1] %v2525
      %v2527 = vld [vmem:[%s2349 + $0x38] sm:$0xf]
      %v2528 = vsel %vm2484, %v2465, %v2527
      %2529 = vst [vmem:[%s2349 + $0x38] sm:$0xf] %v2528
      %v2530 = vld [vmem:[%s2349 + $0x3c] sm:$0x1]
      %v2531 = vsel %vm2352, %v2466, %v2530
      %2532 = vst [vmem:[%s2349 + $0x3c] sm:$0x1] %v2531
      %v2533 = vld [vmem:[%s5] sm:$0xf]
      %v2534 = vld [vmem:[%s5 + $0x4] sm:$0xf]
      %v2535 = vld [vmem:[%s5 + $0x8] sm:$0xf]
      %v2536 = vld [vmem:[%s5 + $0xc] sm:$0xf]
      %v2537 = vld [vmem:[%s5 + $0x10] sm:$0xf]
      %v2538 = vld [vmem:[%s5 + $0x14] sm:$0xf]
      %v2539 = vld [vmem:[%s5 + $0x18] sm:$0xf]
      %v2540 = vld [vmem:[%s5 + $0x1c] sm:$0xf]
      %v2541 = vld [vmem:[%s5 + $0x20] sm:$0xf]
      %v2542 = vld [vmem:[%s5 + $0x24] sm:$0xf]
      %v2543 = vld [vmem:[%s5 + $0x28] sm:$0xf]
      %v2544 = vld [vmem:[%s5 + $0x2c] sm:$0xf]
      %v2545 = vld [vmem:[%s5 + $0x30] sm:$0xf]
      %v2546 = vld [vmem:[%s5 + $0x34] sm:$0xf]
      %v2547 = vld [vmem:[%s5 + $0x38] sm:$0xf]
      %v2548 = vld [vmem:[%s5 + $0x3c] sm:$0xf]
      %v2549 = vld [vmem:[#allocation2] sm:$0xf]
      %v2550 = vld [vmem:[#allocation2 + $0x8] sm:$0xf]
      %v2551 = vld [vmem:[#allocation2 + $0x10] sm:$0xf]
      %v2552 = vld [vmem:[#allocation2 + $0x18] sm:$0xf]
      %v2553 = vld [vmem:[#allocation2 + $0x20] sm:$0xf]
      %v2554 = vld [vmem:[#allocation2 + $0x28] sm:$0xf]
      %v2555 = vld [vmem:[#allocation2 + $0x30] sm:$0xf]
      %v2556 = vld [vmem:[#allocation2 + $0x38] sm:$0xf]
      %v2557 = vld [vmem:[%s8] sm:$0xf]
      %v2558 = vld [vmem:[%s8 + $0x4] sm:$0xf]
      %v2559 = vld [vmem:[%s8 + $0x8] sm:$0xf]
      %v2560 = vld [vmem:[%s8 + $0xc] sm:$0xf]
      %v2561 = vld [vmem:[%s8 + $0x10] sm:$0xf]
      %v2562 = vld [vmem:[%s8 + $0x14] sm:$0xf]
      %v2563 = vld [vmem:[%s8 + $0x18] sm:$0xf]
      %v2564 = vld [vmem:[%s8 + $0x1c] sm:$0xf]
      %v2565 = vld [vmem:[%s8 + $0x20] sm:$0xf]
      %v2566 = vld [vmem:[%s8 + $0x24] sm:$0xf]
      %v2567 = vld [vmem:[%s8 + $0x28] sm:$0xf]
      %v2568 = vld [vmem:[%s8 + $0x2c] sm:$0xf]
      %v2569 = vld [vmem:[%s8 + $0x30] sm:$0xf]
      %v2570 = vld [vmem:[%s8 + $0x34] sm:$0xf]
      %v2571 = vld [vmem:[%s8 + $0x38] sm:$0xf]
      %v2572 = vld [vmem:[%s8 + $0x3c] sm:$0xf]
      %v2581 = vunpack.c.l.b16 %v2549
      %v2582 = vunpack.c.l.b16 %v2550
      %v2583 = vunpack.c.l.b16 %v2551
      %v2584 = vunpack.c.l.b16 %v2552
      %v2585 = vunpack.c.l.b16 %v2553
      %v2586 = vunpack.c.l.b16 %v2554
      %v2587 = vunpack.c.l.b16 %v2555
      %v2588 = vunpack.c.l.b16 %v2556
      %v2589 = vpack.c.b16 %v2582, %v2581
      %v2590 = vpack.c.b16 %v2584, %v2583
      %v2591 = vpack.c.b16 %v2586, %v2585
      %v2592 = vpack.c.b16 %v2588, %v2587
      %v2613 = vunpack.c.l.b16 %v2557
      %v2614 = vunpack.c.l.b16 %v2558
      %v2615 = vunpack.c.l.b16 %v2559
      %v2616 = vunpack.c.l.b16 %v2560
      %v2617 = vunpack.c.l.b16 %v2561
      %v2618 = vunpack.c.l.b16 %v2562
      %v2619 = vunpack.c.l.b16 %v2563
      %v2620 = vunpack.c.l.b16 %v2564
      %v2621 = vunpack.c.l.b16 %v2565
      %v2622 = vunpack.c.l.b16 %v2566
      %v2623 = vunpack.c.l.b16 %v2567
      %v2624 = vunpack.c.l.b16 %v2568
      %v2625 = vunpack.c.l.b16 %v2569
      %v2626 = vunpack.c.l.b16 %v2570
      %v2627 = vunpack.c.l.b16 %v2571
      %v2628 = vunpack.c.l.b16 %v2572
      %v2629 = vpack.c.b16 %v2614, %v2613
      %v2630 = vpack.c.b16 %v2616, %v2615
      %v2631 = vpack.c.b16 %v2618, %v2617
      %v2632 = vpack.c.b16 %v2620, %v2619
      %v2633 = vpack.c.b16 %v2622, %v2621
      %v2634 = vpack.c.b16 %v2624, %v2623
      %v2635 = vpack.c.b16 %v2626, %v2625
      %v2636 = vpack.c.b16 %v2628, %v2627
      %2645 = vmatpush.bf16.msra.mxu0 %v2636
      %2646 = vmatpush.bf16.msra.mxu0 %v2635
      %2647 = vmatpush.bf16.msra.mxu0 %v2634
      %2648 = vmatpush.bf16.msra.mxu0 %v2633
      %2649 = vmatpush.bf16.msra.mxu0 %v2632
      %2650 = vmatpush.bf16.msra.mxu0 %v2631
      %2651 = vmatpush.bf16.msra.mxu0 %v2630
      %2652 = vmatpush.bf16.msra.mxu0 %v2629
      %2653 = vmatmul.bf16.gmra.mxu0 %v2589
      %v2654 = vpop.f32.mrf.mxu0
      %v2655 = vadd.f32 0.0, %v2654
      %v2656 = vpop.f32.mrf.mxu0
      %v2657 = vadd.f32 0.0, %v2656
      %2658 = vmatmul.bf16.gmra.mxu0 %v2590
      %v2659 = vpop.f32.mrf.mxu0
      %v2660 = vadd.f32 0.0, %v2659
      %v2661 = vpop.f32.mrf.mxu0
      %v2662 = vadd.f32 0.0, %v2661
      %2663 = vmatmul.bf16.gmra.mxu0 %v2591
      %v2664 = vpop.f32.mrf.mxu0
      %v2665 = vadd.f32 0.0, %v2664
      %v2666 = vpop.f32.mrf.mxu0
      %v2667 = vadd.f32 0.0, %v2666
      %2668 = vmatmul.bf16.gmra.mxu0 %v2592
      %v2669 = vpop.f32.mrf.mxu0
      %v2670 = vadd.f32 0.0, %v2669
      %v2671 = vpop.f32.mrf.mxu0
      %v2672 = vadd.f32 0.0, %v2671
      %2673 = vdwg.mxu0
      %v2690 = vunpack.c.l.b16 %v2533
      %v2691 = vunpack.c.l.b16 %v2534
      %v2692 = vunpack.c.l.b16 %v2535
      %v2693 = vunpack.c.l.b16 %v2536
      %v2694 = vunpack.c.l.b16 %v2537
      %v2695 = vunpack.c.l.b16 %v2538
      %v2696 = vunpack.c.l.b16 %v2539
      %v2697 = vunpack.c.l.b16 %v2540
      %v2698 = vunpack.c.l.b16 %v2541
      %v2699 = vunpack.c.l.b16 %v2542
      %v2700 = vunpack.c.l.b16 %v2543
      %v2701 = vunpack.c.l.b16 %v2544
      %v2702 = vunpack.c.l.b16 %v2545
      %v2703 = vunpack.c.l.b16 %v2546
      %v2704 = vunpack.c.l.b16 %v2547
      %v2705 = vunpack.c.l.b16 %v2548
      %v2706 = vpack.c.b16 %v2691, %v2690
      %v2707 = vpack.c.b16 %v2693, %v2692
      %v2708 = vpack.c.b16 %v2695, %v2694
      %v2709 = vpack.c.b16 %v2697, %v2696
      %v2710 = vpack.c.b16 %v2699, %v2698
      %v2711 = vpack.c.b16 %v2701, %v2700
      %v2712 = vpack.c.b16 %v2703, %v2702
      %v2713 = vpack.c.b16 %v2705, %v2704
      %2722 = vmatpush.bf16.msra.mxu0 %v2713
      %2723 = vmatpush.bf16.msra.mxu0 %v2712
      %2724 = vmatpush.bf16.msra.mxu0 %v2711
      %2725 = vmatpush.bf16.msra.mxu0 %v2710
      %2726 = vmatpush.bf16.msra.mxu0 %v2709
      %2727 = vmatpush.bf16.msra.mxu0 %v2708
      %2728 = vmatpush.bf16.msra.mxu0 %v2707
      %2729 = vmatpush.bf16.msra.mxu0 %v2706
      %2730 = vmatmul.bf16.gmra.mxu0 %v1632
      %v2731 = vpop.f32.mrf.mxu0
      %v2732 = vadd.f32 %v2655, %v2731
      %v2733 = vpop.f32.mrf.mxu0
      %v2734 = vadd.f32 %v2657, %v2733
      %2735 = vmatmul.bf16.gmra.mxu0 %v1633
      %v2736 = vpop.f32.mrf.mxu0
      %v2737 = vadd.f32 %v2660, %v2736
      %v2738 = vpop.f32.mrf.mxu0
      %v2739 = vadd.f32 %v2662, %v2738
      %2740 = vmatmul.bf16.gmra.mxu0 %v1634
      %v2741 = vpop.f32.mrf.mxu0
      %v2742 = vadd.f32 %v2665, %v2741
      %v2743 = vpop.f32.mrf.mxu0
      %v2744 = vadd.f32 %v2667, %v2743
      %2745 = vmatmul.bf16.gmra.mxu0 %v1635
      %v2746 = vpop.f32.mrf.mxu0
      %v2747 = vadd.f32 %v2670, %v2746
      %v2748 = vpop.f32.mrf.mxu0
      %v2749 = vadd.f32 %v2672, %v2748
      %2750 = vdwg.mxu0
      %v2751 = vld [vmem:[#allocation2] sm:$0xf]
      %v2752 = vld [vmem:[#allocation2 + $0x4] sm:$0x1]
      %v2753 = vld [vmem:[#allocation2 + $0x8] sm:$0xf]
      %v2754 = vld [vmem:[#allocation2 + $0xc] sm:$0x1]
      %v2755 = vld [vmem:[#allocation2 + $0x10] sm:$0xf]
      %v2756 = vld [vmem:[#allocation2 + $0x14] sm:$0x1]
      %v2757 = vld [vmem:[#allocation2 + $0x18] sm:$0xf]
      %v2758 = vld [vmem:[#allocation2 + $0x1c] sm:$0x1]
      %v2759 = vld [vmem:[#allocation2 + $0x20] sm:$0xf]
      %v2760 = vld [vmem:[#allocation2 + $0x24] sm:$0x1]
      %v2761 = vld [vmem:[#allocation2 + $0x28] sm:$0xf]
      %v2762 = vld [vmem:[#allocation2 + $0x2c] sm:$0x1]
      %v2763 = vld [vmem:[#allocation2 + $0x30] sm:$0xf]
      %v2764 = vld [vmem:[#allocation2 + $0x34] sm:$0x1]
      %v2765 = vld [vmem:[#allocation2 + $0x38] sm:$0xf]
      %v2766 = vld [vmem:[#allocation2 + $0x3c] sm:$0x1]
      %v2768 = vshrl.u32 %v2751, 16
      %v2770 = vrot.slane %v2768, 4
      %v2771 = vshll.u32 %v2751, 16
      %v2773 = vrot.slane %v2771, 5
      %v2774 = vor.u32 %v2770, %v2773
      %v2775 = vrot.slane %v2774, 4
      %v2777 = vshll.u32 %v2752, 16
      %v2779 = vrot.slane %v2777, 5
      %v2780 = vsel %vm1242, %v2775, %v2779
      %v2782 = vshrl.u32 %v2753, 16
      %v2784 = vrot.slane %v2782, 4
      %v2785 = vshll.u32 %v2753, 16
      %v2787 = vrot.slane %v2785, 5
      %v2788 = vor.u32 %v2784, %v2787
      %v2789 = vrot.slane %v2788, 4
      %v2791 = vshll.u32 %v2754, 16
      %v2793 = vrot.slane %v2791, 5
      %v2794 = vsel %vm1242, %v2789, %v2793
      %v2796 = vshrl.u32 %v2755, 16
      %v2798 = vrot.slane %v2796, 4
      %v2799 = vshll.u32 %v2755, 16
      %v2801 = vrot.slane %v2799, 5
      %v2802 = vor.u32 %v2798, %v2801
      %v2803 = vrot.slane %v2802, 4
      %v2805 = vshll.u32 %v2756, 16
      %v2807 = vrot.slane %v2805, 5
      %v2808 = vsel %vm1242, %v2803, %v2807
      %v2810 = vshrl.u32 %v2757, 16
      %v2812 = vrot.slane %v2810, 4
      %v2813 = vshll.u32 %v2757, 16
      %v2815 = vrot.slane %v2813, 5
      %v2816 = vor.u32 %v2812, %v2815
      %v2817 = vrot.slane %v2816, 4
      %v2819 = vshll.u32 %v2758, 16
      %v2821 = vrot.slane %v2819, 5
      %v2822 = vsel %vm1242, %v2817, %v2821
      %v2824 = vshrl.u32 %v2759, 16
      %v2826 = vrot.slane %v2824, 4
      %v2827 = vshll.u32 %v2759, 16
      %v2829 = vrot.slane %v2827, 5
      %v2830 = vor.u32 %v2826, %v2829
      %v2831 = vrot.slane %v2830, 4
      %v2833 = vshll.u32 %v2760, 16
      %v2835 = vrot.slane %v2833, 5
      %v2836 = vsel %vm1242, %v2831, %v2835
      %v2838 = vshrl.u32 %v2761, 16
      %v2840 = vrot.slane %v2838, 4
      %v2841 = vshll.u32 %v2761, 16
      %v2843 = vrot.slane %v2841, 5
      %v2844 = vor.u32 %v2840, %v2843
      %v2845 = vrot.slane %v2844, 4
      %v2847 = vshll.u32 %v2762, 16
      %v2849 = vrot.slane %v2847, 5
      %v2850 = vsel %vm1242, %v2845, %v2849
      %v2852 = vshrl.u32 %v2763, 16
      %v2854 = vrot.slane %v2852, 4
      %v2855 = vshll.u32 %v2763, 16
      %v2857 = vrot.slane %v2855, 5
      %v2858 = vor.u32 %v2854, %v2857
      %v2859 = vrot.slane %v2858, 4
      %v2861 = vshll.u32 %v2764, 16
      %v2863 = vrot.slane %v2861, 5
      %v2864 = vsel %vm1242, %v2859, %v2863
      %v2866 = vshrl.u32 %v2765, 16
      %v2868 = vrot.slane %v2866, 4
      %v2869 = vshll.u32 %v2765, 16
      %v2871 = vrot.slane %v2869, 5
      %v2872 = vor.u32 %v2868, %v2871
      %v2873 = vrot.slane %v2872, 4
      %v2875 = vshll.u32 %v2766, 16
      %v2877 = vrot.slane %v2875, 5
      %v2878 = vsel %vm1242, %v2873, %v2877
      %s2879 = scalar_lea.vmem %s8, 64
      %v2880 = vld [vmem:[%s2879] sm:$0xf]
      %v2881 = vld [vmem:[%s2879 + $0x4] sm:$0xf]
      %v2882 = vld [vmem:[%s2879 + $0x8] sm:$0xf]
      %v2883 = vld [vmem:[%s2879 + $0xc] sm:$0xf]
      %v2884 = vld [vmem:[%s2879 + $0x10] sm:$0xf]
      %v2885 = vld [vmem:[%s2879 + $0x14] sm:$0xf]
      %v2886 = vld [vmem:[%s2879 + $0x18] sm:$0xf]
      %v2887 = vld [vmem:[%s2879 + $0x1c] sm:$0xf]
      %v2888 = vld [vmem:[%s2879 + $0x20] sm:$0xf]
      %v2889 = vld [vmem:[%s2879 + $0x24] sm:$0xf]
      %v2890 = vld [vmem:[%s2879 + $0x28] sm:$0xf]
      %v2891 = vld [vmem:[%s2879 + $0x2c] sm:$0xf]
      %v2892 = vld [vmem:[%s2879 + $0x30] sm:$0xf]
      %v2893 = vld [vmem:[%s2879 + $0x34] sm:$0xf]
      %v2894 = vld [vmem:[%s2879 + $0x38] sm:$0xf]
      %v2895 = vld [vmem:[%s2879 + $0x3c] sm:$0xf]
      %v2896 = vunpack.c.l.b16 %v2780
      %v2897 = vunpack.c.l.b16 %v2794
      %v2898 = vunpack.c.l.b16 %v2808
      %v2899 = vunpack.c.l.b16 %v2822
      %v2900 = vunpack.c.l.b16 %v2836
      %v2901 = vunpack.c.l.b16 %v2850
      %v2902 = vunpack.c.l.b16 %v2864
      %v2903 = vunpack.c.l.b16 %v2878
      %v2904 = vpack.c.b16 %v2897, %v2896
      %v2905 = vpack.c.b16 %v2899, %v2898
      %v2906 = vpack.c.b16 %v2901, %v2900
      %v2907 = vpack.c.b16 %v2903, %v2902
      %v2928 = vunpack.c.l.b16 %v2880
      %v2929 = vunpack.c.l.b16 %v2881
      %v2930 = vunpack.c.l.b16 %v2882
      %v2931 = vunpack.c.l.b16 %v2883
      %v2932 = vunpack.c.l.b16 %v2884
      %v2933 = vunpack.c.l.b16 %v2885
      %v2934 = vunpack.c.l.b16 %v2886
      %v2935 = vunpack.c.l.b16 %v2887
      %v2936 = vunpack.c.l.b16 %v2888
      %v2937 = vunpack.c.l.b16 %v2889
      %v2938 = vunpack.c.l.b16 %v2890
      %v2939 = vunpack.c.l.b16 %v2891
      %v2940 = vunpack.c.l.b16 %v2892
      %v2941 = vunpack.c.l.b16 %v2893
      %v2942 = vunpack.c.l.b16 %v2894
      %v2943 = vunpack.c.l.b16 %v2895
      %v2944 = vpack.c.b16 %v2929, %v2928
      %v2945 = vpack.c.b16 %v2931, %v2930
      %v2946 = vpack.c.b16 %v2933, %v2932
      %v2947 = vpack.c.b16 %v2935, %v2934
      %v2948 = vpack.c.b16 %v2937, %v2936
      %v2949 = vpack.c.b16 %v2939, %v2938
      %v2950 = vpack.c.b16 %v2941, %v2940
      %v2951 = vpack.c.b16 %v2943, %v2942
      %2960 = vmatpush.bf16.msra.mxu0 %v2951
      %2961 = vmatpush.bf16.msra.mxu0 %v2950
      %2962 = vmatpush.bf16.msra.mxu0 %v2949
      %2963 = vmatpush.bf16.msra.mxu0 %v2948
      %2964 = vmatpush.bf16.msra.mxu0 %v2947
      %2965 = vmatpush.bf16.msra.mxu0 %v2946
      %2966 = vmatpush.bf16.msra.mxu0 %v2945
      %2967 = vmatpush.bf16.msra.mxu0 %v2944
      %2968 = vmatmul.bf16.gmra.mxu0 %v2904
      %v2969 = vpop.f32.mrf.mxu0
      %v2970 = vadd.f32 0.0, %v2969
      %v2971 = vpop.f32.mrf.mxu0
      %v2972 = vadd.f32 0.0, %v2971
      %2973 = vmatmul.bf16.gmra.mxu0 %v2905
      %v2974 = vpop.f32.mrf.mxu0
      %v2975 = vadd.f32 0.0, %v2974
      %v2976 = vpop.f32.mrf.mxu0
      %v2977 = vadd.f32 0.0, %v2976
      %2978 = vmatmul.bf16.gmra.mxu0 %v2906
      %v2979 = vpop.f32.mrf.mxu0
      %v2980 = vadd.f32 0.0, %v2979
      %v2981 = vpop.f32.mrf.mxu0
      %v2982 = vadd.f32 0.0, %v2981
      %2983 = vmatmul.bf16.gmra.mxu0 %v2907
      %v2984 = vpop.f32.mrf.mxu0
      %v2985 = vadd.f32 0.0, %v2984
      %v2986 = vpop.f32.mrf.mxu0
      %v2987 = vadd.f32 0.0, %v2986
      %2988 = vdwg.mxu0
      %v2989 = vadd.f32 %v2732, %v2970
      %v2990 = vadd.f32 %v2734, %v2972
      %v2991 = vadd.f32 %v2737, %v2975
      %v2992 = vadd.f32 %v2739, %v2977
      %v2993 = vadd.f32 %v2742, %v2980
      %v2994 = vadd.f32 %v2744, %v2982
      %v2995 = vadd.f32 %v2747, %v2985
      %v2996 = vadd.f32 %v2749, %v2987
      %v2997 = vld [vmem:[#allocation2] sm:$0xe]
      %v2998 = vld [vmem:[#allocation2 + $0x8] sm:$0xe]
      %v2999 = vld [vmem:[#allocation2 + $0x10] sm:$0xe]
      %v3000 = vld [vmem:[#allocation2 + $0x18] sm:$0xe]
      %v3001 = vld [vmem:[#allocation2 + $0x20] sm:$0xe]
      %v3002 = vld [vmem:[#allocation2 + $0x28] sm:$0xe]
      %v3003 = vld [vmem:[#allocation2 + $0x30] sm:$0xe]
      %v3004 = vld [vmem:[#allocation2 + $0x38] sm:$0xe]
      %vm3021 = vcmask 1042432
      %vm3022 = vcmask 1046532
      %vm3023 = vmor %vm3021, %vm3022
      %v3024 = vrot.slane %v2997, 5
      %v3025 = vrot.slane %v3024, 4
      %v3026 = vrot.slane %v2752, 5
      %v3027 = vsel %vm3023, %v3025, %v3026
      %v3028 = vrot.slane %v2998, 5
      %v3029 = vrot.slane %v3028, 4
      %v3030 = vrot.slane %v2754, 5
      %v3031 = vsel %vm3023, %v3029, %v3030
      %v3032 = vrot.slane %v2999, 5
      %v3033 = vrot.slane %v3032, 4
      %v3034 = vrot.slane %v2756, 5
      %v3035 = vsel %vm3023, %v3033, %v3034
      %v3036 = vrot.slane %v3000, 5
      %v3037 = vrot.slane %v3036, 4
      %v3038 = vrot.slane %v2758, 5
      %v3039 = vsel %vm3023, %v3037, %v3038
      %v3040 = vrot.slane %v3001, 5
      %v3041 = vrot.slane %v3040, 4
      %v3042 = vrot.slane %v2760, 5
      %v3043 = vsel %vm3023, %v3041, %v3042
      %v3044 = vrot.slane %v3002, 5
      %v3045 = vrot.slane %v3044, 4
      %v3046 = vrot.slane %v2762, 5
      %v3047 = vsel %vm3023, %v3045, %v3046
      %v3048 = vrot.slane %v3003, 5
      %v3049 = vrot.slane %v3048, 4
      %v3050 = vrot.slane %v2764, 5
      %v3051 = vsel %vm3023, %v3049, %v3050
      %v3052 = vrot.slane %v3004, 5
      %v3053 = vrot.slane %v3052, 4
      %v3054 = vrot.slane %v2766, 5
      %v3055 = vsel %vm3023, %v3053, %v3054
      %s3056 = scalar_lea.vmem %s8, 128
      %v3057 = vld [vmem:[%s3056] sm:$0xf]
      %v3058 = vld [vmem:[%s3056 + $0x4] sm:$0xf]
      %v3059 = vld [vmem:[%s3056 + $0x8] sm:$0xf]
      %v3060 = vld [vmem:[%s3056 + $0xc] sm:$0xf]
      %v3061 = vld [vmem:[%s3056 + $0x10] sm:$0xf]
      %v3062 = vld [vmem:[%s3056 + $0x14] sm:$0xf]
      %v3063 = vld [vmem:[%s3056 + $0x18] sm:$0xf]
      %v3064 = vld [vmem:[%s3056 + $0x1c] sm:$0xf]
      %v3065 = vld [vmem:[%s3056 + $0x20] sm:$0xf]
      %v3066 = vld [vmem:[%s3056 + $0x24] sm:$0xf]
      %v3067 = vld [vmem:[%s3056 + $0x28] sm:$0xf]
      %v3068 = vld [vmem:[%s3056 + $0x2c] sm:$0xf]
      %v3069 = vld [vmem:[%s3056 + $0x30] sm:$0xf]
      %v3070 = vld [vmem:[%s3056 + $0x34] sm:$0xf]
      %v3071 = vld [vmem:[%s3056 + $0x38] sm:$0xf]
      %v3072 = vld [vmem:[%s3056 + $0x3c] sm:$0xf]
      %v3073 = vunpack.c.l.b16 %v3027
      %v3074 = vunpack.c.l.b16 %v3031
      %v3075 = vunpack.c.l.b16 %v3035
      %v3076 = vunpack.c.l.b16 %v3039
      %v3077 = vunpack.c.l.b16 %v3043
      %v3078 = vunpack.c.l.b16 %v3047
      %v3079 = vunpack.c.l.b16 %v3051
      %v3080 = vunpack.c.l.b16 %v3055
      %v3081 = vpack.c.b16 %v3074, %v3073
      %v3082 = vpack.c.b16 %v3076, %v3075
      %v3083 = vpack.c.b16 %v3078, %v3077
      %v3084 = vpack.c.b16 %v3080, %v3079
      %v3105 = vunpack.c.l.b16 %v3057
      %v3106 = vunpack.c.l.b16 %v3058
      %v3107 = vunpack.c.l.b16 %v3059
      %v3108 = vunpack.c.l.b16 %v3060
      %v3109 = vunpack.c.l.b16 %v3061
      %v3110 = vunpack.c.l.b16 %v3062
      %v3111 = vunpack.c.l.b16 %v3063
      %v3112 = vunpack.c.l.b16 %v3064
      %v3113 = vunpack.c.l.b16 %v3065
      %v3114 = vunpack.c.l.b16 %v3066
      %v3115 = vunpack.c.l.b16 %v3067
      %v3116 = vunpack.c.l.b16 %v3068
      %v3117 = vunpack.c.l.b16 %v3069
      %v3118 = vunpack.c.l.b16 %v3070
      %v3119 = vunpack.c.l.b16 %v3071
      %v3120 = vunpack.c.l.b16 %v3072
      %v3121 = vpack.c.b16 %v3106, %v3105
      %v3122 = vpack.c.b16 %v3108, %v3107
      %v3123 = vpack.c.b16 %v3110, %v3109
      %v3124 = vpack.c.b16 %v3112, %v3111
      %v3125 = vpack.c.b16 %v3114, %v3113
      %v3126 = vpack.c.b16 %v3116, %v3115
      %v3127 = vpack.c.b16 %v3118, %v3117
      %v3128 = vpack.c.b16 %v3120, %v3119
      %3137 = vmatpush.bf16.msra.mxu0 %v3128
      %3138 = vmatpush.bf16.msra.mxu0 %v3127
      %3139 = vmatpush.bf16.msra.mxu0 %v3126
      %3140 = vmatpush.bf16.msra.mxu0 %v3125
      %3141 = vmatpush.bf16.msra.mxu0 %v3124
      %3142 = vmatpush.bf16.msra.mxu0 %v3123
      %3143 = vmatpush.bf16.msra.mxu0 %v3122
      %3144 = vmatpush.bf16.msra.mxu0 %v3121
      %3145 = vmatmul.bf16.gmra.mxu0 %v3081
      %v3146 = vpop.f32.mrf.mxu0
      %v3147 = vadd.f32 0.0, %v3146
      %v3148 = vpop.f32.mrf.mxu0
      %v3149 = vadd.f32 0.0, %v3148
      %3150 = vmatmul.bf16.gmra.mxu0 %v3082
      %v3151 = vpop.f32.mrf.mxu0
      %v3152 = vadd.f32 0.0, %v3151
      %v3153 = vpop.f32.mrf.mxu0
      %v3154 = vadd.f32 0.0, %v3153
      %3155 = vmatmul.bf16.gmra.mxu0 %v3083
      %v3156 = vpop.f32.mrf.mxu0
      %v3157 = vadd.f32 0.0, %v3156
      %v3158 = vpop.f32.mrf.mxu0
      %v3159 = vadd.f32 0.0, %v3158
      %3160 = vmatmul.bf16.gmra.mxu0 %v3084
      %v3161 = vpop.f32.mrf.mxu0
      %v3162 = vadd.f32 0.0, %v3161
      %v3163 = vpop.f32.mrf.mxu0
      %v3164 = vadd.f32 0.0, %v3163
      %3165 = vdwg.mxu0
      %v3166 = vadd.f32 %v2989, %v3147
      %v3167 = vadd.f32 %v2990, %v3149
      %v3168 = vadd.f32 %v2991, %v3152
      %v3169 = vadd.f32 %v2992, %v3154
      %v3170 = vadd.f32 %v2993, %v3157
      %v3171 = vadd.f32 %v2994, %v3159
      %v3172 = vadd.f32 %v2995, %v3162
      %v3173 = vadd.f32 %v2996, %v3164
      %v3174 = vld [vmem:[%s2349] sm:$0xf]
      %v3175 = vld [vmem:[%s2349 + $0x8] sm:$0xf]
      %v3176 = vld [vmem:[%s2349 + $0x10] sm:$0xf]
      %v3177 = vld [vmem:[%s2349 + $0x18] sm:$0xf]
      %v3178 = vld [vmem:[%s2349 + $0x20] sm:$0xf]
      %v3179 = vld [vmem:[%s2349 + $0x28] sm:$0xf]
      %v3180 = vld [vmem:[%s2349 + $0x30] sm:$0xf]
      %v3181 = vld [vmem:[%s2349 + $0x38] sm:$0xf]
      %s3182 = scalar_lea.vmem %s8, 192
      %v3183 = vld [vmem:[%s3182] sm:$0xf]
      %v3184 = vld [vmem:[%s3182 + $0x4] sm:$0xf]
      %v3185 = vld [vmem:[%s3182 + $0x8] sm:$0xf]
      %v3186 = vld [vmem:[%s3182 + $0xc] sm:$0xf]
      %v3187 = vld [vmem:[%s3182 + $0x10] sm:$0xf]
      %v3188 = vld [vmem:[%s3182 + $0x14] sm:$0xf]
      %v3189 = vld [vmem:[%s3182 + $0x18] sm:$0xf]
      %v3190 = vld [vmem:[%s3182 + $0x1c] sm:$0xf]
      %v3191 = vld [vmem:[%s3182 + $0x20] sm:$0xf]
      %v3192 = vld [vmem:[%s3182 + $0x24] sm:$0xf]
      %v3193 = vld [vmem:[%s3182 + $0x28] sm:$0xf]
      %v3194 = vld [vmem:[%s3182 + $0x2c] sm:$0xf]
      %v3195 = vld [vmem:[%s3182 + $0x30] sm:$0xf]
      %v3196 = vld [vmem:[%s3182 + $0x34] sm:$0xf]
      %v3197 = vld [vmem:[%s3182 + $0x38] sm:$0xf]
      %v3198 = vld [vmem:[%s3182 + $0x3c] sm:$0xf]
      %v3207 = vunpack.c.l.b16 %v3174
      %v3208 = vunpack.c.l.b16 %v3175
      %v3209 = vunpack.c.l.b16 %v3176
      %v3210 = vunpack.c.l.b16 %v3177
      %v3211 = vunpack.c.l.b16 %v3178
      %v3212 = vunpack.c.l.b16 %v3179
      %v3213 = vunpack.c.l.b16 %v3180
      %v3214 = vunpack.c.l.b16 %v3181
      %v3215 = vpack.c.b16 %v3208, %v3207
      %v3216 = vpack.c.b16 %v3210, %v3209
      %v3217 = vpack.c.b16 %v3212, %v3211
      %v3218 = vpack.c.b16 %v3214, %v3213
      %v3239 = vunpack.c.l.b16 %v3183
      %v3240 = vunpack.c.l.b16 %v3184
      %v3241 = vunpack.c.l.b16 %v3185
      %v3242 = vunpack.c.l.b16 %v3186
      %v3243 = vunpack.c.l.b16 %v3187
      %v3244 = vunpack.c.l.b16 %v3188
      %v3245 = vunpack.c.l.b16 %v3189
      %v3246 = vunpack.c.l.b16 %v3190
      %v3247 = vunpack.c.l.b16 %v3191
      %v3248 = vunpack.c.l.b16 %v3192
      %v3249 = vunpack.c.l.b16 %v3193
      %v3250 = vunpack.c.l.b16 %v3194
      %v3251 = vunpack.c.l.b16 %v3195
      %v3252 = vunpack.c.l.b16 %v3196
      %v3253 = vunpack.c.l.b16 %v3197
      %v3254 = vunpack.c.l.b16 %v3198
      %v3255 = vpack.c.b16 %v3240, %v3239
      %v3256 = vpack.c.b16 %v3242, %v3241
      %v3257 = vpack.c.b16 %v3244, %v3243
      %v3258 = vpack.c.b16 %v3246, %v3245
      %v3259 = vpack.c.b16 %v3248, %v3247
      %v3260 = vpack.c.b16 %v3250, %v3249
      %v3261 = vpack.c.b16 %v3252, %v3251
      %v3262 = vpack.c.b16 %v3254, %v3253
      %3271 = vmatpush.bf16.msra.mxu0 %v3262
      %3272 = vmatpush.bf16.msra.mxu0 %v3261
      %3273 = vmatpush.bf16.msra.mxu0 %v3260
      %3274 = vmatpush.bf16.msra.mxu0 %v3259
      %3275 = vmatpush.bf16.msra.mxu0 %v3258
      %3276 = vmatpush.bf16.msra.mxu0 %v3257
      %3277 = vmatpush.bf16.msra.mxu0 %v3256
      %3278 = vmatpush.bf16.msra.mxu0 %v3255
      %3279 = vmatmul.bf16.gmra.mxu0 %v3215
      %v3280 = vpop.f32.mrf.mxu0
      %v3281 = vadd.f32 0.0, %v3280
      %v3282 = vpop.f32.mrf.mxu0
      %v3283 = vadd.f32 0.0, %v3282
      %3284 = vmatmul.bf16.gmra.mxu0 %v3216
      %v3285 = vpop.f32.mrf.mxu0
      %v3286 = vadd.f32 0.0, %v3285
      %v3287 = vpop.f32.mrf.mxu0
      %v3288 = vadd.f32 0.0, %v3287
      %3289 = vmatmul.bf16.gmra.mxu0 %v3217
      %v3290 = vpop.f32.mrf.mxu0
      %v3291 = vadd.f32 0.0, %v3290
      %v3292 = vpop.f32.mrf.mxu0
      %v3293 = vadd.f32 0.0, %v3292
      %3294 = vmatmul.bf16.gmra.mxu0 %v3218
      %v3295 = vpop.f32.mrf.mxu0
      %v3296 = vadd.f32 0.0, %v3295
      %v3297 = vpop.f32.mrf.mxu0
      %v3298 = vadd.f32 0.0, %v3297
      %3299 = vdwg.mxu0
      %v3300 = vadd.f32 %v3166, %v3281
      %v3301 = vadd.f32 %v3167, %v3283
      %v3302 = vadd.f32 %v3168, %v3286
      %v3303 = vadd.f32 %v3169, %v3288
      %v3304 = vadd.f32 %v3170, %v3291
      %v3305 = vadd.f32 %v3171, %v3293
      %v3306 = vadd.f32 %v3172, %v3296
      %v3307 = vadd.f32 %v3173, %v3298
      %v3308 = vld [vmem:[%s2349] sm:$0xf]
      %v3309 = vld [vmem:[%s2349 + $0x4] sm:$0x1]
      %v3310 = vld [vmem:[%s2349 + $0x8] sm:$0xf]
      %v3311 = vld [vmem:[%s2349 + $0xc] sm:$0x1]
      %v3312 = vld [vmem:[%s2349 + $0x10] sm:$0xf]
      %v3313 = vld [vmem:[%s2349 + $0x14] sm:$0x1]
      %v3314 = vld [vmem:[%s2349 + $0x18] sm:$0xf]
      %v3315 = vld [vmem:[%s2349 + $0x1c] sm:$0x1]
      %v3316 = vld [vmem:[%s2349 + $0x20] sm:$0xf]
      %v3317 = vld [vmem:[%s2349 + $0x24] sm:$0x1]
      %v3318 = vld [vmem:[%s2349 + $0x28] sm:$0xf]
      %v3319 = vld [vmem:[%s2349 + $0x2c] sm:$0x1]
      %v3320 = vld [vmem:[%s2349 + $0x30] sm:$0xf]
      %v3321 = vld [vmem:[%s2349 + $0x34] sm:$0x1]
      %v3322 = vld [vmem:[%s2349 + $0x38] sm:$0xf]
      %v3323 = vld [vmem:[%s2349 + $0x3c] sm:$0x1]
      %v3325 = vshrl.u32 %v3308, 16
      %v3327 = vrot.slane %v3325, 4
      %v3328 = vshll.u32 %v3308, 16
      %v3330 = vrot.slane %v3328, 5
      %v3331 = vor.u32 %v3327, %v3330
      %v3332 = vrot.slane %v3331, 4
      %v3334 = vshll.u32 %v3309, 16
      %v3336 = vrot.slane %v3334, 5
      %v3337 = vsel %vm1242, %v3332, %v3336
      %v3339 = vshrl.u32 %v3310, 16
      %v3341 = vrot.slane %v3339, 4
      %v3342 = vshll.u32 %v3310, 16
      %v3344 = vrot.slane %v3342, 5
      %v3345 = vor.u32 %v3341, %v3344
      %v3346 = vrot.slane %v3345, 4
      %v3348 = vshll.u32 %v3311, 16
      %v3350 = vrot.slane %v3348, 5
      %v3351 = vsel %vm1242, %v3346, %v3350
      %v3353 = vshrl.u32 %v3312, 16
      %v3355 = vrot.slane %v3353, 4
      %v3356 = vshll.u32 %v3312, 16
      %v3358 = vrot.slane %v3356, 5
      %v3359 = vor.u32 %v3355, %v3358
      %v3360 = vrot.slane %v3359, 4
      %v3362 = vshll.u32 %v3313, 16
      %v3364 = vrot.slane %v3362, 5
      %v3365 = vsel %vm1242, %v3360, %v3364
      %v3367 = vshrl.u32 %v3314, 16
      %v3369 = vrot.slane %v3367, 4
      %v3370 = vshll.u32 %v3314, 16
      %v3372 = vrot.slane %v3370, 5
      %v3373 = vor.u32 %v3369, %v3372
      %v3374 = vrot.slane %v3373, 4
      %v3376 = vshll.u32 %v3315, 16
      %v3378 = vrot.slane %v3376, 5
      %v3379 = vsel %vm1242, %v3374, %v3378
      %v3381 = vshrl.u32 %v3316, 16
      %v3383 = vrot.slane %v3381, 4
      %v3384 = vshll.u32 %v3316, 16
      %v3386 = vrot.slane %v3384, 5
      %v3387 = vor.u32 %v3383, %v3386
      %v3388 = vrot.slane %v3387, 4
      %v3390 = vshll.u32 %v3317, 16
      %v3392 = vrot.slane %v3390, 5
      %v3393 = vsel %vm1242, %v3388, %v3392
      %v3395 = vshrl.u32 %v3318, 16
      %v3397 = vrot.slane %v3395, 4
      %v3398 = vshll.u32 %v3318, 16
      %v3400 = vrot.slane %v3398, 5
      %v3401 = vor.u32 %v3397, %v3400
      %v3402 = vrot.slane %v3401, 4
      %v3404 = vshll.u32 %v3319, 16
      %v3406 = vrot.slane %v3404, 5
      %v3407 = vsel %vm1242, %v3402, %v3406
      %v3409 = vshrl.u32 %v3320, 16
      %v3411 = vrot.slane %v3409, 4
      %v3412 = vshll.u32 %v3320, 16
      %v3414 = vrot.slane %v3412, 5
      %v3415 = vor.u32 %v3411, %v3414
      %v3416 = vrot.slane %v3415, 4
      %v3418 = vshll.u32 %v3321, 16
      %v3420 = vrot.slane %v3418, 5
      %v3421 = vsel %vm1242, %v3416, %v3420
      %v3423 = vshrl.u32 %v3322, 16
      %v3425 = vrot.slane %v3423, 4
      %v3426 = vshll.u32 %v3322, 16
      %v3428 = vrot.slane %v3426, 5
      %v3429 = vor.u32 %v3425, %v3428
      %v3430 = vrot.slane %v3429, 4
      %v3432 = vshll.u32 %v3323, 16
      %v3434 = vrot.slane %v3432, 5
      %v3435 = vsel %vm1242, %v3430, %v3434
      %s3436 = scalar_lea.vmem %s8, 256
      %v3437 = vld [vmem:[%s3436] sm:$0xf]
      %v3438 = vld [vmem:[%s3436 + $0x4] sm:$0xf]
      %v3439 = vld [vmem:[%s3436 + $0x8] sm:$0xf]
      %v3440 = vld [vmem:[%s3436 + $0xc] sm:$0xf]
      %v3441 = vld [vmem:[%s3436 + $0x10] sm:$0xf]
      %v3442 = vld [vmem:[%s3436 + $0x14] sm:$0xf]
      %v3443 = vld [vmem:[%s3436 + $0x18] sm:$0xf]
      %v3444 = vld [vmem:[%s3436 + $0x1c] sm:$0xf]
      %v3445 = vld [vmem:[%s3436 + $0x20] sm:$0xf]
      %v3446 = vld [vmem:[%s3436 + $0x24] sm:$0xf]
      %v3447 = vld [vmem:[%s3436 + $0x28] sm:$0xf]
      %v3448 = vld [vmem:[%s3436 + $0x2c] sm:$0xf]
      %v3449 = vld [vmem:[%s3436 + $0x30] sm:$0xf]
      %v3450 = vld [vmem:[%s3436 + $0x34] sm:$0xf]
      %v3451 = vld [vmem:[%s3436 + $0x38] sm:$0xf]
      %v3452 = vld [vmem:[%s3436 + $0x3c] sm:$0xf]
      %v3453 = vunpack.c.l.b16 %v3337
      %v3454 = vunpack.c.l.b16 %v3351
      %v3455 = vunpack.c.l.b16 %v3365
      %v3456 = vunpack.c.l.b16 %v3379
      %v3457 = vunpack.c.l.b16 %v3393
      %v3458 = vunpack.c.l.b16 %v3407
      %v3459 = vunpack.c.l.b16 %v3421
      %v3460 = vunpack.c.l.b16 %v3435
      %v3461 = vpack.c.b16 %v3454, %v3453
      %v3462 = vpack.c.b16 %v3456, %v3455
      %v3463 = vpack.c.b16 %v3458, %v3457
      %v3464 = vpack.c.b16 %v3460, %v3459
      %v3485 = vunpack.c.l.b16 %v3437
      %v3486 = vunpack.c.l.b16 %v3438
      %v3487 = vunpack.c.l.b16 %v3439
      %v3488 = vunpack.c.l.b16 %v3440
      %v3489 = vunpack.c.l.b16 %v3441
      %v3490 = vunpack.c.l.b16 %v3442
      %v3491 = vunpack.c.l.b16 %v3443
      %v3492 = vunpack.c.l.b16 %v3444
      %v3493 = vunpack.c.l.b16 %v3445
      %v3494 = vunpack.c.l.b16 %v3446
      %v3495 = vunpack.c.l.b16 %v3447
      %v3496 = vunpack.c.l.b16 %v3448
      %v3497 = vunpack.c.l.b16 %v3449
      %v3498 = vunpack.c.l.b16 %v3450
      %v3499 = vunpack.c.l.b16 %v3451
      %v3500 = vunpack.c.l.b16 %v3452
      %v3501 = vpack.c.b16 %v3486, %v3485
      %v3502 = vpack.c.b16 %v3488, %v3487
      %v3503 = vpack.c.b16 %v3490, %v3489
      %v3504 = vpack.c.b16 %v3492, %v3491
      %v3505 = vpack.c.b16 %v3494, %v3493
      %v3506 = vpack.c.b16 %v3496, %v3495
      %v3507 = vpack.c.b16 %v3498, %v3497
      %v3508 = vpack.c.b16 %v3500, %v3499
      %3517 = vmatpush.bf16.msra.mxu0 %v3508
      %3518 = vmatpush.bf16.msra.mxu0 %v3507
      %3519 = vmatpush.bf16.msra.mxu0 %v3506
      %3520 = vmatpush.bf16.msra.mxu0 %v3505
      %3521 = vmatpush.bf16.msra.mxu0 %v3504
      %3522 = vmatpush.bf16.msra.mxu0 %v3503
      %3523 = vmatpush.bf16.msra.mxu0 %v3502
      %3524 = vmatpush.bf16.msra.mxu0 %v3501
      %3525 = vmatmul.bf16.gmra.mxu0 %v3461
      %v3526 = vpop.f32.mrf.mxu0
      %v3527 = vadd.f32 0.0, %v3526
      %v3528 = vpop.f32.mrf.mxu0
      %v3529 = vadd.f32 0.0, %v3528
      %3530 = vmatmul.bf16.gmra.mxu0 %v3462
      %v3531 = vpop.f32.mrf.mxu0
      %v3532 = vadd.f32 0.0, %v3531
      %v3533 = vpop.f32.mrf.mxu0
      %v3534 = vadd.f32 0.0, %v3533
      %3535 = vmatmul.bf16.gmra.mxu0 %v3463
      %v3536 = vpop.f32.mrf.mxu0
      %v3537 = vadd.f32 0.0, %v3536
      %v3538 = vpop.f32.mrf.mxu0
      %v3539 = vadd.f32 0.0, %v3538
      %3540 = vmatmul.bf16.gmra.mxu0 %v3464
      %v3541 = vpop.f32.mrf.mxu0
      %v3542 = vadd.f32 0.0, %v3541
      %v3543 = vpop.f32.mrf.mxu0
      %v3544 = vadd.f32 0.0, %v3543
      %3545 = vdwg.mxu0
      %v3546 = vadd.f32 %v3300, %v3527
      %v3547 = vadd.f32 %v3301, %v3529
      %v3548 = vadd.f32 %v3302, %v3532
      %v3549 = vadd.f32 %v3303, %v3534
      %v3550 = vadd.f32 %v3304, %v3537
      %v3551 = vadd.f32 %v3305, %v3539
      %v3552 = vadd.f32 %v3306, %v3542
      %v3553 = vadd.f32 %v3307, %v3544
      %v3554 = vld [vmem:[%s2349] sm:$0xe]
      %v3555 = vld [vmem:[%s2349 + $0x8] sm:$0xe]
      %v3556 = vld [vmem:[%s2349 + $0x10] sm:$0xe]
      %v3557 = vld [vmem:[%s2349 + $0x18] sm:$0xe]
      %v3558 = vld [vmem:[%s2349 + $0x20] sm:$0xe]
      %v3559 = vld [vmem:[%s2349 + $0x28] sm:$0xe]
      %v3560 = vld [vmem:[%s2349 + $0x30] sm:$0xe]
      %v3561 = vld [vmem:[%s2349 + $0x38] sm:$0xe]
      %v3578 = vrot.slane %v3554, 5
      %v3579 = vrot.slane %v3578, 4
      %v3580 = vrot.slane %v3309, 5
      %v3581 = vsel %vm3023, %v3579, %v3580
      %v3582 = vrot.slane %v3555, 5
      %v3583 = vrot.slane %v3582, 4
      %v3584 = vrot.slane %v3311, 5
      %v3585 = vsel %vm3023, %v3583, %v3584
      %v3586 = vrot.slane %v3556, 5
      %v3587 = vrot.slane %v3586, 4
      %v3588 = vrot.slane %v3313, 5
      %v3589 = vsel %vm3023, %v3587, %v3588
      %v3590 = vrot.slane %v3557, 5
      %v3591 = vrot.slane %v3590, 4
      %v3592 = vrot.slane %v3315, 5
      %v3593 = vsel %vm3023, %v3591, %v3592
      %v3594 = vrot.slane %v3558, 5
      %v3595 = vrot.slane %v3594, 4
      %v3596 = vrot.slane %v3317, 5
      %v3597 = vsel %vm3023, %v3595, %v3596
      %v3598 = vrot.slane %v3559, 5
      %v3599 = vrot.slane %v3598, 4
      %v3600 = vrot.slane %v3319, 5
      %v3601 = vsel %vm3023, %v3599, %v3600
      %v3602 = vrot.slane %v3560, 5
      %v3603 = vrot.slane %v3602, 4
      %v3604 = vrot.slane %v3321, 5
      %v3605 = vsel %vm3023, %v3603, %v3604
      %v3606 = vrot.slane %v3561, 5
      %v3607 = vrot.slane %v3606, 4
      %v3608 = vrot.slane %v3323, 5
      %v3609 = vsel %vm3023, %v3607, %v3608
      %s3610 = scalar_lea.vmem %s8, 320
      %v3611 = vld [vmem:[%s3610] sm:$0xf]
      %v3612 = vld [vmem:[%s3610 + $0x4] sm:$0xf]
      %v3613 = vld [vmem:[%s3610 + $0x8] sm:$0xf]
      %v3614 = vld [vmem:[%s3610 + $0xc] sm:$0xf]
      %v3615 = vld [vmem:[%s3610 + $0x10] sm:$0xf]
      %v3616 = vld [vmem:[%s3610 + $0x14] sm:$0xf]
      %v3617 = vld [vmem:[%s3610 + $0x18] sm:$0xf]
      %v3618 = vld [vmem:[%s3610 + $0x1c] sm:$0xf]
      %v3619 = vld [vmem:[%s3610 + $0x20] sm:$0xf]
      %v3620 = vld [vmem:[%s3610 + $0x24] sm:$0xf]
      %v3621 = vld [vmem:[%s3610 + $0x28] sm:$0xf]
      %v3622 = vld [vmem:[%s3610 + $0x2c] sm:$0xf]
      %v3623 = vld [vmem:[%s3610 + $0x30] sm:$0xf]
      %v3624 = vld [vmem:[%s3610 + $0x34] sm:$0xf]
      %v3625 = vld [vmem:[%s3610 + $0x38] sm:$0xf]
      %v3626 = vld [vmem:[%s3610 + $0x3c] sm:$0xf]
      %v3627 = vunpack.c.l.b16 %v3581
      %v3628 = vunpack.c.l.b16 %v3585
      %v3629 = vunpack.c.l.b16 %v3589
      %v3630 = vunpack.c.l.b16 %v3593
      %v3631 = vunpack.c.l.b16 %v3597
      %v3632 = vunpack.c.l.b16 %v3601
      %v3633 = vunpack.c.l.b16 %v3605
      %v3634 = vunpack.c.l.b16 %v3609
      %v3635 = vpack.c.b16 %v3628, %v3627
      %v3636 = vpack.c.b16 %v3630, %v3629
      %v3637 = vpack.c.b16 %v3632, %v3631
      %v3638 = vpack.c.b16 %v3634, %v3633
      %v3659 = vunpack.c.l.b16 %v3611
      %v3660 = vunpack.c.l.b16 %v3612
      %v3661 = vunpack.c.l.b16 %v3613
      %v3662 = vunpack.c.l.b16 %v3614
      %v3663 = vunpack.c.l.b16 %v3615
      %v3664 = vunpack.c.l.b16 %v3616
      %v3665 = vunpack.c.l.b16 %v3617
      %v3666 = vunpack.c.l.b16 %v3618
      %v3667 = vunpack.c.l.b16 %v3619
      %v3668 = vunpack.c.l.b16 %v3620
      %v3669 = vunpack.c.l.b16 %v3621
      %v3670 = vunpack.c.l.b16 %v3622
      %v3671 = vunpack.c.l.b16 %v3623
      %v3672 = vunpack.c.l.b16 %v3624
      %v3673 = vunpack.c.l.b16 %v3625
      %v3674 = vunpack.c.l.b16 %v3626
      %v3675 = vpack.c.b16 %v3660, %v3659
      %v3676 = vpack.c.b16 %v3662, %v3661
      %v3677 = vpack.c.b16 %v3664, %v3663
      %v3678 = vpack.c.b16 %v3666, %v3665
      %v3679 = vpack.c.b16 %v3668, %v3667
      %v3680 = vpack.c.b16 %v3670, %v3669
      %v3681 = vpack.c.b16 %v3672, %v3671
      %v3682 = vpack.c.b16 %v3674, %v3673
      %3691 = vmatpush.bf16.msra.mxu0 %v3682
      %3692 = vmatpush.bf16.msra.mxu0 %v3681
      %3693 = vmatpush.bf16.msra.mxu0 %v3680
      %3694 = vmatpush.bf16.msra.mxu0 %v3679
      %3695 = vmatpush.bf16.msra.mxu0 %v3678
      %3696 = vmatpush.bf16.msra.mxu0 %v3677
      %3697 = vmatpush.bf16.msra.mxu0 %v3676
      %3698 = vmatpush.bf16.msra.mxu0 %v3675
      %3699 = vmatmul.bf16.gmra.mxu0 %v3635
      %v3700 = vpop.f32.mrf.mxu0
      %v3701 = vadd.f32 0.0, %v3700
      %v3702 = vpop.f32.mrf.mxu0
      %v3703 = vadd.f32 0.0, %v3702
      %3704 = vmatmul.bf16.gmra.mxu0 %v3636
      %v3705 = vpop.f32.mrf.mxu0
      %v3706 = vadd.f32 0.0, %v3705
      %v3707 = vpop.f32.mrf.mxu0
      %v3708 = vadd.f32 0.0, %v3707
      %3709 = vmatmul.bf16.gmra.mxu0 %v3637
      %v3710 = vpop.f32.mrf.mxu0
      %v3711 = vadd.f32 0.0, %v3710
      %v3712 = vpop.f32.mrf.mxu0
      %v3713 = vadd.f32 0.0, %v3712
      %3714 = vmatmul.bf16.gmra.mxu0 %v3638
      %v3715 = vpop.f32.mrf.mxu0
      %v3716 = vadd.f32 0.0, %v3715
      %v3717 = vpop.f32.mrf.mxu0
      %v3718 = vadd.f32 0.0, %v3717
      %3719 = vdwg.mxu0
      %v3720 = vadd.f32 %v3546, %v3701
      %v3721 = vadd.f32 %v3547, %v3703
      %v3722 = vadd.f32 %v3548, %v3706
      %v3723 = vadd.f32 %v3549, %v3708
      %v3724 = vadd.f32 %v3550, %v3711
      %v3725 = vadd.f32 %v3551, %v3713
      %v3726 = vadd.f32 %v3552, %v3716
      %v3727 = vadd.f32 %v3553, %v3718
      %s3728 = scalar_lea.vmem [#allocation2], 16
      %v3729 = vld [vmem:[%s3728] sm:$0xf]
      %v3730 = vld [vmem:[%s3728 + $0x8] sm:$0xf]
      %v3731 = vld [vmem:[%s3728 + $0x10] sm:$0xf]
      %v3732 = vld [vmem:[%s3728 + $0x18] sm:$0xf]
      %v3733 = vld [vmem:[%s3728 + $0x20] sm:$0xf]
      %v3734 = vld [vmem:[%s3728 + $0x28] sm:$0xf]
      %v3735 = vld [vmem:[%s3728 + $0x30] sm:$0xf]
      %v3736 = vld [vmem:[%s3728 + $0x38] sm:$0xf]
      %s3737 = scalar_lea.vmem %s8, 384
      %v3738 = vld [vmem:[%s3737] sm:$0xf]
      %v3739 = vld [vmem:[%s3737 + $0x4] sm:$0xf]
      %v3740 = vld [vmem:[%s3737 + $0x8] sm:$0xf]
      %v3741 = vld [vmem:[%s3737 + $0xc] sm:$0xf]
      %v3742 = vld [vmem:[%s3737 + $0x10] sm:$0xf]
      %v3743 = vld [vmem:[%s3737 + $0x14] sm:$0xf]
      %v3744 = vld [vmem:[%s3737 + $0x18] sm:$0xf]
      %v3745 = vld [vmem:[%s3737 + $0x1c] sm:$0xf]
      %v3746 = vld [vmem:[%s3737 + $0x20] sm:$0xf]
      %v3747 = vld [vmem:[%s3737 + $0x24] sm:$0xf]
      %v3748 = vld [vmem:[%s3737 + $0x28] sm:$0xf]
      %v3749 = vld [vmem:[%s3737 + $0x2c] sm:$0xf]
      %v3750 = vld [vmem:[%s3737 + $0x30] sm:$0xf]
      %v3751 = vld [vmem:[%s3737 + $0x34] sm:$0xf]
      %v3752 = vld [vmem:[%s3737 + $0x38] sm:$0xf]
      %v3753 = vld [vmem:[%s3737 + $0x3c] sm:$0xf]
      %v3762 = vunpack.c.l.b16 %v3729
      %v3763 = vunpack.c.l.b16 %v3730
      %v3764 = vunpack.c.l.b16 %v3731
      %v3765 = vunpack.c.l.b16 %v3732
      %v3766 = vunpack.c.l.b16 %v3733
      %v3767 = vunpack.c.l.b16 %v3734
      %v3768 = vunpack.c.l.b16 %v3735
      %v3769 = vunpack.c.l.b16 %v3736
      %v3770 = vpack.c.b16 %v3763, %v3762
      %v3771 = vpack.c.b16 %v3765, %v3764
      %v3772 = vpack.c.b16 %v3767, %v3766
      %v3773 = vpack.c.b16 %v3769, %v3768
      %v3794 = vunpack.c.l.b16 %v3738
      %v3795 = vunpack.c.l.b16 %v3739
      %v3796 = vunpack.c.l.b16 %v3740
      %v3797 = vunpack.c.l.b16 %v3741
      %v3798 = vunpack.c.l.b16 %v3742
      %v3799 = vunpack.c.l.b16 %v3743
      %v3800 = vunpack.c.l.b16 %v3744
      %v3801 = vunpack.c.l.b16 %v3745
      %v3802 = vunpack.c.l.b16 %v3746
      %v3803 = vunpack.c.l.b16 %v3747
      %v3804 = vunpack.c.l.b16 %v3748
      %v3805 = vunpack.c.l.b16 %v3749
      %v3806 = vunpack.c.l.b16 %v3750
      %v3807 = vunpack.c.l.b16 %v3751
      %v3808 = vunpack.c.l.b16 %v3752
      %v3809 = vunpack.c.l.b16 %v3753
      %v3810 = vpack.c.b16 %v3795, %v3794
      %v3811 = vpack.c.b16 %v3797, %v3796
      %v3812 = vpack.c.b16 %v3799, %v3798
      %v3813 = vpack.c.b16 %v3801, %v3800
      %v3814 = vpack.c.b16 %v3803, %v3802
      %v3815 = vpack.c.b16 %v3805, %v3804
      %v3816 = vpack.c.b16 %v3807, %v3806
      %v3817 = vpack.c.b16 %v3809, %v3808
      %3826 = vmatpush.bf16.msra.mxu0 %v3817
      %3827 = vmatpush.bf16.msra.mxu0 %v3816
      %3828 = vmatpush.bf16.msra.mxu0 %v3815
      %3829 = vmatpush.bf16.msra.mxu0 %v3814
      %3830 = vmatpush.bf16.msra.mxu0 %v3813
      %3831 = vmatpush.bf16.msra.mxu0 %v3812
      %3832 = vmatpush.bf16.msra.mxu0 %v3811
      %3833 = vmatpush.bf16.msra.mxu0 %v3810
      %3834 = vmatmul.bf16.gmra.mxu0 %v3770
      %v3835 = vpop.f32.mrf.mxu0
      %v3836 = vadd.f32 0.0, %v3835
      %v3837 = vpop.f32.mrf.mxu0
      %v3838 = vadd.f32 0.0, %v3837
      %3839 = vmatmul.bf16.gmra.mxu0 %v3771
      %v3840 = vpop.f32.mrf.mxu0
      %v3841 = vadd.f32 0.0, %v3840
      %v3842 = vpop.f32.mrf.mxu0
      %v3843 = vadd.f32 0.0, %v3842
      %3844 = vmatmul.bf16.gmra.mxu0 %v3772
      %v3845 = vpop.f32.mrf.mxu0
      %v3846 = vadd.f32 0.0, %v3845
      %v3847 = vpop.f32.mrf.mxu0
      %v3848 = vadd.f32 0.0, %v3847
      %3849 = vmatmul.bf16.gmra.mxu0 %v3773
      %v3850 = vpop.f32.mrf.mxu0
      %v3851 = vadd.f32 0.0, %v3850
      %v3852 = vpop.f32.mrf.mxu0
      %v3853 = vadd.f32 0.0, %v3852
      %3854 = vdwg.mxu0
      %v3855 = vadd.f32 %v3720, %v3836
      %v3856 = vadd.f32 %v3721, %v3838
      %v3857 = vadd.f32 %v3722, %v3841
      %v3858 = vadd.f32 %v3723, %v3843
      %v3859 = vadd.f32 %v3724, %v3846
      %v3860 = vadd.f32 %v3725, %v3848
      %v3861 = vadd.f32 %v3726, %v3851
      %v3862 = vadd.f32 %v3727, %v3853
      %v3863 = vld [vmem:[%s3728] sm:$0xf]
      %v3864 = vld [vmem:[%s3728 + $0x4] sm:$0x1]
      %v3865 = vld [vmem:[%s3728 + $0x8] sm:$0xf]
      %v3866 = vld [vmem:[%s3728 + $0xc] sm:$0x1]
      %v3867 = vld [vmem:[%s3728 + $0x10] sm:$0xf]
      %v3868 = vld [vmem:[%s3728 + $0x14] sm:$0x1]
      %v3869 = vld [vmem:[%s3728 + $0x18] sm:$0xf]
      %v3870 = vld [vmem:[%s3728 + $0x1c] sm:$0x1]
      %v3871 = vld [vmem:[%s3728 + $0x20] sm:$0xf]
      %v3872 = vld [vmem:[%s3728 + $0x24] sm:$0x1]
      %v3873 = vld [vmem:[%s3728 + $0x28] sm:$0xf]
      %v3874 = vld [vmem:[%s3728 + $0x2c] sm:$0x1]
      %v3875 = vld [vmem:[%s3728 + $0x30] sm:$0xf]
      %v3876 = vld [vmem:[%s3728 + $0x34] sm:$0x1]
      %v3877 = vld [vmem:[%s3728 + $0x38] sm:$0xf]
      %v3878 = vld [vmem:[%s3728 + $0x3c] sm:$0x1]
      %v3880 = vshrl.u32 %v3863, 16
      %v3882 = vrot.slane %v3880, 4
      %v3883 = vshll.u32 %v3863, 16
      %v3885 = vrot.slane %v3883, 5
      %v3886 = vor.u32 %v3882, %v3885
      %v3887 = vrot.slane %v3886, 4
      %v3889 = vshll.u32 %v3864, 16
      %v3891 = vrot.slane %v3889, 5
      %v3892 = vsel %vm1242, %v3887, %v3891
      %v3894 = vshrl.u32 %v3865, 16
      %v3896 = vrot.slane %v3894, 4
      %v3897 = vshll.u32 %v3865, 16
      %v3899 = vrot.slane %v3897, 5
      %v3900 = vor.u32 %v3896, %v3899
      %v3901 = vrot.slane %v3900, 4
      %v3903 = vshll.u32 %v3866, 16
      %v3905 = vrot.slane %v3903, 5
      %v3906 = vsel %vm1242, %v3901, %v3905
      %v3908 = vshrl.u32 %v3867, 16
      %v3910 = vrot.slane %v3908, 4
      %v3911 = vshll.u32 %v3867, 16
      %v3913 = vrot.slane %v3911, 5
      %v3914 = vor.u32 %v3910, %v3913
      %v3915 = vrot.slane %v3914, 4
      %v3917 = vshll.u32 %v3868, 16
      %v3919 = vrot.slane %v3917, 5
      %v3920 = vsel %vm1242, %v3915, %v3919
      %v3922 = vshrl.u32 %v3869, 16
      %v3924 = vrot.slane %v3922, 4
      %v3925 = vshll.u32 %v3869, 16
      %v3927 = vrot.slane %v3925, 5
      %v3928 = vor.u32 %v3924, %v3927
      %v3929 = vrot.slane %v3928, 4
      %v3931 = vshll.u32 %v3870, 16
      %v3933 = vrot.slane %v3931, 5
      %v3934 = vsel %vm1242, %v3929, %v3933
      %v3936 = vshrl.u32 %v3871, 16
      %v3938 = vrot.slane %v3936, 4
      %v3939 = vshll.u32 %v3871, 16
      %v3941 = vrot.slane %v3939, 5
      %v3942 = vor.u32 %v3938, %v3941
      %v3943 = vrot.slane %v3942, 4
      %v3945 = vshll.u32 %v3872, 16
      %v3947 = vrot.slane %v3945, 5
      %v3948 = vsel %vm1242, %v3943, %v3947
      %v3950 = vshrl.u32 %v3873, 16
      %v3952 = vrot.slane %v3950, 4
      %v3953 = vshll.u32 %v3873, 16
      %v3955 = vrot.slane %v3953, 5
      %v3956 = vor.u32 %v3952, %v3955
      %v3957 = vrot.slane %v3956, 4
      %v3959 = vshll.u32 %v3874, 16
      %v3961 = vrot.slane %v3959, 5
      %v3962 = vsel %vm1242, %v3957, %v3961
      %v3964 = vshrl.u32 %v3875, 16
      %v3966 = vrot.slane %v3964, 4
      %v3967 = vshll.u32 %v3875, 16
      %v3969 = vrot.slane %v3967, 5
      %v3970 = vor.u32 %v3966, %v3969
      %v3971 = vrot.slane %v3970, 4
      %v3973 = vshll.u32 %v3876, 16
      %v3975 = vrot.slane %v3973, 5
      %v3976 = vsel %vm1242, %v3971, %v3975
      %v3978 = vshrl.u32 %v3877, 16
      %v3980 = vrot.slane %v3978, 4
      %v3981 = vshll.u32 %v3877, 16
      %v3983 = vrot.slane %v3981, 5
      %v3984 = vor.u32 %v3980, %v3983
      %v3985 = vrot.slane %v3984, 4
      %v3987 = vshll.u32 %v3878, 16
      %v3989 = vrot.slane %v3987, 5
      %v3990 = vsel %vm1242, %v3985, %v3989
      %s3991 = scalar_lea.vmem %s8, 448
      %v3992 = vld [vmem:[%s3991] sm:$0xf]
      %v3993 = vld [vmem:[%s3991 + $0x4] sm:$0xf]
      %v3994 = vld [vmem:[%s3991 + $0x8] sm:$0xf]
      %v3995 = vld [vmem:[%s3991 + $0xc] sm:$0xf]
      %v3996 = vld [vmem:[%s3991 + $0x10] sm:$0xf]
      %v3997 = vld [vmem:[%s3991 + $0x14] sm:$0xf]
      %v3998 = vld [vmem:[%s3991 + $0x18] sm:$0xf]
      %v3999 = vld [vmem:[%s3991 + $0x1c] sm:$0xf]
      %v4000 = vld [vmem:[%s3991 + $0x20] sm:$0xf]
      %v4001 = vld [vmem:[%s3991 + $0x24] sm:$0xf]
      %v4002 = vld [vmem:[%s3991 + $0x28] sm:$0xf]
      %v4003 = vld [vmem:[%s3991 + $0x2c] sm:$0xf]
      %v4004 = vld [vmem:[%s3991 + $0x30] sm:$0xf]
      %v4005 = vld [vmem:[%s3991 + $0x34] sm:$0xf]
      %v4006 = vld [vmem:[%s3991 + $0x38] sm:$0xf]
      %v4007 = vld [vmem:[%s3991 + $0x3c] sm:$0xf]
      %v4008 = vunpack.c.l.b16 %v3892
      %v4009 = vunpack.c.l.b16 %v3906
      %v4010 = vunpack.c.l.b16 %v3920
      %v4011 = vunpack.c.l.b16 %v3934
      %v4012 = vunpack.c.l.b16 %v3948
      %v4013 = vunpack.c.l.b16 %v3962
      %v4014 = vunpack.c.l.b16 %v3976
      %v4015 = vunpack.c.l.b16 %v3990
      %v4016 = vpack.c.b16 %v4009, %v4008
      %v4017 = vpack.c.b16 %v4011, %v4010
      %v4018 = vpack.c.b16 %v4013, %v4012
      %v4019 = vpack.c.b16 %v4015, %v4014
      %v4040 = vunpack.c.l.b16 %v3992
      %v4041 = vunpack.c.l.b16 %v3993
      %v4042 = vunpack.c.l.b16 %v3994
      %v4043 = vunpack.c.l.b16 %v3995
      %v4044 = vunpack.c.l.b16 %v3996
      %v4045 = vunpack.c.l.b16 %v3997
      %v4046 = vunpack.c.l.b16 %v3998
      %v4047 = vunpack.c.l.b16 %v3999
      %v4048 = vunpack.c.l.b16 %v4000
      %v4049 = vunpack.c.l.b16 %v4001
      %v4050 = vunpack.c.l.b16 %v4002
      %v4051 = vunpack.c.l.b16 %v4003
      %v4052 = vunpack.c.l.b16 %v4004
      %v4053 = vunpack.c.l.b16 %v4005
      %v4054 = vunpack.c.l.b16 %v4006
      %v4055 = vunpack.c.l.b16 %v4007
      %v4056 = vpack.c.b16 %v4041, %v4040
      %v4057 = vpack.c.b16 %v4043, %v4042
      %v4058 = vpack.c.b16 %v4045, %v4044
      %v4059 = vpack.c.b16 %v4047, %v4046
      %v4060 = vpack.c.b16 %v4049, %v4048
      %v4061 = vpack.c.b16 %v4051, %v4050
      %v4062 = vpack.c.b16 %v4053, %v4052
      %v4063 = vpack.c.b16 %v4055, %v4054
      %4072 = vmatpush.bf16.msra.mxu0 %v4063
      %4073 = vmatpush.bf16.msra.mxu0 %v4062
      %4074 = vmatpush.bf16.msra.mxu0 %v4061
      %4075 = vmatpush.bf16.msra.mxu0 %v4060
      %4076 = vmatpush.bf16.msra.mxu0 %v4059
      %4077 = vmatpush.bf16.msra.mxu0 %v4058
      %4078 = vmatpush.bf16.msra.mxu0 %v4057
      %4079 = vmatpush.bf16.msra.mxu0 %v4056
      %4080 = vmatmul.bf16.gmra.mxu0 %v4016
      %v4081 = vpop.f32.mrf.mxu0
      %v4082 = vadd.f32 0.0, %v4081
      %v4083 = vpop.f32.mrf.mxu0
      %v4084 = vadd.f32 0.0, %v4083
      %4085 = vmatmul.bf16.gmra.mxu0 %v4017
      %v4086 = vpop.f32.mrf.mxu0
      %v4087 = vadd.f32 0.0, %v4086
      %v4088 = vpop.f32.mrf.mxu0
      %v4089 = vadd.f32 0.0, %v4088
      %4090 = vmatmul.bf16.gmra.mxu0 %v4018
      %v4091 = vpop.f32.mrf.mxu0
      %v4092 = vadd.f32 0.0, %v4091
      %v4093 = vpop.f32.mrf.mxu0
      %v4094 = vadd.f32 0.0, %v4093
      %4095 = vmatmul.bf16.gmra.mxu0 %v4019
      %v4096 = vpop.f32.mrf.mxu0
      %v4097 = vadd.f32 0.0, %v4096
      %v4098 = vpop.f32.mrf.mxu0
      %v4099 = vadd.f32 0.0, %v4098
      %4100 = vdwg.mxu0
      %v4101 = vadd.f32 %v3855, %v4082
      %v4102 = vadd.f32 %v3856, %v4084
      %v4103 = vadd.f32 %v3857, %v4087
      %v4104 = vadd.f32 %v3858, %v4089
      %v4105 = vadd.f32 %v3859, %v4092
      %v4106 = vadd.f32 %v3860, %v4094
      %v4107 = vadd.f32 %v3861, %v4097
      %v4108 = vadd.f32 %v3862, %v4099
      %v4109 = vld [vmem:[%s3728] sm:$0xe]
      %v4110 = vld [vmem:[%s3728 + $0x8] sm:$0xe]
      %v4111 = vld [vmem:[%s3728 + $0x10] sm:$0xe]
      %v4112 = vld [vmem:[%s3728 + $0x18] sm:$0xe]
      %v4113 = vld [vmem:[%s3728 + $0x20] sm:$0xe]
      %v4114 = vld [vmem:[%s3728 + $0x28] sm:$0xe]
      %v4115 = vld [vmem:[%s3728 + $0x30] sm:$0xe]
      %v4116 = vld [vmem:[%s3728 + $0x38] sm:$0xe]
      %v4133 = vrot.slane %v4109, 5
      %v4134 = vrot.slane %v4133, 4
      %v4135 = vrot.slane %v3864, 5
      %v4136 = vsel %vm3023, %v4134, %v4135
      %v4137 = vrot.slane %v4110, 5
      %v4138 = vrot.slane %v4137, 4
      %v4139 = vrot.slane %v3866, 5
      %v4140 = vsel %vm3023, %v4138, %v4139
      %v4141 = vrot.slane %v4111, 5
      %v4142 = vrot.slane %v4141, 4
      %v4143 = vrot.slane %v3868, 5
      %v4144 = vsel %vm3023, %v4142, %v4143
      %v4145 = vrot.slane %v4112, 5
      %v4146 = vrot.slane %v4145, 4
      %v4147 = vrot.slane %v3870, 5
      %v4148 = vsel %vm3023, %v4146, %v4147
      %v4149 = vrot.slane %v4113, 5
      %v4150 = vrot.slane %v4149, 4
      %v4151 = vrot.slane %v3872, 5
      %v4152 = vsel %vm3023, %v4150, %v4151
      %v4153 = vrot.slane %v4114, 5
      %v4154 = vrot.slane %v4153, 4
      %v4155 = vrot.slane %v3874, 5
      %v4156 = vsel %vm3023, %v4154, %v4155
      %v4157 = vrot.slane %v4115, 5
      %v4158 = vrot.slane %v4157, 4
      %v4159 = vrot.slane %v3876, 5
      %v4160 = vsel %vm3023, %v4158, %v4159
      %v4161 = vrot.slane %v4116, 5
      %v4162 = vrot.slane %v4161, 4
      %v4163 = vrot.slane %v3878, 5
      %v4164 = vsel %vm3023, %v4162, %v4163
      %s4165 = scalar_lea.vmem %s8, 512
      %v4166 = vld [vmem:[%s4165] sm:$0xf]
      %v4167 = vld [vmem:[%s4165 + $0x4] sm:$0xf]
      %v4168 = vld [vmem:[%s4165 + $0x8] sm:$0xf]
      %v4169 = vld [vmem:[%s4165 + $0xc] sm:$0xf]
      %v4170 = vld [vmem:[%s4165 + $0x10] sm:$0xf]
      %v4171 = vld [vmem:[%s4165 + $0x14] sm:$0xf]
      %v4172 = vld [vmem:[%s4165 + $0x18] sm:$0xf]
      %v4173 = vld [vmem:[%s4165 + $0x1c] sm:$0xf]
      %v4174 = vld [vmem:[%s4165 + $0x20] sm:$0xf]
      %v4175 = vld [vmem:[%s4165 + $0x24] sm:$0xf]
      %v4176 = vld [vmem:[%s4165 + $0x28] sm:$0xf]
      %v4177 = vld [vmem:[%s4165 + $0x2c] sm:$0xf]
      %v4178 = vld [vmem:[%s4165 + $0x30] sm:$0xf]
      %v4179 = vld [vmem:[%s4165 + $0x34] sm:$0xf]
      %v4180 = vld [vmem:[%s4165 + $0x38] sm:$0xf]
      %v4181 = vld [vmem:[%s4165 + $0x3c] sm:$0xf]
      %v4182 = vunpack.c.l.b16 %v4136
      %v4183 = vunpack.c.l.b16 %v4140
      %v4184 = vunpack.c.l.b16 %v4144
      %v4185 = vunpack.c.l.b16 %v4148
      %v4186 = vunpack.c.l.b16 %v4152
      %v4187 = vunpack.c.l.b16 %v4156
      %v4188 = vunpack.c.l.b16 %v4160
      %v4189 = vunpack.c.l.b16 %v4164
      %v4190 = vpack.c.b16 %v4183, %v4182
      %v4191 = vpack.c.b16 %v4185, %v4184
      %v4192 = vpack.c.b16 %v4187, %v4186
      %v4193 = vpack.c.b16 %v4189, %v4188
      %v4214 = vunpack.c.l.b16 %v4166
      %v4215 = vunpack.c.l.b16 %v4167
      %v4216 = vunpack.c.l.b16 %v4168
      %v4217 = vunpack.c.l.b16 %v4169
      %v4218 = vunpack.c.l.b16 %v4170
      %v4219 = vunpack.c.l.b16 %v4171
      %v4220 = vunpack.c.l.b16 %v4172
      %v4221 = vunpack.c.l.b16 %v4173
      %v4222 = vunpack.c.l.b16 %v4174
      %v4223 = vunpack.c.l.b16 %v4175
      %v4224 = vunpack.c.l.b16 %v4176
      %v4225 = vunpack.c.l.b16 %v4177
      %v4226 = vunpack.c.l.b16 %v4178
      %v4227 = vunpack.c.l.b16 %v4179
      %v4228 = vunpack.c.l.b16 %v4180
      %v4229 = vunpack.c.l.b16 %v4181
      %v4230 = vpack.c.b16 %v4215, %v4214
      %v4231 = vpack.c.b16 %v4217, %v4216
      %v4232 = vpack.c.b16 %v4219, %v4218
      %v4233 = vpack.c.b16 %v4221, %v4220
      %v4234 = vpack.c.b16 %v4223, %v4222
      %v4235 = vpack.c.b16 %v4225, %v4224
      %v4236 = vpack.c.b16 %v4227, %v4226
      %v4237 = vpack.c.b16 %v4229, %v4228
      %4246 = vmatpush.bf16.msra.mxu0 %v4237
      %4247 = vmatpush.bf16.msra.mxu0 %v4236
      %4248 = vmatpush.bf16.msra.mxu0 %v4235
      %4249 = vmatpush.bf16.msra.mxu0 %v4234
      %4250 = vmatpush.bf16.msra.mxu0 %v4233
      %4251 = vmatpush.bf16.msra.mxu0 %v4232
      %4252 = vmatpush.bf16.msra.mxu0 %v4231
      %4253 = vmatpush.bf16.msra.mxu0 %v4230
      %4254 = vmatmul.bf16.gmra.mxu0 %v4190
      %v4255 = vpop.f32.mrf.mxu0
      %v4256 = vadd.f32 0.0, %v4255
      %v4257 = vpop.f32.mrf.mxu0
      %v4258 = vadd.f32 0.0, %v4257
      %4259 = vmatmul.bf16.gmra.mxu0 %v4191
      %v4260 = vpop.f32.mrf.mxu0
      %v4261 = vadd.f32 0.0, %v4260
      %v4262 = vpop.f32.mrf.mxu0
      %v4263 = vadd.f32 0.0, %v4262
      %4264 = vmatmul.bf16.gmra.mxu0 %v4192
      %v4265 = vpop.f32.mrf.mxu0
      %v4266 = vadd.f32 0.0, %v4265
      %v4267 = vpop.f32.mrf.mxu0
      %v4268 = vadd.f32 0.0, %v4267
      %4269 = vmatmul.bf16.gmra.mxu0 %v4193
      %v4270 = vpop.f32.mrf.mxu0
      %v4271 = vadd.f32 0.0, %v4270
      %v4272 = vpop.f32.mrf.mxu0
      %v4273 = vadd.f32 0.0, %v4272
      %4274 = vdwg.mxu0
      %v4275 = vadd.f32 %v4101, %v4256
      %v4276 = vadd.f32 %v4102, %v4258
      %v4277 = vadd.f32 %v4103, %v4261
      %v4278 = vadd.f32 %v4104, %v4263
      %v4279 = vadd.f32 %v4105, %v4266
      %v4280 = vadd.f32 %v4106, %v4268
      %v4281 = vadd.f32 %v4107, %v4271
      %v4282 = vadd.f32 %v4108, %v4273
      %4283 = vst [vmem:[%s332] sm:$0xff] %v4275
      %4284 = vst [vmem:[%s332 + $0x8] sm:$0xff] %v4276
      %4285 = vst [vmem:[%s332 + $0x10] sm:$0xff] %v4277
      %4286 = vst [vmem:[%s332 + $0x18] sm:$0xff] %v4278
      %4287 = vst [vmem:[%s332 + $0x20] sm:$0xff] %v4279
      %4288 = vst [vmem:[%s332 + $0x28] sm:$0xff] %v4280
      %4289 = vst [vmem:[%s332 + $0x30] sm:$0xff] %v4281
      %4290 = vst [vmem:[%s332 + $0x38] sm:$0xff] %v4282
      %p4291 = scmp.lt.s32.totalorder %s20, 1
      %s4292 = scalar_select %p4291, %s20, 1
      %s4293 = smul.addr %s4292, 8
      %s4294 = smul.addr %s4293, 8
      %s4295 = scalar_lea.vmem %s9, %s4294
      // Predicated region
      $region57: #{basic_block_forward.1} parent=55 // pred_check
        %p4296 = pneg %p232
      $region58: #{basic_block_forward.1} parent=55 // pred_check_branch
        %4298 = sbr.rel (%p4296) target = $region60
      $region59: #{basic_block_forward.1} parent=55 // pred_region
        _
      $region60: #{basic_block_forward.1} parent=55 // pred_fallthru
        _
    $region56: #{basic_block_forward.1} parent=5 // pred_fallthru
      _
    %p4299 = scmp.le.s32.totalorder 2, %s15
    // Predicated region
    $region61: #{basic_block_forward.1} parent=5 // pred_check
      %p4300 = pneg %p4299
    $region62: #{basic_block_forward.1} parent=5 // pred_check_branch
      %4302 = sbr.rel (%p4300) target = $region64
    $region63: #{basic_block_forward.1} parent=5 // pred_region
      %s4303 = ssub.s32 %s15, 2
      // Predicated region
      $region65: #{basic_block_forward.1} parent=63 // pred_check
        %p4304 = pneg %p238
      $region66: #{basic_block_forward.1} parent=63 // pred_check_branch
        %4306 = sbr.rel (%p4304) target = $region68
      $region67: #{basic_block_forward.1} parent=63 // pred_region
        %p4307 = scmp.lt.s32.totalorder %s21, 1
        %s4308 = scalar_select %p4307, %s21, 1
        %s4309 = smul.addr %s4308, 8
        %s4310 = smul.addr %s4309, 8
        %s4311 = scalar_lea.vmem %s9, %s4310
      $region68: #{basic_block_forward.1} parent=63 // pred_fallthru
        _
    $region64: #{basic_block_forward.1} parent=5 // pred_fallthru
      _
  $region6: #{basic_block_forward.1} parent=0 // loop_footer
    %s19 = sadd.s32 1, %s15
  $region7: #{basic_block_forward.1} parent=0 // loop_footer_branch
    %14 = sbr.rel target = $region3
  $region8: #{basic_block_forward.1} parent=0 // loop_exit
    _

</llo_original>
